<compile_context>
chip_gen: v7x
topology: tpu7x:2x2x1
jax: 0.10.0
libtpu: 0.0.40
codegen_flags: <defaults>
</compile_context>

<pallas_src>
import functools
import math

import numpy as np
import jax
import jax.numpy as jnp
from jax import lax
from jax.experimental import pallas as pl
from jax.experimental.pallas import tpu as pltpu


def _round_up(x, m):
    return (x + m - 1) // m * m


def _pick_tile(rows, target=512):
    # rows is a multiple of 8 by construction; return the largest divisor <= target (mult of 8).
    t = min(rows, target)
    while rows % t:
        t -= 8
    return t


# --------------------------------------------------------------------------- kernels
def _pool_kernel(ft_ref, out_ref):
    # ft_ref: [C, N]  (channels on sublanes, voxels on lanes)
    # out_ref: [2, N] = (mean_c ; max_c)   -- lane-dense, channel-major
    ft = ft_ref[...].astype(jnp.float32)
    avg = jnp.mean(ft, axis=0, keepdims=True)   # [1, N]
    mx = jnp.max(ft, axis=0, keepdims=True)     # [1, N]
    out_ref[...] = jnp.concatenate([avg, mx], axis=0)


def _subm_conv3d_kernel(xp_ref, w_ref, out_ref, *, K, D, Wp, Lqp):
    # xp_ref:  [2, 1, Dp, Lp]  zero-padded, channel-major, (H,W) flattened on lanes (VMEM)
    # w_ref:   [K*K*K*2]       flat weights, (kz, ky, kx, cin) order (SMEM scalars)
    # out_ref: [1, D, Lqp]     conv logits for this batch block, Lqp = round_up(H*Wp, 128)
    #
    # One independent accumulator per kz breaks the serial add chain; the lane shift per (ky,kx)
    # is hoisted and reused across the 3 kz sublane offsets (18 shifted loads, not 54).
    accs = [jnp.zeros((D, Lqp), jnp.float32) for _ in range(K)]
    for ky in range(K):
        for kx in range(K):
            off = ky * Wp + kx                                            # static lane offset
            slab0 = xp_ref[0, 0, :, pl.ds(off, Lqp)].astype(jnp.float32)  # [Dp, Lqp] mean ch
            slab1 = xp_ref[1, 0, :, pl.ds(off, Lqp)].astype(jnp.float32)  # [Dp, Lqp] max  ch
            for kz in range(K):
                t = ((kz * K + ky) * K + kx) * 2
                w0 = w_ref[t]          # cin = 0 (mean channel)
                w1 = w_ref[t + 1]      # cin = 1 (max channel)
                win0 = slab0[kz:kz + D, :]                                # static sublane slice
                win1 = slab1[kz:kz + D, :]
                accs[kz] = accs[kz] + w0 * win0 + w1 * win1
    acc = accs[0]
    for kz in range(1, K):
        acc = acc + accs[kz]
    out_ref[0, :, :] = acc


def _gate_kernel(f_ref, a_ref, out_ref):
    # Lane-dense elementwise gate on [tile, 128] slabs: out = sigmoid(att) * features.
    out_ref[...] = (jax.nn.sigmoid(a_ref[...].astype(jnp.float32))
                    * f_ref[...].astype(jnp.float32)).astype(out_ref.dtype)


# --------------------------------------------------------------------------- wrappers
def channel_pool(features):
    # features: [N, C] -> pooled [2, N] (channel-major, voxels on lanes).
    n, c = features.shape
    ft = features.T                                   # [C, N]: tiny XLA relayout, lane-dense in kernel
    return pl.pallas_call(
        _pool_kernel,
        out_shape=jax.ShapeDtypeStruct((2, n), jnp.float32),
        grid=(1,),
        in_specs=[pl.BlockSpec((c, n), lambda i: (0, 0))],       # full-array block (exempt)
        out_specs=pl.BlockSpec((2, n), lambda i: (0, 0)),
    )(ft)
    # TODO(synk): at production N, tile the lane axis (multiple of 128) with a masked tail.


def subm_conv3d_dense(xp, w_flat, *, K, D, Wp, Lqp):
    # xp: [2, B, Dp, Lp] channel-major padded grid; returns [B, D, Lqp] logits.
    _, B, Dp, Lp = xp.shape
    kern = functools.partial(_subm_conv3d_kernel, K=K, D=D, Wp=Wp, Lqp=Lqp)
    return pl.pallas_call(
        kern,
        out_shape=jax.ShapeDtypeStruct((B, D, Lqp), jnp.float32),
        grid=(B,),
        in_specs=[pl.BlockSpec((2, 1, Dp, Lp), lambda i: (0, i, 0, 0)),
                  pl.BlockSpec(memory_space=pltpu.MemorySpace.SMEM)],
        out_specs=pl.BlockSpec((1, D, Lqp), lambda i: (i, 0, 0)),
        compiler_params=pltpu.CompilerParams(
            dimension_semantics=("parallel",),          # shards over 2 TCs on v7x
            vmem_limit_bytes=32 * 1024 * 1024),
    )(xp, w_flat)


def spatial_gate(features, att):
    # features: [N, C], att: [N] logits -> [N, C] gated output.
    n, c = features.shape
    q = 128 // math.gcd(c, 128)
    npad = _round_up(n, 8 * q)                    # makes npad*c a multiple of 8*128
    rows = npad * c // 128

    f2 = jnp.pad(features, ((0, npad - n), (0, 0))).reshape(rows, 128)
    a2 = jnp.broadcast_to(jnp.pad(att, (0, npad - n))[:, None], (npad, c)).reshape(rows, 128)

    tr = _pick_tile(rows)
    out = pl.pallas_call(
        _gate_kernel,
        out_shape=jax.ShapeDtypeStruct((rows, 128), features.dtype),
        grid=(rows // tr,),
        in_specs=[pl.BlockSpec((tr, 128), lambda i: (i, 0)),
                  pl.BlockSpec((tr, 128), lambda i: (i, 0))],
        out_specs=pl.BlockSpec((tr, 128), lambda i: (i, 0)),
        compiler_params=pltpu.CompilerParams(dimension_semantics=("parallel",)),
    )(f2, a2)
    return out.reshape(npad, c)[:n]


@functools.partial(jax.jit, static_argnames=("spatial_shape", "batch_size", "kernel_size"))
def sparse_spatial_attention(features, indices, weight_flat, *,
                             spatial_shape, batch_size, kernel_size=3):
    assert kernel_size in (3, 7), "kernel size must be 3 or 7"
    K = kernel_size
    pad = K // 2
    D, H, W = spatial_shape
    B = batch_size
    Wp, Hp, Dp = W + 2 * pad, H + 2 * pad, D + 2 * pad
    Lq = H * Wp                                            # valid output lane extent (y*Wp + x)
    Lqp = _round_up(Lq, 128)                               # 128-lane aligned output extent
    Lp = _round_up((K - 1) * Wp + (K - 1) + Lqp, 128)      # padded input lane extent

    # 1) channel mean / max per active voxel (Pallas) -> channel-major [2, N]
    pooled = channel_pool(features)

    # 2) ONE combined scatter into the already-padded, lane-flattened, channel-major grid (XLA)
    b, z, y, x = indices[:, 0], indices[:, 1], indices[:, 2], indices[:, 3]
    lf = (y + pad) * Wp + (x + pad)
    dense = jnp.zeros((2, B, Dp, Lp), jnp.float32)
    dense = dense.at[:, b, z + pad, lf].set(pooled)

    # 3) SubMConv3d(2 -> 1) as a dense lane-wide 3-D cross-correlation (Pallas)
    att_dense = subm_conv3d_dense(dense, weight_flat, K=K, D=D, Wp=Wp, Lqp=Lqp)  # [B, D, Lqp]

    # 4) per-voxel logit gather (single XLA take; see TODO about fusing into the gate kernel)
    lin = (b * D + z) * Lqp + y * Wp + x
    att = att_dense.reshape(-1)[lin]                                             # [N]

    # 5) lane-dense sigmoid gate * input features (Pallas)
    return spatial_gate(features, att)                                           # [N, C]


# --------------------------------------------------------------------------- reference
def reference(features, indices, weight_flat, spatial_shape, batch_size, K):
    pad = K // 2
    D, H, W = spatial_shape
    B = batch_size
    avg = jnp.mean(features, axis=1, keepdims=True)
    mx = jnp.max(features, axis=1, keepdims=True)
    pooled = jnp.concatenate([avg, mx], axis=1)
    b, z, y, x = indices[:, 0], indices[:, 1], indices[:, 2], indices[:, 3]
    dense = jnp.zeros((2, B, D, H, W), jnp.float32)
    dense = dense.at[:, b, z, y, x].set(pooled.T).transpose(1, 0, 2, 3, 4)  # [B,2,D,H,W]
    w = weight_flat.reshape(K, K, K, 2).transpose(3, 0, 1, 2)[None]         # [1,2,K,K,K]
    out = lax.conv_general_dilated(
        dense, w, window_strides=(1, 1, 1), padding=[(pad, pad)] * 3,
        dimension_numbers=("NCDHW", "OIDHW", "NCDHW"),
        precision=lax.Precision.HIGHEST)
    att = out[b, 0, z, y, x][:, None]
    return jax.nn.sigmoid(att) * features


# --------------------------------------------------------------------------- main
if __name__ == "__main__":
    key = jax.random.PRNGKey(0)
    k_feat, k_idx, k_w = jax.random.split(key, 3)

    B = 2                      # batch
    D = H = W = 16             # sparse spatial shape
    C = 16                     # feature channels (matches ca16_sa / sa1 stage)
    N = 90                     # number of active voxels
    K = 3                      # VoxelResBackBone8x instantiates SparseSpatialAttention(3, ...)

    features = jax.random.normal(k_feat, (N, C), dtype=jnp.float32)

    # unique active voxel coordinates (batch, z, y, x)
    perm = jax.random.permutation(k_idx, B * D * H * W)[:N]
    b = perm // (D * H * W)
    rem = perm % (D * H * W)
    z = rem // (H * W)
    y = (rem // W) % H
    x = rem % W
    indices = jnp.stack([b, z, y, x], axis=1).astype(jnp.int32)

    # SubMConv3d weight: [K, K, K, cin=2] flattened, single out channel, no bias
    weight_flat = 0.05 * jax.random.normal(k_w, (K * K * K * 2,), dtype=jnp.float32)

    out = sparse_spatial_attention(features, indices, weight_flat,
                                   spatial_shape=(D, H, W), batch_size=B,
                                   kernel_size=K)
    out = jax.block_until_ready(out)

    ref = reference(features, indices, weight_flat, (D, H, W), B, K)
    np.testing.assert_allclose(np.asarray(out), np.asarray(ref), rtol=1e-4, atol=1e-4)

    print("KERNEL_OK")
</pallas_src>

<mosaic_0001>
module attributes {stable_mosaic.version = 11 : i64} {
  func.func @_pool_kernel(%arg0: i32, %arg1: memref<16x90xf32, #tpu.memory_space<vmem>>, %arg2: memref<2x90xf32, #tpu.memory_space<vmem>>) attributes {dimension_semantics = [#tpu.dimension_semantics<arbitrary>], iteration_bounds = array<i64: 1>, scalar_prefetch = 0 : i64, scratch_operands = 0 : i64, tpu.core_type = #tpu.core_type<tc>, window_params = [{pipeline_mode = #tpu.pipeline_mode<synchronous>, transform_indices = @transform_0, window_bounds = array<i64: 16, 90>}, {pipeline_mode = #tpu.pipeline_mode<synchronous>, transform_indices = @transform_1, window_bounds = array<i64: 2, 90>}]} {
    %c0 = arith.constant 0 : index
    %c0_0 = arith.constant 0 : index
    %0 = vector.load %arg1[%c0, %c0_0] : memref<16x90xf32, #tpu.memory_space<vmem>>, vector<16x90xf32>
    %cst = arith.constant dense<0.000000e+00> : vector<90xf32>
    %1 = vector.multi_reduction <add>, %0, %cst [0] : vector<16x90xf32> to vector<90xf32>
    %2 = vector.shape_cast %1 : vector<90xf32> to vector<1x90xf32>
    %cst_1 = arith.constant 1.600000e+01 : f32
    %3 = vector.broadcast %cst_1 : f32 to vector<1x90xf32>
    %4 = arith.divf %2, %3 : vector<1x90xf32>
    %cst_2 = arith.constant dense<0xFF800000> : vector<90xf32>
    %5 = vector.multi_reduction <maximumf>, %0, %cst_2 [0] : vector<16x90xf32> to vector<90xf32>
    %6 = vector.shape_cast %5 : vector<90xf32> to vector<1x90xf32>
    %7 = tpu.concatenate %4, %6 in 0 : vector<1x90xf32>, vector<1x90xf32> -> vector<2x90xf32>
    %c0_3 = arith.constant 0 : index
    %c0_4 = arith.constant 0 : index
    %8 = vector.load %arg2[%c0_3, %c0_4] : memref<2x90xf32, #tpu.memory_space<vmem>>, vector<2x90xf32>
    tpu.vector_store %arg2[%c0_3, %c0_4], %7 {strides = array<i32>} : memref<2x90xf32, #tpu.memory_space<vmem>>, vector<2x90xf32>,
    return
  }
  func.func @transform_0(%arg0: i32) -> (i32, i32) {
    %c0_i32 = arith.constant 0 : i32
    %c0_i32_0 = arith.constant 0 : i32
    %c0_i32_1 = arith.constant 0 : i32
    return %c0_i32, %c0_i32_0 : i32, i32
  }
  func.func @transform_1(%arg0: i32) -> (i32, i32) {
    %c0_i32 = arith.constant 0 : i32
    %c0_i32_0 = arith.constant 0 : i32
    %c0_i32_1 = arith.constant 0 : i32
    return %c0_i32, %c0_i32_0 : i32, i32
  }
}

module attributes {stable_mosaic.version = 11 : i64} {
  func.func @_subm_conv3d_kernel(%arg0: i32, %arg1: memref<2x1x18x512xf32, #tpu.memory_space<vmem>>, %arg2: memref<54xf32, #tpu.memory_space<smem>>, %arg3: memref<1x16x384xf32, #tpu.memory_space<vmem>>) attributes {dimension_semantics = [#tpu.dimension_semantics<parallel>], iteration_bounds = array<i64: 2>, scalar_prefetch = 0 : i64, scratch_operands = 0 : i64, tpu.core_type = #tpu.core_type<tc>, window_params = [{transform_indices = @transform_0, window_bounds = array<i64: 2, 1, 18, 512>}, {transform_indices = @transform_1, window_bounds = array<i64: 54>}, {transform_indices = @transform_2, window_bounds = array<i64: 1, 16, 384>}]} {
    %cst = arith.constant 0.000000e+00 : f32
    %0 = vector.broadcast %cst : f32 to vector<16x384xf32>
    %cst_0 = arith.constant 0.000000e+00 : f32
    %1 = vector.broadcast %cst_0 : f32 to vector<16x384xf32>
    %cst_1 = arith.constant 0.000000e+00 : f32
    %2 = vector.broadcast %cst_1 : f32 to vector<16x384xf32>
    %c0 = arith.constant 0 : index
    %c0_2 = arith.constant 0 : index
    %c0_3 = arith.constant 0 : index
    %c0_4 = arith.constant 0 : index
    %3 = vector.load %arg1[%c0, %c0_2, %c0_3, %c0_4] : memref<2x1x18x512xf32, #tpu.memory_space<vmem>>, vector<1x1x18x384xf32>
    %4 = vector.shape_cast %3 : vector<1x1x18x384xf32> to vector<18x384xf32>
    %c1 = arith.constant 1 : index
    %c0_5 = arith.constant 0 : index
    %c0_6 = arith.constant 0 : index
    %c0_7 = arith.constant 0 : index
    %5 = vector.load %arg1[%c1, %c0_5, %c0_6, %c0_7] : memref<2x1x18x512xf32, #tpu.memory_space<vmem>>, vector<1x1x18x384xf32>
    %6 = vector.shape_cast %5 : vector<1x1x18x384xf32> to vector<18x384xf32>
    %c0_8 = arith.constant 0 : index
    %7 = memref.load %arg2[%c0_8] : memref<54xf32, #tpu.memory_space<smem>>
    %c1_9 = arith.constant 1 : index
    %8 = memref.load %arg2[%c1_9] : memref<54xf32, #tpu.memory_space<smem>>
    %9 = vector.extract_strided_slice %4 {offsets = [0, 0], sizes = [16, 384], strides = [1, 1]} : vector<18x384xf32> to vector<16x384xf32>
    %10 = vector.extract_strided_slice %6 {offsets = [0, 0], sizes = [16, 384], strides = [1, 1]} : vector<18x384xf32> to vector<16x384xf32>
    %11 = vector.broadcast %7 : f32 to vector<16x384xf32>
    %12 = arith.mulf %11, %9 : vector<16x384xf32>
    %13 = arith.addf %0, %12 : vector<16x384xf32>
    %14 = vector.broadcast %8 : f32 to vector<16x384xf32>
    %15 = arith.mulf %14, %10 : vector<16x384xf32>
    %16 = arith.addf %13, %15 : vector<16x384xf32>
    %c18 = arith.constant 18 : index
    %17 = memref.load %arg2[%c18] : memref<54xf32, #tpu.memory_space<smem>>
    %c19 = arith.constant 19 : index
    %18 = memref.load %arg2[%c19] : memref<54xf32, #tpu.memory_space<smem>>
    %19 = vector.extract_strided_slice %4 {offsets = [1, 0], sizes = [16, 384], strides = [1, 1]} : vector<18x384xf32> to vector<16x384xf32>
    %20 = vector.extract_strided_slice %6 {offsets = [1, 0], sizes = [16, 384], strides = [1, 1]} : vector<18x384xf32> to vector<16x384xf32>
    %21 = vector.broadcast %17 : f32 to vector<16x384xf32>
    %22 = arith.mulf %21, %19 : vector<16x384xf32>
    %23 = arith.addf %1, %22 : vector<16x384xf32>
    %24 = vector.broadcast %18 : f32 to vector<16x384xf32>
    %25 = arith.mulf %24, %20 : vector<16x384xf32>
    %26 = arith.addf %23, %25 : vector<16x384xf32>
    %c36 = arith.constant 36 : index
    %27 = memref.load %arg2[%c36] : memref<54xf32, #tpu.memory_space<smem>>
    %c37 = arith.constant 37 : index
    %28 = memref.load %arg2[%c37] : memref<54xf32, #tpu.memory_space<smem>>
    %29 = vector.extract_strided_slice %4 {offsets = [2, 0], sizes = [16, 384], strides = [1, 1]} : vector<18x384xf32> to vector<16x384xf32>
    %30 = vector.extract_strided_slice %6 {offsets = [2, 0], sizes = [16, 384], strides = [1, 1]} : vector<18x384xf32> to vector<16x384xf32>
    %31 = vector.broadcast %27 : f32 to vector<16x384xf32>
    %32 = arith.mulf %31, %29 : vector<16x384xf32>
    %33 = arith.addf %2, %32 : vector<16x384xf32>
    %34 = vector.broadcast %28 : f32 to vector<16x384xf32>
    %35 = arith.mulf %34, %30 : vector<16x384xf32>
    %36 = arith.addf %33, %35 : vector<16x384xf32>
    %c0_10 = arith.constant 0 : index
    %c0_11 = arith.constant 0 : index
    %c0_12 = arith.constant 0 : index
    %c1_13 = arith.constant 1 : index
    %37 = vector.load %arg1[%c0_10, %c0_11, %c0_12, %c1_13] : memref<2x1x18x512xf32, #tpu.memory_space<vmem>>, vector<1x1x18x384xf32>
    %38 = vector.shape_cast %37 : vector<1x1x18x384xf32> to vector<18x384xf32>
    %c1_14 = arith.constant 1 : index
    %c0_15 = arith.constant 0 : index
    %c0_16 = arith.constant 0 : index
    %c1_17 = arith.constant 1 : index
    %39 = vector.load %arg1[%c1_14, %c0_15, %c0_16, %c1_17] : memref<2x1x18x512xf32, #tpu.memory_space<vmem>>, vector<1x1x18x384xf32>
    %40 = vector.shape_cast %39 : vector<1x1x18x384xf32> to vector<18x384xf32>
    %c2 = arith.constant 2 : index
    %41 = memref.load %arg2[%c2] : memref<54xf32, #tpu.memory_space<smem>>
    %c3 = arith.constant 3 : index
    %42 = memref.load %arg2[%c3] : memref<54xf32, #tpu.memory_space<smem>>
    %43 = vector.extract_strided_slice %38 {offsets = [0, 0], sizes = [16, 384], strides = [1, 1]} : vector<18x384xf32> to vector<16x384xf32>
    %44 = vector.extract_strided_slice %40 {offsets = [0, 0], sizes = [16, 384], strides = [1, 1]} : vector<18x384xf32> to vector<16x384xf32>
    %45 = vector.broadcast %41 : f32 to vector<16x384xf32>
    %46 = arith.mulf %45, %43 : vector<16x384xf32>
    %47 = arith.addf %16, %46 : vector<16x384xf32>
    %48 = vector.broadcast %42 : f32 to vector<16x384xf32>
    %49 = arith.mulf %48, %44 : vector<16x384xf32>
    %50 = arith.addf %47, %49 : vector<16x384xf32>
    %c20 = arith.constant 20 : index
    %51 = memref.load %arg2[%c20] : memref<54xf32, #tpu.memory_space<smem>>
    %c21 = arith.constant 21 : index
    %52 = memref.load %arg2[%c21] : memref<54xf32, #tpu.memory_space<smem>>
    %53 = vector.extract_strided_slice %38 {offsets = [1, 0], sizes = [16, 384], strides = [1, 1]} : vector<18x384xf32> to vector<16x384xf32>
    %54 = vector.extract_strided_slice %40 {offsets = [1, 0], sizes = [16, 384], strides = [1, 1]} : vector<18x384xf32> to vector<16x384xf32>
    %55 = vector.broadcast %51 : f32 to vector<16x384xf32>
    %56 = arith.mulf %55, %53 : vector<16x384xf32>
    %57 = arith.addf %26, %56 : vector<16x384xf32>
    %58 = vector.broadcast %52 : f32 to vector<16x384xf32>
    %59 = arith.mulf %58, %54 : vector<16x384xf32>
    %60 = arith.addf %57, %59 : vector<16x384xf32>
    %c38 = arith.constant 38 : index
    %61 = memref.load %arg2[%c38] : memref<54xf32, #tpu.memory_space<smem>>
    %c39 = arith.constant 39 : index
    %62 = memref.load %arg2[%c39] : memref<54xf32, #tpu.memory_space<smem>>
    %63 = vector.extract_strided_slice %38 {offsets = [2, 0], sizes = [16, 384], strides = [1, 1]} : vector<18x384xf32> to vector<16x384xf32>
    %64 = vector.extract_strided_slice %40 {offsets = [2, 0], sizes = [16, 384], strides = [1, 1]} : vector<18x384xf32> to vector<16x384xf32>
    %65 = vector.broadcast %61 : f32 to vector<16x384xf32>
    %66 = arith.mulf %65, %63 : vector<16x384xf32>
    %67 = arith.addf %36, %66 : vector<16x384xf32>
    %68 = vector.broadcast %62 : f32 to vector<16x384xf32>
    %69 = arith.mulf %68, %64 : vector<16x384xf32>
    %70 = arith.addf %67, %69 : vector<16x384xf32>
    %c0_18 = arith.constant 0 : index
    %c0_19 = arith.constant 0 : index
    %c0_20 = arith.constant 0 : index
    %c2_21 = arith.constant 2 : index
    %71 = vector.load %arg1[%c0_18, %c0_19, %c0_20, %c2_21] : memref<2x1x18x512xf32, #tpu.memory_space<vmem>>, vector<1x1x18x384xf32>
    %72 = vector.shape_cast %71 : vector<1x1x18x384xf32> to vector<18x384xf32>
    %c1_22 = arith.constant 1 : index
    %c0_23 = arith.constant 0 : index
    %c0_24 = arith.constant 0 : index
    %c2_25 = arith.constant 2 : index
    %73 = vector.load %arg1[%c1_22, %c0_23, %c0_24, %c2_25] : memref<2x1x18x512xf32, #tpu.memory_space<vmem>>, vector<1x1x18x384xf32>
    %74 = vector.shape_cast %73 : vector<1x1x18x384xf32> to vector<18x384xf32>
    %c4 = arith.constant 4 : index
    %75 = memref.load %arg2[%c4] : memref<54xf32, #tpu.memory_space<smem>>
    %c5 = arith.constant 5 : index
    %76 = memref.load %arg2[%c5] : memref<54xf32, #tpu.memory_space<smem>>
    %77 = vector.extract_strided_slice %72 {offsets = [0, 0], sizes = [16, 384], strides = [1, 1]} : vector<18x384xf32> to vector<16x384xf32>
    %78 = vector.extract_strided_slice %74 {offsets = [0, 0], sizes = [16, 384], strides = [1, 1]} : vector<18x384xf32> to vector<16x384xf32>
    %79 = vector.broadcast %75 : f32 to vector<16x384xf32>
    %80 = arith.mulf %79, %77 : vector<16x384xf32>
    %81 = arith.addf %50, %80 : vector<16x384xf32>
    %82 = vector.broadcast %76 : f32 to vector<16x384xf32>
    %83 = arith.mulf %82, %78 : vector<16x384xf32>
    %84 = arith.addf %81, %83 : vector<16x384xf32>
    %c22 = arith.constant 22 : index
    %85 = memref.load %arg2[%c22] : memref<54xf32, #tpu.memory_space<smem>>
    %c23 = arith.constant 23 : index
    %86 = memref.load %arg2[%c23] : memref<54xf32, #tpu.memory_space<smem>>
    %87 = vector.extract_strided_slice %72 {offsets = [1, 0], sizes = [16, 384], strides = [1, 1]} : vector<18x384xf32> to vector<16x384xf32>
    %88 = vector.extract_strided_slice %74 {offsets = [1, 0], sizes = [16, 384], strides = [1, 1]} : vector<18x384xf32> to vector<16x384xf32>
    %89 = vector.broadcast %85 : f32 to vector<16x384xf32>
    %90 = arith.mulf %89, %87 : vector<16x384xf32>
    %91 = arith.addf %60, %90 : vector<16x384xf32>
    %92 = vector.broadcast %86 : f32 to vector<16x384xf32>
    %93 = arith.mulf %92, %88 : vector<16x384xf32>
    %94 = arith.addf %91, %93 : vector<16x384xf32>
    %c40 = arith.constant 40 : index
    %95 = memref.load %arg2[%c40] : memref<54xf32, #tpu.memory_space<smem>>
    %c41 = arith.constant 41 : index
    %96 = memref.load %arg2[%c41] : memref<54xf32, #tpu.memory_space<smem>>
    %97 = vector.extract_strided_slice %72 {offsets = [2, 0], sizes = [16, 384], strides = [1, 1]} : vector<18x384xf32> to vector<16x384xf32>
    %98 = vector.extract_strided_slice %74 {offsets = [2, 0], sizes = [16, 384], strides = [1, 1]} : vector<18x384xf32> to vector<16x384xf32>
    %99 = vector.broadcast %95 : f32 to vector<16x384xf32>
    %100 = arith.mulf %99, %97 : vector<16x384xf32>
    %101 = arith.addf %70, %100 : vector<16x384xf32>
    %102 = vector.broadcast %96 : f32 to vector<16x384xf32>
    %103 = arith.mulf %102, %98 : vector<16x384xf32>
    %104 = arith.addf %101, %103 : vector<16x384xf32>
    %c0_26 = arith.constant 0 : index
    %c0_27 = arith.constant 0 : index
    %c0_28 = arith.constant 0 : index
    %c18_29 = arith.constant 18 : index
    %105 = vector.load %arg1[%c0_26, %c0_27, %c0_28, %c18_29] : memref<2x1x18x512xf32, #tpu.memory_space<vmem>>, vector<1x1x18x384xf32>
    %106 = vector.shape_cast %105 : vector<1x1x18x384xf32> to vector<18x384xf32>
    %c1_30 = arith.constant 1 : index
    %c0_31 = arith.constant 0 : index
    %c0_32 = arith.constant 0 : index
    %c18_33 = arith.constant 18 : index
    %107 = vector.load %arg1[%c1_30, %c0_31, %c0_32, %c18_33] : memref<2x1x18x512xf32, #tpu.memory_space<vmem>>, vector<1x1x18x384xf32>
    %108 = vector.shape_cast %107 : vector<1x1x18x384xf32> to vector<18x384xf32>
    %c6 = arith.constant 6 : index
    %109 = memref.load %arg2[%c6] : memref<54xf32, #tpu.memory_space<smem>>
    %c7 = arith.constant 7 : index
    %110 = memref.load %arg2[%c7] : memref<54xf32, #tpu.memory_space<smem>>
    %111 = vector.extract_strided_slice %106 {offsets = [0, 0], sizes = [16, 384], strides = [1, 1]} : vector<18x384xf32> to vector<16x384xf32>
    %112 = vector.extract_strided_slice %108 {offsets = [0, 0], sizes = [16, 384], strides = [1, 1]} : vector<18x384xf32> to vector<16x384xf32>
    %113 = vector.broadcast %109 : f32 to vector<16x384xf32>
    %114 = arith.mulf %113, %111 : vector<16x384xf32>
    %115 = arith.addf %84, %114 : vector<16x384xf32>
    %116 = vector.broadcast %110 : f32 to vector<16x384xf32>
    %117 = arith.mulf %116, %112 : vector<16x384xf32>
    %118 = arith.addf %115, %117 : vector<16x384xf32>
    %c24 = arith.constant 24 : index
    %119 = memref.load %arg2[%c24] : memref<54xf32, #tpu.memory_space<smem>>
    %c25 = arith.constant 25 : index
    %120 = memref.load %arg2[%c25] : memref<54xf32, #tpu.memory_space<smem>>
    %121 = vector.extract_strided_slice %106 {offsets = [1, 0], sizes = [16, 384], strides = [1, 1]} : vector<18x384xf32> to vector<16x384xf32>
    %122 = vector.extract_strided_slice %108 {offsets = [1, 0], sizes = [16, 384], strides = [1, 1]} : vector<18x384xf32> to vector<16x384xf32>
    %123 = vector.broadcast %119 : f32 to vector<16x384xf32>
    %124 = arith.mulf %123, %121 : vector<16x384xf32>
    %125 = arith.addf %94, %124 : vector<16x384xf32>
    %126 = vector.broadcast %120 : f32 to vector<16x384xf32>
    %127 = arith.mulf %126, %122 : vector<16x384xf32>
    %128 = arith.addf %125, %127 : vector<16x384xf32>
    %c42 = arith.constant 42 : index
    %129 = memref.load %arg2[%c42] : memref<54xf32, #tpu.memory_space<smem>>
    %c43 = arith.constant 43 : index
    %130 = memref.load %arg2[%c43] : memref<54xf32, #tpu.memory_space<smem>>
    %131 = vector.extract_strided_slice %106 {offsets = [2, 0], sizes = [16, 384], strides = [1, 1]} : vector<18x384xf32> to vector<16x384xf32>
    %132 = vector.extract_strided_slice %108 {offsets = [2, 0], sizes = [16, 384], strides = [1, 1]} : vector<18x384xf32> to vector<16x384xf32>
    %133 = vector.broadcast %129 : f32 to vector<16x384xf32>
    %134 = arith.mulf %133, %131 : vector<16x384xf32>
    %135 = arith.addf %104, %134 : vector<16x384xf32>
    %136 = vector.broadcast %130 : f32 to vector<16x384xf32>
    %137 = arith.mulf %136, %132 : vector<16x384xf32>
    %138 = arith.addf %135, %137 : vector<16x384xf32>
    %c0_34 = arith.constant 0 : index
    %c0_35 = arith.constant 0 : index
    %c0_36 = arith.constant 0 : index
    %c19_37 = arith.constant 19 : index
    %139 = vector.load %arg1[%c0_34, %c0_35, %c0_36, %c19_37] : memref<2x1x18x512xf32, #tpu.memory_space<vmem>>, vector<1x1x18x384xf32>
    %140 = vector.shape_cast %139 : vector<1x1x18x384xf32> to vector<18x384xf32>
    %c1_38 = arith.constant 1 : index
    %c0_39 = arith.constant 0 : index
    %c0_40 = arith.constant 0 : index
    %c19_41 = arith.constant 19 : index
    %141 = vector.load %arg1[%c1_38, %c0_39, %c0_40, %c19_41] : memref<2x1x18x512xf32, #tpu.memory_space<vmem>>, vector<1x1x18x384xf32>
    %142 = vector.shape_cast %141 : vector<1x1x18x384xf32> to vector<18x384xf32>
    %c8 = arith.constant 8 : index
    %143 = memref.load %arg2[%c8] : memref<54xf32, #tpu.memory_space<smem>>
    %c9 = arith.constant 9 : index
    %144 = memref.load %arg2[%c9] : memref<54xf32, #tpu.memory_space<smem>>
    %145 = vector.extract_strided_slice %140 {offsets = [0, 0], sizes = [16, 384], strides = [1, 1]} : vector<18x384xf32> to vector<16x384xf32>
    %146 = vector.extract_strided_slice %142 {offsets = [0, 0], sizes = [16, 384], strides = [1, 1]} : vector<18x384xf32> to vector<16x384xf32>
    %147 = vector.broadcast %143 : f32 to vector<16x384xf32>
    %148 = arith.mulf %147, %145 : vector<16x384xf32>
    %149 = arith.addf %118, %148 : vector<16x384xf32>
    %150 = vector.broadcast %144 : f32 to vector<16x384xf32>
    %151 = arith.mulf %150, %146 : vector<16x384xf32>
    %152 = arith.addf %149, %151 : vector<16x384xf32>
    %c26 = arith.constant 26 : index
    %153 = memref.load %arg2[%c26] : memref<54xf32, #tpu.memory_space<smem>>
    %c27 = arith.constant 27 : index
    %154 = memref.load %arg2[%c27] : memref<54xf32, #tpu.memory_space<smem>>
    %155 = vector.extract_strided_slice %140 {offsets = [1, 0], sizes = [16, 384], strides = [1, 1]} : vector<18x384xf32> to vector<16x384xf32>
    %156 = vector.extract_strided_slice %142 {offsets = [1, 0], sizes = [16, 384], strides = [1, 1]} : vector<18x384xf32> to vector<16x384xf32>
    %157 = vector.broadcast %153 : f32 to vector<16x384xf32>
    %158 = arith.mulf %157, %155 : vector<16x384xf32>
    %159 = arith.addf %128, %158 : vector<16x384xf32>
    %160 = vector.broadcast %154 : f32 to vector<16x384xf32>
    %161 = arith.mulf %160, %156 : vector<16x384xf32>
    %162 = arith.addf %159, %161 : vector<16x384xf32>
    %c44 = arith.constant 44 : index
    %163 = memref.load %arg2[%c44] : memref<54xf32, #tpu.memory_space<smem>>
    %c45 = arith.constant 45 : index
    %164 = memref.load %arg2[%c45] : memref<54xf32, #tpu.memory_space<smem>>
    %165 = vector.extract_strided_slice %140 {offsets = [2, 0], sizes = [16, 384], strides = [1, 1]} : vector<18x384xf32> to vector<16x384xf32>
    %166 = vector.extract_strided_slice %142 {offsets = [2, 0], sizes = [16, 384], strides = [1, 1]} : vector<18x384xf32> to vector<16x384xf32>
    %167 = vector.broadcast %163 : f32 to vector<16x384xf32>
    %168 = arith.mulf %167, %165 : vector<16x384xf32>
    %169 = arith.addf %138, %168 : vector<16x384xf32>
    %170 = vector.broadcast %164 : f32 to vector<16x384xf32>
    %171 = arith.mulf %170, %166 : vector<16x384xf32>
    %172 = arith.addf %169, %171 : vector<16x384xf32>
    %c0_42 = arith.constant 0 : index
    %c0_43 = arith.constant 0 : index
    %c0_44 = arith.constant 0 : index
    %c20_45 = arith.constant 20 : index
    %173 = vector.load %arg1[%c0_42, %c0_43, %c0_44, %c20_45] : memref<2x1x18x512xf32, #tpu.memory_space<vmem>>, vector<1x1x18x384xf32>
    %174 = vector.shape_cast %173 : vector<1x1x18x384xf32> to vector<18x384xf32>
    %c1_46 = arith.constant 1 : index
    %c0_47 = arith.constant 0 : index
    %c0_48 = arith.constant 0 : index
    %c20_49 = arith.constant 20 : index
    %175 = vector.load %arg1[%c1_46, %c0_47, %c0_48, %c20_49] : memref<2x1x18x512xf32, #tpu.memory_space<vmem>>, vector<1x1x18x384xf32>
    %176 = vector.shape_cast %175 : vector<1x1x18x384xf32> to vector<18x384xf32>
    %c10 = arith.constant 10 : index
    %177 = memref.load %arg2[%c10] : memref<54xf32, #tpu.memory_space<smem>>
    %c11 = arith.constant 11 : index
    %178 = memref.load %arg2[%c11] : memref<54xf32, #tpu.memory_space<smem>>
    %179 = vector.extract_strided_slice %174 {offsets = [0, 0], sizes = [16, 384], strides = [1, 1]} : vector<18x384xf32> to vector<16x384xf32>
    %180 = vector.extract_strided_slice %176 {offsets = [0, 0], sizes = [16, 384], strides = [1, 1]} : vector<18x384xf32> to vector<16x384xf32>
    %181 = vector.broadcast %177 : f32 to vector<16x384xf32>
    %182 = arith.mulf %181, %179 : vector<16x384xf32>
    %183 = arith.addf %152, %182 : vector<16x384xf32>
    %184 = vector.broadcast %178 : f32 to vector<16x384xf32>
    %185 = arith.mulf %184, %180 : vector<16x384xf32>
    %186 = arith.addf %183, %185 : vector<16x384xf32>
    %c28 = arith.constant 28 : index
    %187 = memref.load %arg2[%c28] : memref<54xf32, #tpu.memory_space<smem>>
    %c29 = arith.constant 29 : index
    %188 = memref.load %arg2[%c29] : memref<54xf32, #tpu.memory_space<smem>>
    %189 = vector.extract_strided_slice %174 {offsets = [1, 0], sizes = [16, 384], strides = [1, 1]} : vector<18x384xf32> to vector<16x384xf32>
    %190 = vector.extract_strided_slice %176 {offsets = [1, 0], sizes = [16, 384], strides = [1, 1]} : vector<18x384xf32> to vector<16x384xf32>
    %191 = vector.broadcast %187 : f32 to vector<16x384xf32>
    %192 = arith.mulf %191, %189 : vector<16x384xf32>
    %193 = arith.addf %162, %192 : vector<16x384xf32>
    %194 = vector.broadcast %188 : f32 to vector<16x384xf32>
    %195 = arith.mulf %194, %190 : vector<16x384xf32>
    %196 = arith.addf %193, %195 : vector<16x384xf32>
    %c46 = arith.constant 46 : index
    %197 = memref.load %arg2[%c46] : memref<54xf32, #tpu.memory_space<smem>>
    %c47 = arith.constant 47 : index
    %198 = memref.load %arg2[%c47] : memref<54xf32, #tpu.memory_space<smem>>
    %199 = vector.extract_strided_slice %174 {offsets = [2, 0], sizes = [16, 384], strides = [1, 1]} : vector<18x384xf32> to vector<16x384xf32>
    %200 = vector.extract_strided_slice %176 {offsets = [2, 0], sizes = [16, 384], strides = [1, 1]} : vector<18x384xf32> to vector<16x384xf32>
    %201 = vector.broadcast %197 : f32 to vector<16x384xf32>
    %202 = arith.mulf %201, %199 : vector<16x384xf32>
    %203 = arith.addf %172, %202 : vector<16x384xf32>
    %204 = vector.broadcast %198 : f32 to vector<16x384xf32>
    %205 = arith.mulf %204, %200 : vector<16x384xf32>
    %206 = arith.addf %203, %205 : vector<16x384xf32>
    %c0_50 = arith.constant 0 : index
    %c0_51 = arith.constant 0 : index
    %c0_52 = arith.constant 0 : index
    %c36_53 = arith.constant 36 : index
    %207 = vector.load %arg1[%c0_50, %c0_51, %c0_52, %c36_53] : memref<2x1x18x512xf32, #tpu.memory_space<vmem>>, vector<1x1x18x384xf32>
    %208 = vector.shape_cast %207 : vector<1x1x18x384xf32> to vector<18x384xf32>
    %c1_54 = arith.constant 1 : index
    %c0_55 = arith.constant 0 : index
    %c0_56 = arith.constant 0 : index
    %c36_57 = arith.constant 36 : index
    %209 = vector.load %arg1[%c1_54, %c0_55, %c0_56, %c36_57] : memref<2x1x18x512xf32, #tpu.memory_space<vmem>>, vector<1x1x18x384xf32>
    %210 = vector.shape_cast %209 : vector<1x1x18x384xf32> to vector<18x384xf32>
    %c12 = arith.constant 12 : index
    %211 = memref.load %arg2[%c12] : memref<54xf32, #tpu.memory_space<smem>>
    %c13 = arith.constant 13 : index
    %212 = memref.load %arg2[%c13] : memref<54xf32, #tpu.memory_space<smem>>
    %213 = vector.extract_strided_slice %208 {offsets = [0, 0], sizes = [16, 384], strides = [1, 1]} : vector<18x384xf32> to vector<16x384xf32>
    %214 = vector.extract_strided_slice %210 {offsets = [0, 0], sizes = [16, 384], strides = [1, 1]} : vector<18x384xf32> to vector<16x384xf32>
    %215 = vector.broadcast %211 : f32 to vector<16x384xf32>
    %216 = arith.mulf %215, %213 : vector<16x384xf32>
    %217 = arith.addf %186, %216 : vector<16x384xf32>
    %218 = vector.broadcast %212 : f32 to vector<16x384xf32>
    %219 = arith.mulf %218, %214 : vector<16x384xf32>
    %220 = arith.addf %217, %219 : vector<16x384xf32>
    %c30 = arith.constant 30 : index
    %221 = memref.load %arg2[%c30] : memref<54xf32, #tpu.memory_space<smem>>
    %c31 = arith.constant 31 : index
    %222 = memref.load %arg2[%c31] : memref<54xf32, #tpu.memory_space<smem>>
    %223 = vector.extract_strided_slice %208 {offsets = [1, 0], sizes = [16, 384], strides = [1, 1]} : vector<18x384xf32> to vector<16x384xf32>
    %224 = vector.extract_strided_slice %210 {offsets = [1, 0], sizes = [16, 384], strides = [1, 1]} : vector<18x384xf32> to vector<16x384xf32>
    %225 = vector.broadcast %221 : f32 to vector<16x384xf32>
    %226 = arith.mulf %225, %223 : vector<16x384xf32>
    %227 = arith.addf %196, %226 : vector<16x384xf32>
    %228 = vector.broadcast %222 : f32 to vector<16x384xf32>
    %229 = arith.mulf %228, %224 : vector<16x384xf32>
    %230 = arith.addf %227, %229 : vector<16x384xf32>
    %c48 = arith.constant 48 : index
    %231 = memref.load %arg2[%c48] : memref<54xf32, #tpu.memory_space<smem>>
    %c49 = arith.constant 49 : index
    %232 = memref.load %arg2[%c49] : memref<54xf32, #tpu.memory_space<smem>>
    %233 = vector.extract_strided_slice %208 {offsets = [2, 0], sizes = [16, 384], strides = [1, 1]} : vector<18x384xf32> to vector<16x384xf32>
    %234 = vector.extract_strided_slice %210 {offsets = [2, 0], sizes = [16, 384], strides = [1, 1]} : vector<18x384xf32> to vector<16x384xf32>
    %235 = vector.broadcast %231 : f32 to vector<16x384xf32>
    %236 = arith.mulf %235, %233 : vector<16x384xf32>
    %237 = arith.addf %206, %236 : vector<16x384xf32>
    %238 = vector.broadcast %232 : f32 to vector<16x384xf32>
    %239 = arith.mulf %238, %234 : vector<16x384xf32>
    %240 = arith.addf %237, %239 : vector<16x384xf32>
    %c0_58 = arith.constant 0 : index
    %c0_59 = arith.constant 0 : index
    %c0_60 = arith.constant 0 : index
    %c37_61 = arith.constant 37 : index
    %241 = vector.load %arg1[%c0_58, %c0_59, %c0_60, %c37_61] : memref<2x1x18x512xf32, #tpu.memory_space<vmem>>, vector<1x1x18x384xf32>
    %242 = vector.shape_cast %241 : vector<1x1x18x384xf32> to vector<18x384xf32>
    %c1_62 = arith.constant 1 : index
    %c0_63 = arith.constant 0 : index
    %c0_64 = arith.constant 0 : index
    %c37_65 = arith.constant 37 : index
    %243 = vector.load %arg1[%c1_62, %c0_63, %c0_64, %c37_65] : memref<2x1x18x512xf32, #tpu.memory_space<vmem>>, vector<1x1x18x384xf32>
    %244 = vector.shape_cast %243 : vector<1x1x18x384xf32> to vector<18x384xf32>
    %c14 = arith.constant 14 : index
    %245 = memref.load %arg2[%c14] : memref<54xf32, #tpu.memory_space<smem>>
    %c15 = arith.constant 15 : index
    %246 = memref.load %arg2[%c15] : memref<54xf32, #tpu.memory_space<smem>>
    %247 = vector.extract_strided_slice %242 {offsets = [0, 0], sizes = [16, 384], strides = [1, 1]} : vector<18x384xf32> to vector<16x384xf32>
    %248 = vector.extract_strided_slice %244 {offsets = [0, 0], sizes = [16, 384], strides = [1, 1]} : vector<18x384xf32> to vector<16x384xf32>
    %249 = vector.broadcast %245 : f32 to vector<16x384xf32>
    %250 = arith.mulf %249, %247 : vector<16x384xf32>
    %251 = arith.addf %220, %250 : vector<16x384xf32>
    %252 = vector.broadcast %246 : f32 to vector<16x384xf32>
    %253 = arith.mulf %252, %248 : vector<16x384xf32>
    %254 = arith.addf %251, %253 : vector<16x384xf32>
    %c32 = arith.constant 32 : index
    %255 = memref.load %arg2[%c32] : memref<54xf32, #tpu.memory_space<smem>>
    %c33 = arith.constant 33 : index
    %256 = memref.load %arg2[%c33] : memref<54xf32, #tpu.memory_space<smem>>
    %257 = vector.extract_strided_slice %242 {offsets = [1, 0], sizes = [16, 384], strides = [1, 1]} : vector<18x384xf32> to vector<16x384xf32>
    %258 = vector.extract_strided_slice %244 {offsets = [1, 0], sizes = [16, 384], strides = [1, 1]} : vector<18x384xf32> to vector<16x384xf32>
    %259 = vector.broadcast %255 : f32 to vector<16x384xf32>
    %260 = arith.mulf %259, %257 : vector<16x384xf32>
    %261 = arith.addf %230, %260 : vector<16x384xf32>
    %262 = vector.broadcast %256 : f32 to vector<16x384xf32>
    %263 = arith.mulf %262, %258 : vector<16x384xf32>
    %264 = arith.addf %261, %263 : vector<16x384xf32>
    %c50 = arith.constant 50 : index
    %265 = memref.load %arg2[%c50] : memref<54xf32, #tpu.memory_space<smem>>
    %c51 = arith.constant 51 : index
    %266 = memref.load %arg2[%c51] : memref<54xf32, #tpu.memory_space<smem>>
    %267 = vector.extract_strided_slice %242 {offsets = [2, 0], sizes = [16, 384], strides = [1, 1]} : vector<18x384xf32> to vector<16x384xf32>
    %268 = vector.extract_strided_slice %244 {offsets = [2, 0], sizes = [16, 384], strides = [1, 1]} : vector<18x384xf32> to vector<16x384xf32>
    %269 = vector.broadcast %265 : f32 to vector<16x384xf32>
    %270 = arith.mulf %269, %267 : vector<16x384xf32>
    %271 = arith.addf %240, %270 : vector<16x384xf32>
    %272 = vector.broadcast %266 : f32 to vector<16x384xf32>
    %273 = arith.mulf %272, %268 : vector<16x384xf32>
    %274 = arith.addf %271, %273 : vector<16x384xf32>
    %c0_66 = arith.constant 0 : index
    %c0_67 = arith.constant 0 : index
    %c0_68 = arith.constant 0 : index
    %c38_69 = arith.constant 38 : index
    %275 = vector.load %arg1[%c0_66, %c0_67, %c0_68, %c38_69] : memref<2x1x18x512xf32, #tpu.memory_space<vmem>>, vector<1x1x18x384xf32>
    %276 = vector.shape_cast %275 : vector<1x1x18x384xf32> to vector<18x384xf32>
    %c1_70 = arith.constant 1 : index
    %c0_71 = arith.constant 0 : index
    %c0_72 = arith.constant 0 : index
    %c38_73 = arith.constant 38 : index
    %277 = vector.load %arg1[%c1_70, %c0_71, %c0_72, %c38_73] : memref<2x1x18x512xf32, #tpu.memory_space<vmem>>, vector<1x1x18x384xf32>
    %278 = vector.shape_cast %277 : vector<1x1x18x384xf32> to vector<18x384xf32>
    %c16 = arith.constant 16 : index
    %279 = memref.load %arg2[%c16] : memref<54xf32, #tpu.memory_space<smem>>
    %c17 = arith.constant 17 : index
    %280 = memref.load %arg2[%c17] : memref<54xf32, #tpu.memory_space<smem>>
    %281 = vector.extract_strided_slice %276 {offsets = [0, 0], sizes = [16, 384], strides = [1, 1]} : vector<18x384xf32> to vector<16x384xf32>
    %282 = vector.extract_strided_slice %278 {offsets = [0, 0], sizes = [16, 384], strides = [1, 1]} : vector<18x384xf32> to vector<16x384xf32>
    %283 = vector.broadcast %279 : f32 to vector<16x384xf32>
    %284 = arith.mulf %283, %281 : vector<16x384xf32>
    %285 = arith.addf %254, %284 : vector<16x384xf32>
    %286 = vector.broadcast %280 : f32 to vector<16x384xf32>
    %287 = arith.mulf %286, %282 : vector<16x384xf32>
    %288 = arith.addf %285, %287 : vector<16x384xf32>
    %c34 = arith.constant 34 : index
    %289 = memref.load %arg2[%c34] : memref<54xf32, #tpu.memory_space<smem>>
    %c35 = arith.constant 35 : index
    %290 = memref.load %arg2[%c35] : memref<54xf32, #tpu.memory_space<smem>>
    %291 = vector.extract_strided_slice %276 {offsets = [1, 0], sizes = [16, 384], strides = [1, 1]} : vector<18x384xf32> to vector<16x384xf32>
    %292 = vector.extract_strided_slice %278 {offsets = [1, 0], sizes = [16, 384], strides = [1, 1]} : vector<18x384xf32> to vector<16x384xf32>
    %293 = vector.broadcast %289 : f32 to vector<16x384xf32>
    %294 = arith.mulf %293, %291 : vector<16x384xf32>
    %295 = arith.addf %264, %294 : vector<16x384xf32>
    %296 = vector.broadcast %290 : f32 to vector<16x384xf32>
    %297 = arith.mulf %296, %292 : vector<16x384xf32>
    %298 = arith.addf %295, %297 : vector<16x384xf32>
    %c52 = arith.constant 52 : index
    %299 = memref.load %arg2[%c52] : memref<54xf32, #tpu.memory_space<smem>>
    %c53 = arith.constant 53 : index
    %300 = memref.load %arg2[%c53] : memref<54xf32, #tpu.memory_space<smem>>
    %301 = vector.extract_strided_slice %276 {offsets = [2, 0], sizes = [16, 384], strides = [1, 1]} : vector<18x384xf32> to vector<16x384xf32>
    %302 = vector.extract_strided_slice %278 {offsets = [2, 0], sizes = [16, 384], strides = [1, 1]} : vector<18x384xf32> to vector<16x384xf32>
    %303 = vector.broadcast %299 : f32 to vector<16x384xf32>
    %304 = arith.mulf %303, %301 : vector<16x384xf32>
    %305 = arith.addf %274, %304 : vector<16x384xf32>
    %306 = vector.broadcast %300 : f32 to vector<16x384xf32>
    %307 = arith.mulf %306, %302 : vector<16x384xf32>
    %308 = arith.addf %305, %307 : vector<16x384xf32>
    %309 = arith.addf %288, %298 : vector<16x384xf32>
    %310 = arith.addf %309, %308 : vector<16x384xf32>
    %c0_74 = arith.constant 0 : index
    %c0_75 = arith.constant 0 : index
    %c0_76 = arith.constant 0 : index
    %311 = vector.load %arg3[%c0_74, %c0_75, %c0_76] : memref<1x16x384xf32, #tpu.memory_space<vmem>>, vector<1x16x384xf32>
    %312 = vector.shape_cast %311 : vector<1x16x384xf32> to vector<16x384xf32>
    %313 = vector.shape_cast %310 : vector<16x384xf32> to vector<1x16x384xf32>
    tpu.vector_store %arg3[%c0_74, %c0_75, %c0_76], %313 {strides = array<i32>} : memref<1x16x384xf32, #tpu.memory_space<vmem>>, vector<1x16x384xf32>,
    return
  }
  func.func @transform_0(%arg0: i32) -> (i32, i32, i32, i32) {
    %c0_i32 = arith.constant 0 : i32
    %c0_i32_0 = arith.constant 0 : i32
    %c0_i32_1 = arith.constant 0 : i32
    %c0_i32_2 = arith.constant 0 : i32
    return %c0_i32, %arg0, %c0_i32_0, %c0_i32_1 : i32, i32, i32, i32
  }
  func.func @transform_1(%arg0: i32) -> i32 {
    %c0_i32 = arith.constant 0 : i32
    %c0_i32_0 = arith.constant 0 : i32
    return %c0_i32 : i32
  }
  func.func @transform_2(%arg0: i32) -> (i32, i32, i32) {
    %c0_i32 = arith.constant 0 : i32
    %c0_i32_0 = arith.constant 0 : i32
    %c0_i32_1 = arith.constant 0 : i32
    return %arg0, %c0_i32, %c0_i32_0 : i32, i32, i32
  }
}

module attributes {stable_mosaic.version = 11 : i64} {
  func.func @_gate_kernel(%arg0: i32, %arg1: memref<16x128xf32, #tpu.memory_space<vmem>>, %arg2: memref<16x128xf32, #tpu.memory_space<vmem>>, %arg3: memref<16x128xf32, #tpu.memory_space<vmem>>) attributes {dimension_semantics = [#tpu.dimension_semantics<parallel>], iteration_bounds = array<i64: 1>, scalar_prefetch = 0 : i64, scratch_operands = 0 : i64, tpu.core_type = #tpu.core_type<tc>, window_params = [{transform_indices = @transform_0, window_bounds = array<i64: 16, 128>}, {transform_indices = @transform_1, window_bounds = array<i64: 16, 128>}, {transform_indices = @transform_2, window_bounds = array<i64: 16, 128>}]} {
    %c0 = arith.constant 0 : index
    %c0_0 = arith.constant 0 : index
    %0 = vector.load %arg2[%c0, %c0_0] : memref<16x128xf32, #tpu.memory_space<vmem>>, vector<16x128xf32>
    %1 = arith.negf %0 : vector<16x128xf32>
    %2 = math.exp %1 : vector<16x128xf32>
    %cst = arith.constant 1.000000e+00 : f32
    %3 = vector.broadcast %cst : f32 to vector<16x128xf32>
    %4 = arith.addf %3, %2 : vector<16x128xf32>
    %5 = arith.divf %3, %4 : vector<16x128xf32>
    %c0_1 = arith.constant 0 : index
    %c0_2 = arith.constant 0 : index
    %6 = vector.load %arg1[%c0_1, %c0_2] : memref<16x128xf32, #tpu.memory_space<vmem>>, vector<16x128xf32>
    %7 = arith.mulf %5, %6 : vector<16x128xf32>
    %c0_3 = arith.constant 0 : index
    %c0_4 = arith.constant 0 : index
    %8 = vector.load %arg3[%c0_3, %c0_4] : memref<16x128xf32, #tpu.memory_space<vmem>>, vector<16x128xf32>
    tpu.vector_store %arg3[%c0_3, %c0_4], %7 {strides = array<i32>} : memref<16x128xf32, #tpu.memory_space<vmem>>, vector<16x128xf32>,
    return
  }
  func.func @transform_0(%arg0: i32) -> (i32, i32) {
    %c0_i32 = arith.constant 0 : i32
    %c0_i32_0 = arith.constant 0 : i32
    return %arg0, %c0_i32 : i32, i32
  }
  func.func @transform_1(%arg0: i32) -> (i32, i32) {
    %c0_i32 = arith.constant 0 : i32
    %c0_i32_0 = arith.constant 0 : i32
    return %arg0, %c0_i32 : i32, i32
  }
  func.func @transform_2(%arg0: i32) -> (i32, i32) {
    %c0_i32 = arith.constant 0 : i32
    %c0_i32_0 = arith.constant 0 : i32
    return %arg0, %c0_i32 : i32, i32
  }
}

</mosaic_0001>

<llo_original>
// kernel: sparse_spatial_attention.3
$region0: #{sparse_spatial_attention.3}
  #allocation0 [shape = 'u32[]', space=smem, size = 0x4, offset = 0x4, fixed_abs, tag = 'smem constant byte address 0x4 - core index']
  #allocation1 [shape = 'u32[144,128]{1,0:T(1,128)}', space=vmem, size = 0x12000, scoped, tag = 'internal scratch']
  %s0 = inlined_call_operand.hbm [shape: f32[16,90], index: 0, kind: input, shape index: {}]
  %s1 = inlined_call_operand.vmem [shape: f32[2,90], index: 1, kind: output, shape index: {}]
  %s2 = sld [smem:[#allocation0]]
  $region18: #{sparse_spatial_attention.3} parent=0
    _
  %s4 = ssub.s32 1, %s2
  %s5 = scalar_select 0, %s4, %s2
  $region1: #{sparse_spatial_attention.3} parent=0
    #allocation2 [shape = 'u8[8192]{0}', space=vmem, size = 0x2000, scoped, tag = 'input window, operand 0, single buffered']
    #allocation3 [shape = 's32[1]{0}', space=sflag, size = 0x4, scoped, tag = 'scoped memory for sparse_spatial_attention.3']
    %6 = vsyncpa [#allocation3], 0
    // Predicated region
    $region2: #{sparse_spatial_attention.3} parent=1 // pred_check
      _
    $region3: #{sparse_spatial_attention.3} parent=1 // pred_check_branch
      %8 = sbr.rel (0) target = $region5
    $region4: #{sparse_spatial_attention.3} parent=1 // pred_region
      %s10 = ssub.s32 256, 256
      %11 = vsyncadd [#allocation3], %s10
      %s12 = sshll.u32 [#allocation2], 4
      %s13 = int_to_ptr.vmem [resolvable:$true] %s12
      %18 = dma.hbm_to_vmem [thread:$0]  %s0, 256, %s13, [#allocation3], 128, 128, 8
    $region5: #{sparse_spatial_attention.3} parent=1 // pred_fallthru
      _
    // Predicated region
    $region6: #{sparse_spatial_attention.3} parent=1 // pred_check
      _
    $region7: #{sparse_spatial_attention.3} parent=1 // pred_check_branch
      %20 = sbr.rel (0) target = $region9
    $region8: #{sparse_spatial_attention.3} parent=1 // pred_region
      %21 = dma.done [#allocation3], 256
    $region9: #{sparse_spatial_attention.3} parent=1 // pred_fallthru
      _
    %v22 = vld [vmem:[#allocation2] sm:$0xff]
    %v23 = vld [vmem:[#allocation2 + $0x8] sm:$0xff]
    %vm24 = vcmask 736256
    %v25 = vsel %vm24, %v22, 0.0
    %v26 = vsel %vm24, %v23, 0.0
    %v27 = vadd.f32 %v25, %v26
    %v28 = vrot.slane %v27, 4
    %v29 = vadd.f32 %v27, %v28
    %v30 = vrot.slane %v29, 2
    %v31 = vadd.f32 %v29, %v30
    %v32 = vrot.slane %v31, 1
    %v33 = vadd.f32 %v31, %v32
    %v34 = vrcp.pop 16.0
    %v35 = vmul.f32 %v33, %v34
    %v36 = vsel %vm24, %v22, -inf
    %v37 = vsel %vm24, %v23, -inf
    %v38 = vmax.f32 %v36, %v37
    %v39 = vrot.slane %v38, 4
    %v40 = vmax.f32 %v38, %v39
    %v41 = vrot.slane %v40, 2
    %v42 = vmax.f32 %v40, %v41
    %v43 = vrot.slane %v42, 1
    %v44 = vmax.f32 %v42, %v43
    %vm45 = vcmask 1040384
    %v46 = vsel %vm45, %v35, %v44
    %vm47 = vcmask 730112
    %48 = vst.msk [vmem:[%s1] sm:$0x3] %vm47, %v46
    // Predicated region
    $region10: #{sparse_spatial_attention.3} parent=1 // pred_check
      _
    $region11: #{sparse_spatial_attention.3} parent=1 // pred_check_branch
      %50 = sbr.rel (0) target = $region13
    $region12: #{sparse_spatial_attention.3} parent=1 // pred_region
      _
    $region13: #{sparse_spatial_attention.3} parent=1 // pred_fallthru
      _
    // Predicated region
    $region14: #{sparse_spatial_attention.3} parent=1 // pred_check
      _
    $region15: #{sparse_spatial_attention.3} parent=1 // pred_check_branch
      %52 = sbr.rel (0) target = $region17
    $region16: #{sparse_spatial_attention.3} parent=1 // pred_region
      _
    $region17: #{sparse_spatial_attention.3} parent=1 // pred_fallthru
      _
    %53 = vsyncpa [#allocation3], 1

// kernel: sparse_spatial_attention.4
$region0: #{sparse_spatial_attention.4}
  #allocation0 [shape = 'u32[]', space=smem, size = 0x4, offset = 0x4, fixed_abs, tag = 'smem constant byte address 0x4 - core index']
  #allocation1 [shape = 'u32[144,128]{1,0:T(1,128)}', space=vmem, size = 0x12000, scoped, tag = 'internal scratch']
  %s0 = inlined_call_operand.vmem [shape: f32[2,2,18,512], index: 0, kind: input, shape index: {}]
  %s1 = inlined_call_operand.vmem [shape: f32[54], index: 1, kind: input, shape index: {}]
  %s2 = inlined_call_operand.vmem [shape: f32[2,16,384], index: 2, kind: output, shape index: {}]
  %s3 = sld [smem:[#allocation0]]
  $region68: #{sparse_spatial_attention.4} parent=0
    _
  %s5 = ssub.s32 1, %s3
  %s6 = scalar_select 0, %s5, %s3
  $region1: #{sparse_spatial_attention.4} parent=0
    #allocation2 [shape = 'u8[196608]{0}', space=vmem, size = 0x30000, scoped, tag = 'input window, operand 0']
    #allocation3 [shape = 'u8[512]{0}', space=smem, size = 0x200, scoped, tag = 'input window, operand 1, single buffered']
    #allocation4 [shape = 's32[2]{0}', space=sflag, size = 0x8, scoped, tag = 'scoped memory for sparse_spatial_attention.4']
    %7 = vsyncpa [#allocation4], 0
    loop: start=0, step=1, limit=4
    $region2: #{sparse_spatial_attention.4} parent=1 // loop_pre_header
      _
    $region3: #{sparse_spatial_attention.4} parent=1 // loop_header
      %s9 = sphi 0, %s13
      %p10 = scmp.ge.s32.totalorder %s9, 4
      %s19 = sphi 0, %s21
      %s22 = sphi 0, %s19
      %s23 = sphi 0, %s22
      %s39 = sphi 0, %s23
      %s43 = sphi 0, %s43
      %s45 = sphi 0, %s43
      %s46 = sphi 0, %s45
      %s60 = sphi 0, %s46
      %s66 = sphi 0, %s68
      %s69 = sphi 0, %s66
      %s70 = sphi 0, %s69
      %s86 = sphi 0, %s70
    $region4: #{sparse_spatial_attention.4} parent=1 // loop_header_branch
      %12 = sbr.rel (%p10) target = $region8
    $region5: #{sparse_spatial_attention.4} parent=1 // loop_body
      %s14 = ssub.s32 %s9, 1
      %s15 = ssub.s32 %s9, 2
      %s16 = sadd.s32 %s9, 1
      %s17 = ssub.s32 %s9, %s16
      %p18 = scmp.eq.s32.totalorder %s17, 0
      %s20 = sadd.s32 %s19, 1
      %s21 = scalar_select %p18, %s19, %s20
      %p24 = pneg %p18
      %p25 = scmp.eq.s32.totalorder %s9, 1
      %p26 = por %p24, %p25
      %p27 = scmp.ne.s32.totalorder %s19, %s22
      %p28 = scmp.eq.s32.totalorder %s9, 0
      %p29 = por %p27, %p28
      %p30 = scmp.ne.s32.totalorder %s19, %s22
      %p31 = scmp.eq.s32.totalorder %s14, 1
      %p32 = por %p30, %p31
      %p33 = scmp.ne.s32.totalorder %s22, %s23
      %p34 = scmp.eq.s32.totalorder %s14, 0
      %p35 = por %p33, %p34
      %p36 = scmp.ne.s32.totalorder %s22, %s23
      %p37 = scmp.eq.s32.totalorder %s15, 1
      %p38 = por %p36, %p37
      %p40 = scmp.ne.s32.totalorder %s23, %s39
      %p41 = scmp.eq.s32.totalorder %s15, 0
      %p42 = por %p40, %p41
      %s44 = sadd.s32 %s43, 1
      %p47 = scmp.eq.s32.totalorder %s9, 1
      %p48 = scmp.ne.s32.totalorder %s43, %s45
      %p49 = scmp.eq.s32.totalorder %s9, 0
      %p50 = por %p48, %p49
      %p51 = scmp.ne.s32.totalorder %s43, %s45
      %p52 = scmp.eq.s32.totalorder %s14, 1
      %p53 = por %p51, %p52
      %p54 = scmp.ne.s32.totalorder %s45, %s46
      %p55 = scmp.eq.s32.totalorder %s14, 0
      %p56 = por %p54, %p55
      %p57 = scmp.ne.s32.totalorder %s45, %s46
      %p58 = scmp.eq.s32.totalorder %s15, 1
      %p59 = por %p57, %p58
      %p61 = scmp.ne.s32.totalorder %s46, %s60
      %p62 = scmp.eq.s32.totalorder %s15, 0
      %p63 = por %p61, %p62
      %s64 = ssub.s32 %s9, %s16
      %p65 = scmp.eq.s32.totalorder %s64, 0
      %s67 = sadd.s32 %s66, 1
      %s68 = scalar_select %p65, %s66, %s67
      %p71 = pneg %p65
      %p72 = scmp.eq.s32.totalorder %s9, 1
      %p73 = por %p71, %p72
      %p74 = scmp.ne.s32.totalorder %s66, %s69
      %p75 = scmp.eq.s32.totalorder %s9, 0
      %p76 = por %p74, %p75
      %p77 = scmp.ne.s32.totalorder %s66, %s69
      %p78 = scmp.eq.s32.totalorder %s14, 1
      %p79 = por %p77, %p78
      %p80 = scmp.ne.s32.totalorder %s69, %s70
      %p81 = scmp.eq.s32.totalorder %s14, 0
      %p82 = por %p80, %p81
      %p83 = scmp.ne.s32.totalorder %s69, %s70
      %p84 = scmp.eq.s32.totalorder %s15, 1
      %p85 = por %p83, %p84
      %p87 = scmp.ne.s32.totalorder %s70, %s86
      %p88 = scmp.eq.s32.totalorder %s15, 0
      %p89 = por %p87, %p88
      %p90 = scmp.le.s32.totalorder 1, %s9
      %p91 = scmp.lt.s32.totalorder %s9, 3
      %p92 = pnand %p90, %p91
      %p93 = pneg %p92
      // Predicated region
      $region9: #{sparse_spatial_attention.4} parent=5 // pred_check
        _
      $region10: #{sparse_spatial_attention.4} parent=5 // pred_check_branch
        %95 = sbr.rel (%p92) target = $region12
      $region11: #{sparse_spatial_attention.4} parent=5 // pred_region
        %s96 = ssub.s32 %s9, 1
        // Predicated region
        $region13: #{sparse_spatial_attention.4} parent=11 // pred_check
          %p97 = pneg %p56
        $region14: #{sparse_spatial_attention.4} parent=11 // pred_check_branch
          %99 = sbr.rel (%p97) target = $region16
        $region15: #{sparse_spatial_attention.4} parent=11 // pred_region
          %s101 = ssub.s32 16, 16
          %102 = vsyncadd [#allocation4], %s101
          %s104 = sshll.u32 %s1, 4
          %s105 = int_to_ptr.vmem [resolvable:$true] %s104
          %107 = dma.vmem_to_smem %s105, 16, [#allocation3], [#allocation4]
        $region16: #{sparse_spatial_attention.4} parent=11 // pred_fallthru
          _
      $region12: #{sparse_spatial_attention.4} parent=5 // pred_fallthru
        _
      %p108 = scmp.lt.s32.totalorder %s9, 2
      // Predicated region
      $region17: #{sparse_spatial_attention.4} parent=5 // pred_check
        %p109 = pneg %p108
      $region18: #{sparse_spatial_attention.4} parent=5 // pred_check_branch
        %111 = sbr.rel (%p109) target = $region20
      $region19: #{sparse_spatial_attention.4} parent=5 // pred_region
        // Predicated region
        $region21: #{sparse_spatial_attention.4} parent=19 // pred_check
          %p112 = pneg %p29
        $region22: #{sparse_spatial_attention.4} parent=19 // pred_check_branch
          %114 = sbr.rel (%p112) target = $region24
        $region23: #{sparse_spatial_attention.4} parent=19 // pred_region
          %s115 = sand.u32 %s19, 1
          %s116 = sand.u32 %s19, 1
          %s117 = smul.addr %s116, 192
          %s118 = scalar_lea.vmem [#allocation2], %s117
          %s119 = smul.addr %s9, 12
          %s120 = smul.addr %s119, 8
          %s121 = scalar_lea.vmem %s0, %s120
          // Predicated region
          $region25: #{sparse_spatial_attention.4} parent=23 // pred_check
            _
          $region26: #{sparse_spatial_attention.4} parent=23 // pred_check_branch
            %123 = sbr.rel (0) target = $region28
          $region27: #{sparse_spatial_attention.4} parent=23 // pred_region
            // Predicated region
            $region29: #{sparse_spatial_attention.4} parent=27 // pred_check
              _
            $region30: #{sparse_spatial_attention.4} parent=27 // pred_check_branch
              %125 = sbr.rel (0) target = $region32
            $region31: #{sparse_spatial_attention.4} parent=27 // pred_region
              loop: start=0, step=1, limit=1
              $region33: #{sparse_spatial_attention.4} parent=31 // loop_pre_header
                _
              $region34: #{sparse_spatial_attention.4} parent=31 // loop_header
                %s127 = sphi 0, %s131
                %p128 = scmp.ge.s32.totalorder %s127, 1
                %s132 = sphi %s121, %s121
                %s133 = sphi %s118, %s118
              $region35: #{sparse_spatial_attention.4} parent=31 // loop_header_branch
                %130 = sbr.rel (%p128) target = $region39
              $region36: #{sparse_spatial_attention.4} parent=31 // loop_body
                %v134 = vld [vmem:[%s132] sm:$0xff]
                %135 = vst [vmem:[%s133] sm:$0xff] %v134
                %v136 = vld [vmem:[%s132 + $0x8] sm:$0xff]
                %137 = vst [vmem:[%s133 + $0x8] sm:$0xff] %v136
                %v138 = vld [vmem:[%s132 + $0x10] sm:$0xff]
                %139 = vst [vmem:[%s133 + $0x10] sm:$0xff] %v138
                %v140 = vld [vmem:[%s132 + $0x18] sm:$0xff]
                %141 = vst [vmem:[%s133 + $0x18] sm:$0xff] %v140
                %v142 = vld [vmem:[%s132 + $0x20] sm:$0xff]
                %143 = vst [vmem:[%s133 + $0x20] sm:$0xff] %v142
                %v144 = vld [vmem:[%s132 + $0x28] sm:$0xff]
                %145 = vst [vmem:[%s133 + $0x28] sm:$0xff] %v144
                %v146 = vld [vmem:[%s132 + $0x30] sm:$0xff]
                %147 = vst [vmem:[%s133 + $0x30] sm:$0xff] %v146
                %v148 = vld [vmem:[%s132 + $0x38] sm:$0xff]
                %149 = vst [vmem:[%s133 + $0x38] sm:$0xff] %v148
                %v150 = vld [vmem:[%s132 + $0x40] sm:$0xff]
                %151 = vst [vmem:[%s133 + $0x40] sm:$0xff] %v150
                %v152 = vld [vmem:[%s132 + $0x48] sm:$0xff]
                %153 = vst [vmem:[%s133 + $0x48] sm:$0xff] %v152
                %v154 = vld [vmem:[%s132 + $0x50] sm:$0xff]
                %155 = vst [vmem:[%s133 + $0x50] sm:$0xff] %v154
                %v156 = vld [vmem:[%s132 + $0x58] sm:$0xff]
                %157 = vst [vmem:[%s133 + $0x58] sm:$0xff] %v156
                %v158 = vld [vmem:[%s132 + $0xc0] sm:$0xff]
                %159 = vst [vmem:[%s133 + $0x60] sm:$0xff] %v158
                %v160 = vld [vmem:[%s132 + $0xc8] sm:$0xff]
                %161 = vst [vmem:[%s133 + $0x68] sm:$0xff] %v160
                %v162 = vld [vmem:[%s132 + $0xd0] sm:$0xff]
                %163 = vst [vmem:[%s133 + $0x70] sm:$0xff] %v162
                %v164 = vld [vmem:[%s132 + $0xd8] sm:$0xff]
                %165 = vst [vmem:[%s133 + $0x78] sm:$0xff] %v164
                %v166 = vld [vmem:[%s132 + $0xe0] sm:$0xff]
                %167 = vst [vmem:[%s133 + $0x80] sm:$0xff] %v166
                %v168 = vld [vmem:[%s132 + $0xe8] sm:$0xff]
                %169 = vst [vmem:[%s133 + $0x88] sm:$0xff] %v168
                %v170 = vld [vmem:[%s132 + $0xf0] sm:$0xff]
                %171 = vst [vmem:[%s133 + $0x90] sm:$0xff] %v170
                %v172 = vld [vmem:[%s132 + $0xf8] sm:$0xff]
                %173 = vst [vmem:[%s133 + $0x98] sm:$0xff] %v172
                %v174 = vld [vmem:[%s132 + $0x100] sm:$0xff]
                %175 = vst [vmem:[%s133 + $0xa0] sm:$0xff] %v174
                %v176 = vld [vmem:[%s132 + $0x108] sm:$0xff]
                %177 = vst [vmem:[%s133 + $0xa8] sm:$0xff] %v176
                %v178 = vld [vmem:[%s132 + $0x110] sm:$0xff]
                %179 = vst [vmem:[%s133 + $0xb0] sm:$0xff] %v178
                %v180 = vld [vmem:[%s132 + $0x118] sm:$0xff]
                %181 = vst [vmem:[%s133 + $0xb8] sm:$0xff] %v180
              $region37: #{sparse_spatial_attention.4} parent=31 // loop_footer
                %s131 = sadd.s32 1, %s127
              $region38: #{sparse_spatial_attention.4} parent=31 // loop_footer_branch
                %126 = sbr.rel target = $region34
              $region39: #{sparse_spatial_attention.4} parent=31 // loop_exit
                _
            $region32: #{sparse_spatial_attention.4} parent=27 // pred_fallthru
              _
            // Predicated region
            $region40: #{sparse_spatial_attention.4} parent=27 // pred_check
              _
            $region41: #{sparse_spatial_attention.4} parent=27 // pred_check_branch
              %183 = sbr.rel target = $region43
            $region42: #{sparse_spatial_attention.4} parent=27 // pred_region
              _
            $region43: #{sparse_spatial_attention.4} parent=27 // pred_fallthru
              _
          $region28: #{sparse_spatial_attention.4} parent=23 // pred_fallthru
            _
          %184 = vnop
        $region24: #{sparse_spatial_attention.4} parent=19 // pred_fallthru
          _
      $region20: #{sparse_spatial_attention.4} parent=5 // pred_fallthru
        _
      %p185 = scmp.le.s32.totalorder 1, %s9
      %p186 = scmp.lt.s32.totalorder %s9, 3
      %p187 = pnand %p185, %p186
      %p188 = pneg %p187
      // Predicated region
      $region44: #{sparse_spatial_attention.4} parent=5 // pred_check
        _
      $region45: #{sparse_spatial_attention.4} parent=5 // pred_check_branch
        %190 = sbr.rel (%p187) target = $region47
      $region46: #{sparse_spatial_attention.4} parent=5 // pred_region
        %s191 = ssub.s32 %s9, 1
        %s192 = sand.u32 %s22, 1
        %s193 = sand.u32 %s22, 1
        %s194 = smul.addr %s193, 192
        %s195 = scalar_lea.vmem [#allocation2], %s194
        // Predicated region
        $region48: #{sparse_spatial_attention.4} parent=46 // pred_check
          %p196 = pneg %p35
        $region49: #{sparse_spatial_attention.4} parent=46 // pred_check_branch
          %198 = sbr.rel (%p196) target = $region51
        $region50: #{sparse_spatial_attention.4} parent=46 // pred_region
          _
        $region51: #{sparse_spatial_attention.4} parent=46 // pred_fallthru
          _
        // Predicated region
        $region52: #{sparse_spatial_attention.4} parent=46 // pred_check
          %p199 = pneg %p56
        $region53: #{sparse_spatial_attention.4} parent=46 // pred_check_branch
          %201 = sbr.rel (%p199) target = $region55
        $region54: #{sparse_spatial_attention.4} parent=46 // pred_region
          %202 = dma.done [#allocation4], 16
        $region55: #{sparse_spatial_attention.4} parent=46 // pred_fallthru
          _
        %203 = sfence
        %s204 = sand.u32 %s22, 1
        %s205 = sand.u32 %s22, 1
        %s206 = smul.addr %s205, 192
        %s207 = scalar_lea.vmem [#allocation2], %s206
        %p208 = pneg %p35
        %p209 = pneg %p32
        %p210 = pneg %p56
        %p211 = pneg %p53
        %p212 = pneg %p82
        %p213 = pneg %p79
        %p214 = scmp.lt.s32.totalorder %s14, 1
        %s215 = scalar_select %p214, %s14, 1
        %s216 = smul.addr %s215, 6
        %s217 = smul.addr %s216, 8
        %s218 = scalar_lea.vmem %s2, %s217
        %p219 = scmp.lt.s32.totalorder %s14, 1
        %s220 = scalar_select %p219, %s14, 1
        %s221 = smul.addr %s220, 6
        %s222 = smul.addr %s221, 8
        %s223 = scalar_lea.vmem %s2, %s222
        %v224 = vld [vmem:[%s195] sm:$0xff]
        %v225 = vld [vmem:[%s195 + $0x8] sm:$0xff]
        %v226 = vld [vmem:[%s195 + $0x10] sm:$0xff]
        %v227 = vld [vmem:[%s195 + $0x20] sm:$0xff]
        %v228 = vld [vmem:[%s195 + $0x28] sm:$0xff]
        %v229 = vld [vmem:[%s195 + $0x30] sm:$0xff]
        %v230 = vld [vmem:[%s195 + $0x40] sm:$0x3]
        %v231 = vld [vmem:[%s195 + $0x48] sm:$0x3]
        %v232 = vld [vmem:[%s195 + $0x50] sm:$0x3]
        %s233 = scalar_lea.vmem %s195, 96 [#allocation2]
        %v234 = vld [vmem:[%s233] sm:$0xff]
        %v235 = vld [vmem:[%s233 + $0x8] sm:$0xff]
        %v236 = vld [vmem:[%s233 + $0x10] sm:$0xff]
        %v237 = vld [vmem:[%s233 + $0x20] sm:$0xff]
        %v238 = vld [vmem:[%s233 + $0x28] sm:$0xff]
        %v239 = vld [vmem:[%s233 + $0x30] sm:$0xff]
        %v240 = vld [vmem:[%s233 + $0x40] sm:$0x3]
        %v241 = vld [vmem:[%s233 + $0x48] sm:$0x3]
        %v242 = vld [vmem:[%s233 + $0x50] sm:$0x3]
        %s243 = sld [smem:[#allocation3]]
        %s244 = sld [smem:[#allocation3 + $0x1]]
        %v245 = vstv %s243
        %v246 = vmul.f32 %v245, %v224
        %v247 = vmul.f32 %v245, %v225
        %v248 = vmul.f32 %v245, %v226
        %v249 = vmul.f32 %v245, %v227
        %v250 = vmul.f32 %v245, %v228
        %v251 = vmul.f32 %v245, %v229
        %v252 = vadd.f32 %v246, 0.0
        %v253 = vadd.f32 %v247, 0.0
        %v254 = vadd.f32 %v248, 0.0
        %v255 = vadd.f32 %v249, 0.0
        %v256 = vadd.f32 %v250, 0.0
        %v257 = vadd.f32 %v251, 0.0
        %v258 = vstv %s244
        %v259 = vmul.f32 %v258, %v234
        %v260 = vmul.f32 %v258, %v235
        %v261 = vmul.f32 %v258, %v236
        %v262 = vmul.f32 %v258, %v237
        %v263 = vmul.f32 %v258, %v238
        %v264 = vmul.f32 %v258, %v239
        %v265 = vadd.f32 %v252, %v259
        %v266 = vadd.f32 %v253, %v260
        %v267 = vadd.f32 %v254, %v261
        %v268 = vadd.f32 %v255, %v262
        %v269 = vadd.f32 %v256, %v263
        %v270 = vadd.f32 %v257, %v264
        %s271 = sld [smem:[#allocation3 + $0x12]]
        %s272 = sld [smem:[#allocation3 + $0x13]]
        %v273 = vstv %s271
        %v274 = vmul.f32 %v273, %v224
        %v275 = vmul.f32 %v273, %v225
        %v276 = vmul.f32 %v273, %v226
        %v277 = vmul.f32 %v273, %v227
        %v278 = vmul.f32 %v273, %v228
        %v279 = vmul.f32 %v273, %v229
        %v280 = vmul.f32 %v273, %v230
        %v281 = vmul.f32 %v273, %v231
        %v282 = vmul.f32 %v273, %v232
        %v283 = vadd.f32 %v274, 0.0
        %v284 = vadd.f32 %v275, 0.0
        %v285 = vadd.f32 %v276, 0.0
        %v286 = vadd.f32 %v277, 0.0
        %v287 = vadd.f32 %v278, 0.0
        %v288 = vadd.f32 %v279, 0.0
        %v289 = vadd.f32 %v280, 0.0
        %v290 = vadd.f32 %v281, 0.0
        %v291 = vadd.f32 %v282, 0.0
        %v292 = vstv %s272
        %v293 = vmul.f32 %v292, %v234
        %v294 = vmul.f32 %v292, %v235
        %v295 = vmul.f32 %v292, %v236
        %v296 = vmul.f32 %v292, %v237
        %v297 = vmul.f32 %v292, %v238
        %v298 = vmul.f32 %v292, %v239
        %v299 = vmul.f32 %v292, %v240
        %v300 = vmul.f32 %v292, %v241
        %v301 = vmul.f32 %v292, %v242
        %v302 = vadd.f32 %v283, %v293
        %v303 = vadd.f32 %v284, %v294
        %v304 = vadd.f32 %v285, %v295
        %v305 = vadd.f32 %v286, %v296
        %v306 = vadd.f32 %v287, %v297
        %v307 = vadd.f32 %v288, %v298
        %v308 = vadd.f32 %v289, %v299
        %v309 = vadd.f32 %v290, %v300
        %v310 = vadd.f32 %v291, %v301
        %s311 = sld [smem:[#allocation3 + $0x24]]
        %s312 = sld [smem:[#allocation3 + $0x25]]
        %v313 = vstv %s311
        %v314 = vmul.f32 %v313, %v224
        %v315 = vmul.f32 %v313, %v225
        %v316 = vmul.f32 %v313, %v226
        %v317 = vmul.f32 %v313, %v227
        %v318 = vmul.f32 %v313, %v228
        %v319 = vmul.f32 %v313, %v229
        %v320 = vmul.f32 %v313, %v230
        %v321 = vmul.f32 %v313, %v231
        %v322 = vmul.f32 %v313, %v232
        %v323 = vadd.f32 %v314, 0.0
        %v324 = vadd.f32 %v315, 0.0
        %v325 = vadd.f32 %v316, 0.0
        %v326 = vadd.f32 %v317, 0.0
        %v327 = vadd.f32 %v318, 0.0
        %v328 = vadd.f32 %v319, 0.0
        %v329 = vadd.f32 %v320, 0.0
        %v330 = vadd.f32 %v321, 0.0
        %v331 = vadd.f32 %v322, 0.0
        %v332 = vstv %s312
        %v333 = vmul.f32 %v332, %v234
        %v334 = vmul.f32 %v332, %v235
        %v335 = vmul.f32 %v332, %v236
        %v336 = vmul.f32 %v332, %v237
        %v337 = vmul.f32 %v332, %v238
        %v338 = vmul.f32 %v332, %v239
        %v339 = vmul.f32 %v332, %v240
        %v340 = vmul.f32 %v332, %v241
        %v341 = vmul.f32 %v332, %v242
        %v342 = vadd.f32 %v323, %v333
        %v343 = vadd.f32 %v324, %v334
        %v344 = vadd.f32 %v325, %v335
        %v345 = vadd.f32 %v326, %v336
        %v346 = vadd.f32 %v327, %v337
        %v347 = vadd.f32 %v328, %v338
        %v348 = vadd.f32 %v329, %v339
        %v349 = vadd.f32 %v330, %v340
        %v350 = vadd.f32 %v331, %v341
        %v351 = vld [vmem:[%s195] sm:$0xff]
        %v352 = vld [vmem:[%s195 + $0x8] sm:$0xff]
        %v353 = vld [vmem:[%s195 + $0x10] sm:$0xff]
        %v354 = vld [vmem:[%s195 + $0x18] sm:$0xff]
        %v355 = vld [vmem:[%s195 + $0x20] sm:$0xff]
        %v356 = vld [vmem:[%s195 + $0x28] sm:$0xff]
        %v357 = vld [vmem:[%s195 + $0x30] sm:$0xff]
        %v358 = vld [vmem:[%s195 + $0x38] sm:$0xff]
        %v359 = vld [vmem:[%s195 + $0x40] sm:$0x3]
        %v360 = vld [vmem:[%s195 + $0x48] sm:$0x3]
        %v361 = vld [vmem:[%s195 + $0x50] sm:$0x3]
        %v362 = vld [vmem:[%s195 + $0x58] sm:$0x3]
        %v363 = vld [vmem:[%s233] sm:$0xff]
        %v364 = vld [vmem:[%s233 + $0x8] sm:$0xff]
        %v365 = vld [vmem:[%s233 + $0x10] sm:$0xff]
        %v366 = vld [vmem:[%s233 + $0x18] sm:$0xff]
        %v367 = vld [vmem:[%s233 + $0x20] sm:$0xff]
        %v368 = vld [vmem:[%s233 + $0x28] sm:$0xff]
        %v369 = vld [vmem:[%s233 + $0x30] sm:$0xff]
        %v370 = vld [vmem:[%s233 + $0x38] sm:$0xff]
        %v371 = vld [vmem:[%s233 + $0x40] sm:$0x3]
        %v372 = vld [vmem:[%s233 + $0x48] sm:$0x3]
        %v373 = vld [vmem:[%s233 + $0x50] sm:$0x3]
        %v374 = vld [vmem:[%s233 + $0x58] sm:$0x3]
        %s375 = sld [smem:[#allocation3 + $0x2]]
        %s376 = sld [smem:[#allocation3 + $0x3]]
        %v377 = vstv %s375
        %v378 = vmul.f32 %v377, %v351
        %v379 = vmul.f32 %v377, %v352
        %v380 = vmul.f32 %v377, %v353
        %v381 = vmul.f32 %v377, %v354
        %v382 = vmul.f32 %v377, %v355
        %v383 = vmul.f32 %v377, %v356
        %v384 = vmul.f32 %v377, %v357
        %v385 = vmul.f32 %v377, %v358
        %394 = vrot.lane.b32.xlu0 %v378, 127
        %v395 = vpop.permute.xlu0 %394
        %396 = vrot.lane.b32.xlu0 %v379, 127
        %v397 = vpop.permute.xlu0 %396
        %398 = vrot.lane.b32.xlu0 %v380, 127
        %v399 = vpop.permute.xlu0 %398
        %400 = vrot.lane.b32.xlu0 %v381, 127
        %v401 = vpop.permute.xlu0 %400
        %402 = vrot.lane.b32.xlu0 %v382, 127
        %v403 = vpop.permute.xlu0 %402
        %404 = vrot.lane.b32.xlu0 %v383, 127
        %v405 = vpop.permute.xlu0 %404
        %406 = vrot.lane.b32.xlu0 %v384, 127
        %v407 = vpop.permute.xlu0 %406
        %408 = vrot.lane.b32.xlu0 %v385, 127
        %v409 = vpop.permute.xlu0 %408
        %vm410 = vcmask 1039360
        %v411 = vsel %vm410, %v395, %v397
        %v412 = vsel %vm410, %v397, %v399
        %v413 = vsel %vm410, %v399, %v401
        %v414 = vsel %vm410, %v403, %v405
        %v415 = vsel %vm410, %v405, %v407
        %v416 = vsel %vm410, %v407, %v409
        %v423 = vadd.f32 %v265, %v411
        %v424 = vadd.f32 %v266, %v412
        %v425 = vadd.f32 %v267, %v413
        %v426 = vadd.f32 %v268, %v414
        %v427 = vadd.f32 %v269, %v415
        %v428 = vadd.f32 %v270, %v416
        %v429 = vstv %s376
        %v430 = vmul.f32 %v429, %v363
        %v431 = vmul.f32 %v429, %v364
        %v432 = vmul.f32 %v429, %v365
        %v433 = vmul.f32 %v429, %v366
        %v434 = vmul.f32 %v429, %v367
        %v435 = vmul.f32 %v429, %v368
        %v436 = vmul.f32 %v429, %v369
        %v437 = vmul.f32 %v429, %v370
        %446 = vrot.lane.b32.xlu0 %v430, 127
        %v447 = vpop.permute.xlu0 %446
        %448 = vrot.lane.b32.xlu0 %v431, 127
        %v449 = vpop.permute.xlu0 %448
        %450 = vrot.lane.b32.xlu0 %v432, 127
        %v451 = vpop.permute.xlu0 %450
        %452 = vrot.lane.b32.xlu0 %v433, 127
        %v453 = vpop.permute.xlu0 %452
        %454 = vrot.lane.b32.xlu0 %v434, 127
        %v455 = vpop.permute.xlu0 %454
        %456 = vrot.lane.b32.xlu0 %v435, 127
        %v457 = vpop.permute.xlu0 %456
        %458 = vrot.lane.b32.xlu0 %v436, 127
        %v459 = vpop.permute.xlu0 %458
        %460 = vrot.lane.b32.xlu0 %v437, 127
        %v461 = vpop.permute.xlu0 %460
        %v462 = vsel %vm410, %v447, %v449
        %v463 = vsel %vm410, %v449, %v451
        %v464 = vsel %vm410, %v451, %v453
        %v465 = vsel %vm410, %v455, %v457
        %v466 = vsel %vm410, %v457, %v459
        %v467 = vsel %vm410, %v459, %v461
        %v474 = vadd.f32 %v423, %v462
        %v475 = vadd.f32 %v424, %v463
        %v476 = vadd.f32 %v425, %v464
        %v477 = vadd.f32 %v426, %v465
        %v478 = vadd.f32 %v427, %v466
        %v479 = vadd.f32 %v428, %v467
        %s480 = sld [smem:[#allocation3 + $0x14]]
        %s481 = sld [smem:[#allocation3 + $0x15]]
        %v482 = vstv %s480
        %v483 = vmul.f32 %v482, %v351
        %v484 = vmul.f32 %v482, %v352
        %v485 = vmul.f32 %v482, %v353
        %v486 = vmul.f32 %v482, %v354
        %v487 = vmul.f32 %v482, %v355
        %v488 = vmul.f32 %v482, %v356
        %v489 = vmul.f32 %v482, %v357
        %v490 = vmul.f32 %v482, %v358
        %v491 = vmul.f32 %v482, %v359
        %v492 = vmul.f32 %v482, %v360
        %v493 = vmul.f32 %v482, %v361
        %v494 = vmul.f32 %v482, %v362
        %507 = vrot.lane.b32.xlu0 %v483, 127
        %v508 = vpop.permute.xlu0 %507
        %509 = vrot.lane.b32.xlu0 %v484, 127
        %v510 = vpop.permute.xlu0 %509
        %511 = vrot.lane.b32.xlu0 %v485, 127
        %v512 = vpop.permute.xlu0 %511
        %513 = vrot.lane.b32.xlu0 %v486, 127
        %v514 = vpop.permute.xlu0 %513
        %515 = vrot.lane.b32.xlu0 %v487, 127
        %v516 = vpop.permute.xlu0 %515
        %517 = vrot.lane.b32.xlu0 %v488, 127
        %v518 = vpop.permute.xlu0 %517
        %519 = vrot.lane.b32.xlu0 %v489, 127
        %v520 = vpop.permute.xlu0 %519
        %521 = vrot.lane.b32.xlu0 %v490, 127
        %v522 = vpop.permute.xlu0 %521
        %523 = vrot.lane.b32.xlu0 %v491, 127
        %v524 = vpop.permute.xlu0 %523
        %525 = vrot.lane.b32.xlu0 %v492, 127
        %v526 = vpop.permute.xlu0 %525
        %527 = vrot.lane.b32.xlu0 %v493, 127
        %v528 = vpop.permute.xlu0 %527
        %529 = vrot.lane.b32.xlu0 %v494, 127
        %v530 = vpop.permute.xlu0 %529
        %v531 = vsel %vm410, %v508, %v510
        %v532 = vsel %vm410, %v510, %v512
        %v533 = vsel %vm410, %v512, %v514
        %v534 = vsel %vm410, %v516, %v518
        %v535 = vsel %vm410, %v518, %v520
        %v536 = vsel %vm410, %v520, %v522
        %v537 = vsel %vm410, %v524, %v526
        %v538 = vsel %vm410, %v526, %v528
        %v539 = vsel %vm410, %v528, %v530
        %v549 = vadd.f32 %v302, %v531
        %v550 = vadd.f32 %v303, %v532
        %v551 = vadd.f32 %v304, %v533
        %v552 = vadd.f32 %v305, %v534
        %v553 = vadd.f32 %v306, %v535
        %v554 = vadd.f32 %v307, %v536
        %v555 = vadd.f32 %v308, %v537
        %v556 = vadd.f32 %v309, %v538
        %v557 = vadd.f32 %v310, %v539
        %v558 = vstv %s481
        %v559 = vmul.f32 %v558, %v363
        %v560 = vmul.f32 %v558, %v364
        %v561 = vmul.f32 %v558, %v365
        %v562 = vmul.f32 %v558, %v366
        %v563 = vmul.f32 %v558, %v367
        %v564 = vmul.f32 %v558, %v368
        %v565 = vmul.f32 %v558, %v369
        %v566 = vmul.f32 %v558, %v370
        %v567 = vmul.f32 %v558, %v371
        %v568 = vmul.f32 %v558, %v372
        %v569 = vmul.f32 %v558, %v373
        %v570 = vmul.f32 %v558, %v374
        %583 = vrot.lane.b32.xlu0 %v559, 127
        %v584 = vpop.permute.xlu0 %583
        %585 = vrot.lane.b32.xlu0 %v560, 127
        %v586 = vpop.permute.xlu0 %585
        %587 = vrot.lane.b32.xlu0 %v561, 127
        %v588 = vpop.permute.xlu0 %587
        %589 = vrot.lane.b32.xlu0 %v562, 127
        %v590 = vpop.permute.xlu0 %589
        %591 = vrot.lane.b32.xlu0 %v563, 127
        %v592 = vpop.permute.xlu0 %591
        %593 = vrot.lane.b32.xlu0 %v564, 127
        %v594 = vpop.permute.xlu0 %593
        %595 = vrot.lane.b32.xlu0 %v565, 127
        %v596 = vpop.permute.xlu0 %595
        %597 = vrot.lane.b32.xlu0 %v566, 127
        %v598 = vpop.permute.xlu0 %597
        %599 = vrot.lane.b32.xlu0 %v567, 127
        %v600 = vpop.permute.xlu0 %599
        %601 = vrot.lane.b32.xlu0 %v568, 127
        %v602 = vpop.permute.xlu0 %601
        %603 = vrot.lane.b32.xlu0 %v569, 127
        %v604 = vpop.permute.xlu0 %603
        %605 = vrot.lane.b32.xlu0 %v570, 127
        %v606 = vpop.permute.xlu0 %605
        %v607 = vsel %vm410, %v584, %v586
        %v608 = vsel %vm410, %v586, %v588
        %v609 = vsel %vm410, %v588, %v590
        %v610 = vsel %vm410, %v592, %v594
        %v611 = vsel %vm410, %v594, %v596
        %v612 = vsel %vm410, %v596, %v598
        %v613 = vsel %vm410, %v600, %v602
        %v614 = vsel %vm410, %v602, %v604
        %v615 = vsel %vm410, %v604, %v606
        %v625 = vadd.f32 %v549, %v607
        %v626 = vadd.f32 %v550, %v608
        %v627 = vadd.f32 %v551, %v609
        %v628 = vadd.f32 %v552, %v610
        %v629 = vadd.f32 %v553, %v611
        %v630 = vadd.f32 %v554, %v612
        %v631 = vadd.f32 %v555, %v613
        %v632 = vadd.f32 %v556, %v614
        %v633 = vadd.f32 %v557, %v615
        %s634 = sld [smem:[#allocation3 + $0x26]]
        %s635 = sld [smem:[#allocation3 + $0x27]]
        %v636 = vstv %s634
        %v637 = vmul.f32 %v636, %v351
        %v638 = vmul.f32 %v636, %v352
        %v639 = vmul.f32 %v636, %v353
        %v640 = vmul.f32 %v636, %v354
        %v641 = vmul.f32 %v636, %v355
        %v642 = vmul.f32 %v636, %v356
        %v643 = vmul.f32 %v636, %v357
        %v644 = vmul.f32 %v636, %v358
        %v645 = vmul.f32 %v636, %v359
        %v646 = vmul.f32 %v636, %v360
        %v647 = vmul.f32 %v636, %v361
        %v648 = vmul.f32 %v636, %v362
        %661 = vrot.lane.b32.xlu0 %v637, 127
        %v662 = vpop.permute.xlu0 %661
        %663 = vrot.lane.b32.xlu0 %v638, 127
        %v664 = vpop.permute.xlu0 %663
        %665 = vrot.lane.b32.xlu0 %v639, 127
        %v666 = vpop.permute.xlu0 %665
        %667 = vrot.lane.b32.xlu0 %v640, 127
        %v668 = vpop.permute.xlu0 %667
        %669 = vrot.lane.b32.xlu0 %v641, 127
        %v670 = vpop.permute.xlu0 %669
        %671 = vrot.lane.b32.xlu0 %v642, 127
        %v672 = vpop.permute.xlu0 %671
        %673 = vrot.lane.b32.xlu0 %v643, 127
        %v674 = vpop.permute.xlu0 %673
        %675 = vrot.lane.b32.xlu0 %v644, 127
        %v676 = vpop.permute.xlu0 %675
        %677 = vrot.lane.b32.xlu0 %v645, 127
        %v678 = vpop.permute.xlu0 %677
        %679 = vrot.lane.b32.xlu0 %v646, 127
        %v680 = vpop.permute.xlu0 %679
        %681 = vrot.lane.b32.xlu0 %v647, 127
        %v682 = vpop.permute.xlu0 %681
        %683 = vrot.lane.b32.xlu0 %v648, 127
        %v684 = vpop.permute.xlu0 %683
        %v685 = vsel %vm410, %v662, %v664
        %v686 = vsel %vm410, %v664, %v666
        %v687 = vsel %vm410, %v666, %v668
        %v688 = vsel %vm410, %v670, %v672
        %v689 = vsel %vm410, %v672, %v674
        %v690 = vsel %vm410, %v674, %v676
        %v691 = vsel %vm410, %v678, %v680
        %v692 = vsel %vm410, %v680, %v682
        %v693 = vsel %vm410, %v682, %v684
        %v703 = vadd.f32 %v342, %v685
        %v704 = vadd.f32 %v343, %v686
        %v705 = vadd.f32 %v344, %v687
        %v706 = vadd.f32 %v345, %v688
        %v707 = vadd.f32 %v346, %v689
        %v708 = vadd.f32 %v347, %v690
        %v709 = vadd.f32 %v348, %v691
        %v710 = vadd.f32 %v349, %v692
        %v711 = vadd.f32 %v350, %v693
        %v712 = vstv %s635
        %v713 = vmul.f32 %v712, %v363
        %v714 = vmul.f32 %v712, %v364
        %v715 = vmul.f32 %v712, %v365
        %v716 = vmul.f32 %v712, %v366
        %v717 = vmul.f32 %v712, %v367
        %v718 = vmul.f32 %v712, %v368
        %v719 = vmul.f32 %v712, %v369
        %v720 = vmul.f32 %v712, %v370
        %v721 = vmul.f32 %v712, %v371
        %v722 = vmul.f32 %v712, %v372
        %v723 = vmul.f32 %v712, %v373
        %v724 = vmul.f32 %v712, %v374
        %737 = vrot.lane.b32.xlu0 %v713, 127
        %v738 = vpop.permute.xlu0 %737
        %739 = vrot.lane.b32.xlu0 %v714, 127
        %v740 = vpop.permute.xlu0 %739
        %741 = vrot.lane.b32.xlu0 %v715, 127
        %v742 = vpop.permute.xlu0 %741
        %743 = vrot.lane.b32.xlu0 %v716, 127
        %v744 = vpop.permute.xlu0 %743
        %745 = vrot.lane.b32.xlu0 %v717, 127
        %v746 = vpop.permute.xlu0 %745
        %747 = vrot.lane.b32.xlu0 %v718, 127
        %v748 = vpop.permute.xlu0 %747
        %749 = vrot.lane.b32.xlu0 %v719, 127
        %v750 = vpop.permute.xlu0 %749
        %751 = vrot.lane.b32.xlu0 %v720, 127
        %v752 = vpop.permute.xlu0 %751
        %753 = vrot.lane.b32.xlu0 %v721, 127
        %v754 = vpop.permute.xlu0 %753
        %755 = vrot.lane.b32.xlu0 %v722, 127
        %v756 = vpop.permute.xlu0 %755
        %757 = vrot.lane.b32.xlu0 %v723, 127
        %v758 = vpop.permute.xlu0 %757
        %759 = vrot.lane.b32.xlu0 %v724, 127
        %v760 = vpop.permute.xlu0 %759
        %v761 = vsel %vm410, %v738, %v740
        %v762 = vsel %vm410, %v740, %v742
        %v763 = vsel %vm410, %v742, %v744
        %v764 = vsel %vm410, %v746, %v748
        %v765 = vsel %vm410, %v748, %v750
        %v766 = vsel %vm410, %v750, %v752
        %v767 = vsel %vm410, %v754, %v756
        %v768 = vsel %vm410, %v756, %v758
        %v769 = vsel %vm410, %v758, %v760
        %v779 = vadd.f32 %v703, %v761
        %v780 = vadd.f32 %v704, %v762
        %v781 = vadd.f32 %v705, %v763
        %v782 = vadd.f32 %v706, %v764
        %v783 = vadd.f32 %v707, %v765
        %v784 = vadd.f32 %v708, %v766
        %v785 = vadd.f32 %v709, %v767
        %v786 = vadd.f32 %v710, %v768
        %v787 = vadd.f32 %v711, %v769
        %s788 = sld [smem:[#allocation3 + $0x4]]
        %s789 = sld [smem:[#allocation3 + $0x5]]
        %v790 = vstv %s788
        %v791 = vmul.f32 %v790, %v351
        %v792 = vmul.f32 %v790, %v352
        %v793 = vmul.f32 %v790, %v353
        %v794 = vmul.f32 %v790, %v354
        %v795 = vmul.f32 %v790, %v355
        %v796 = vmul.f32 %v790, %v356
        %v797 = vmul.f32 %v790, %v357
        %v798 = vmul.f32 %v790, %v358
        %807 = vrot.lane.b32.xlu0 %v791, 126
        %v808 = vpop.permute.xlu0 %807
        %809 = vrot.lane.b32.xlu0 %v792, 126
        %v810 = vpop.permute.xlu0 %809
        %811 = vrot.lane.b32.xlu0 %v793, 126
        %v812 = vpop.permute.xlu0 %811
        %813 = vrot.lane.b32.xlu0 %v794, 126
        %v814 = vpop.permute.xlu0 %813
        %815 = vrot.lane.b32.xlu0 %v795, 126
        %v816 = vpop.permute.xlu0 %815
        %817 = vrot.lane.b32.xlu0 %v796, 126
        %v818 = vpop.permute.xlu0 %817
        %819 = vrot.lane.b32.xlu0 %v797, 126
        %v820 = vpop.permute.xlu0 %819
        %821 = vrot.lane.b32.xlu0 %v798, 126
        %v822 = vpop.permute.xlu0 %821
        %vm823 = vcmask 1031168
        %v824 = vsel %vm823, %v808, %v810
        %v825 = vsel %vm823, %v810, %v812
        %v826 = vsel %vm823, %v812, %v814
        %v827 = vsel %vm823, %v816, %v818
        %v828 = vsel %vm823, %v818, %v820
        %v829 = vsel %vm823, %v820, %v822
        %v836 = vadd.f32 %v474, %v824
        %v837 = vadd.f32 %v475, %v825
        %v838 = vadd.f32 %v476, %v826
        %v839 = vadd.f32 %v477, %v827
        %v840 = vadd.f32 %v478, %v828
        %v841 = vadd.f32 %v479, %v829
        %v842 = vstv %s789
        %v843 = vmul.f32 %v842, %v363
        %v844 = vmul.f32 %v842, %v364
        %v845 = vmul.f32 %v842, %v365
        %v846 = vmul.f32 %v842, %v366
        %v847 = vmul.f32 %v842, %v367
        %v848 = vmul.f32 %v842, %v368
        %v849 = vmul.f32 %v842, %v369
        %v850 = vmul.f32 %v842, %v370
        %859 = vrot.lane.b32.xlu0 %v843, 126
        %v860 = vpop.permute.xlu0 %859
        %861 = vrot.lane.b32.xlu0 %v844, 126
        %v862 = vpop.permute.xlu0 %861
        %863 = vrot.lane.b32.xlu0 %v845, 126
        %v864 = vpop.permute.xlu0 %863
        %865 = vrot.lane.b32.xlu0 %v846, 126
        %v866 = vpop.permute.xlu0 %865
        %867 = vrot.lane.b32.xlu0 %v847, 126
        %v868 = vpop.permute.xlu0 %867
        %869 = vrot.lane.b32.xlu0 %v848, 126
        %v870 = vpop.permute.xlu0 %869
        %871 = vrot.lane.b32.xlu0 %v849, 126
        %v872 = vpop.permute.xlu0 %871
        %873 = vrot.lane.b32.xlu0 %v850, 126
        %v874 = vpop.permute.xlu0 %873
        %v875 = vsel %vm823, %v860, %v862
        %v876 = vsel %vm823, %v862, %v864
        %v877 = vsel %vm823, %v864, %v866
        %v878 = vsel %vm823, %v868, %v870
        %v879 = vsel %vm823, %v870, %v872
        %v880 = vsel %vm823, %v872, %v874
        %v887 = vadd.f32 %v836, %v875
        %v888 = vadd.f32 %v837, %v876
        %v889 = vadd.f32 %v838, %v877
        %v890 = vadd.f32 %v839, %v878
        %v891 = vadd.f32 %v840, %v879
        %v892 = vadd.f32 %v841, %v880
        %s893 = sld [smem:[#allocation3 + $0x16]]
        %s894 = sld [smem:[#allocation3 + $0x17]]
        %v895 = vstv %s893
        %v896 = vmul.f32 %v895, %v351
        %v897 = vmul.f32 %v895, %v352
        %v898 = vmul.f32 %v895, %v353
        %v899 = vmul.f32 %v895, %v354
        %v900 = vmul.f32 %v895, %v355
        %v901 = vmul.f32 %v895, %v356
        %v902 = vmul.f32 %v895, %v357
        %v903 = vmul.f32 %v895, %v358
        %v904 = vmul.f32 %v895, %v359
        %v905 = vmul.f32 %v895, %v360
        %v906 = vmul.f32 %v895, %v361
        %v907 = vmul.f32 %v895, %v362
        %920 = vrot.lane.b32.xlu0 %v896, 126
        %v921 = vpop.permute.xlu0 %920
        %922 = vrot.lane.b32.xlu0 %v897, 126
        %v923 = vpop.permute.xlu0 %922
        %924 = vrot.lane.b32.xlu0 %v898, 126
        %v925 = vpop.permute.xlu0 %924
        %926 = vrot.lane.b32.xlu0 %v899, 126
        %v927 = vpop.permute.xlu0 %926
        %928 = vrot.lane.b32.xlu0 %v900, 126
        %v929 = vpop.permute.xlu0 %928
        %930 = vrot.lane.b32.xlu0 %v901, 126
        %v931 = vpop.permute.xlu0 %930
        %932 = vrot.lane.b32.xlu0 %v902, 126
        %v933 = vpop.permute.xlu0 %932
        %934 = vrot.lane.b32.xlu0 %v903, 126
        %v935 = vpop.permute.xlu0 %934
        %936 = vrot.lane.b32.xlu0 %v904, 126
        %v937 = vpop.permute.xlu0 %936
        %938 = vrot.lane.b32.xlu0 %v905, 126
        %v939 = vpop.permute.xlu0 %938
        %940 = vrot.lane.b32.xlu0 %v906, 126
        %v941 = vpop.permute.xlu0 %940
        %942 = vrot.lane.b32.xlu0 %v907, 126
        %v943 = vpop.permute.xlu0 %942
        %v944 = vsel %vm823, %v921, %v923
        %v945 = vsel %vm823, %v923, %v925
        %v946 = vsel %vm823, %v925, %v927
        %v947 = vsel %vm823, %v929, %v931
        %v948 = vsel %vm823, %v931, %v933
        %v949 = vsel %vm823, %v933, %v935
        %v950 = vsel %vm823, %v937, %v939
        %v951 = vsel %vm823, %v939, %v941
        %v952 = vsel %vm823, %v941, %v943
        %v962 = vadd.f32 %v625, %v944
        %v963 = vadd.f32 %v626, %v945
        %v964 = vadd.f32 %v627, %v946
        %v965 = vadd.f32 %v628, %v947
        %v966 = vadd.f32 %v629, %v948
        %v967 = vadd.f32 %v630, %v949
        %v968 = vadd.f32 %v631, %v950
        %v969 = vadd.f32 %v632, %v951
        %v970 = vadd.f32 %v633, %v952
        %v971 = vstv %s894
        %v972 = vmul.f32 %v971, %v363
        %v973 = vmul.f32 %v971, %v364
        %v974 = vmul.f32 %v971, %v365
        %v975 = vmul.f32 %v971, %v366
        %v976 = vmul.f32 %v971, %v367
        %v977 = vmul.f32 %v971, %v368
        %v978 = vmul.f32 %v971, %v369
        %v979 = vmul.f32 %v971, %v370
        %v980 = vmul.f32 %v971, %v371
        %v981 = vmul.f32 %v971, %v372
        %v982 = vmul.f32 %v971, %v373
        %v983 = vmul.f32 %v971, %v374
        %996 = vrot.lane.b32.xlu0 %v972, 126
        %v997 = vpop.permute.xlu0 %996
        %998 = vrot.lane.b32.xlu0 %v973, 126
        %v999 = vpop.permute.xlu0 %998
        %1000 = vrot.lane.b32.xlu0 %v974, 126
        %v1001 = vpop.permute.xlu0 %1000
        %1002 = vrot.lane.b32.xlu0 %v975, 126
        %v1003 = vpop.permute.xlu0 %1002
        %1004 = vrot.lane.b32.xlu0 %v976, 126
        %v1005 = vpop.permute.xlu0 %1004
        %1006 = vrot.lane.b32.xlu0 %v977, 126
        %v1007 = vpop.permute.xlu0 %1006
        %1008 = vrot.lane.b32.xlu0 %v978, 126
        %v1009 = vpop.permute.xlu0 %1008
        %1010 = vrot.lane.b32.xlu0 %v979, 126
        %v1011 = vpop.permute.xlu0 %1010
        %1012 = vrot.lane.b32.xlu0 %v980, 126
        %v1013 = vpop.permute.xlu0 %1012
        %1014 = vrot.lane.b32.xlu0 %v981, 126
        %v1015 = vpop.permute.xlu0 %1014
        %1016 = vrot.lane.b32.xlu0 %v982, 126
        %v1017 = vpop.permute.xlu0 %1016
        %1018 = vrot.lane.b32.xlu0 %v983, 126
        %v1019 = vpop.permute.xlu0 %1018
        %v1020 = vsel %vm823, %v997, %v999
        %v1021 = vsel %vm823, %v999, %v1001
        %v1022 = vsel %vm823, %v1001, %v1003
        %v1023 = vsel %vm823, %v1005, %v1007
        %v1024 = vsel %vm823, %v1007, %v1009
        %v1025 = vsel %vm823, %v1009, %v1011
        %v1026 = vsel %vm823, %v1013, %v1015
        %v1027 = vsel %vm823, %v1015, %v1017
        %v1028 = vsel %vm823, %v1017, %v1019
        %v1038 = vadd.f32 %v962, %v1020
        %v1039 = vadd.f32 %v963, %v1021
        %v1040 = vadd.f32 %v964, %v1022
        %v1041 = vadd.f32 %v965, %v1023
        %v1042 = vadd.f32 %v966, %v1024
        %v1043 = vadd.f32 %v967, %v1025
        %v1044 = vadd.f32 %v968, %v1026
        %v1045 = vadd.f32 %v969, %v1027
        %v1046 = vadd.f32 %v970, %v1028
        %s1047 = sld [smem:[#allocation3 + $0x28]]
        %s1048 = sld [smem:[#allocation3 + $0x29]]
        %v1049 = vstv %s1047
        %v1050 = vmul.f32 %v1049, %v351
        %v1051 = vmul.f32 %v1049, %v352
        %v1052 = vmul.f32 %v1049, %v353
        %v1053 = vmul.f32 %v1049, %v354
        %v1054 = vmul.f32 %v1049, %v355
        %v1055 = vmul.f32 %v1049, %v356
        %v1056 = vmul.f32 %v1049, %v357
        %v1057 = vmul.f32 %v1049, %v358
        %v1058 = vmul.f32 %v1049, %v359
        %v1059 = vmul.f32 %v1049, %v360
        %v1060 = vmul.f32 %v1049, %v361
        %v1061 = vmul.f32 %v1049, %v362
        %1074 = vrot.lane.b32.xlu0 %v1050, 126
        %v1075 = vpop.permute.xlu0 %1074
        %1076 = vrot.lane.b32.xlu0 %v1051, 126
        %v1077 = vpop.permute.xlu0 %1076
        %1078 = vrot.lane.b32.xlu0 %v1052, 126
        %v1079 = vpop.permute.xlu0 %1078
        %1080 = vrot.lane.b32.xlu0 %v1053, 126
        %v1081 = vpop.permute.xlu0 %1080
        %1082 = vrot.lane.b32.xlu0 %v1054, 126
        %v1083 = vpop.permute.xlu0 %1082
        %1084 = vrot.lane.b32.xlu0 %v1055, 126
        %v1085 = vpop.permute.xlu0 %1084
        %1086 = vrot.lane.b32.xlu0 %v1056, 126
        %v1087 = vpop.permute.xlu0 %1086
        %1088 = vrot.lane.b32.xlu0 %v1057, 126
        %v1089 = vpop.permute.xlu0 %1088
        %1090 = vrot.lane.b32.xlu0 %v1058, 126
        %v1091 = vpop.permute.xlu0 %1090
        %1092 = vrot.lane.b32.xlu0 %v1059, 126
        %v1093 = vpop.permute.xlu0 %1092
        %1094 = vrot.lane.b32.xlu0 %v1060, 126
        %v1095 = vpop.permute.xlu0 %1094
        %1096 = vrot.lane.b32.xlu0 %v1061, 126
        %v1097 = vpop.permute.xlu0 %1096
        %v1098 = vsel %vm823, %v1075, %v1077
        %v1099 = vsel %vm823, %v1077, %v1079
        %v1100 = vsel %vm823, %v1079, %v1081
        %v1101 = vsel %vm823, %v1083, %v1085
        %v1102 = vsel %vm823, %v1085, %v1087
        %v1103 = vsel %vm823, %v1087, %v1089
        %v1104 = vsel %vm823, %v1091, %v1093
        %v1105 = vsel %vm823, %v1093, %v1095
        %v1106 = vsel %vm823, %v1095, %v1097
        %v1116 = vadd.f32 %v779, %v1098
        %v1117 = vadd.f32 %v780, %v1099
        %v1118 = vadd.f32 %v781, %v1100
        %v1119 = vadd.f32 %v782, %v1101
        %v1120 = vadd.f32 %v783, %v1102
        %v1121 = vadd.f32 %v784, %v1103
        %v1122 = vadd.f32 %v785, %v1104
        %v1123 = vadd.f32 %v786, %v1105
        %v1124 = vadd.f32 %v787, %v1106
        %v1125 = vstv %s1048
        %v1126 = vmul.f32 %v1125, %v363
        %v1127 = vmul.f32 %v1125, %v364
        %v1128 = vmul.f32 %v1125, %v365
        %v1129 = vmul.f32 %v1125, %v366
        %v1130 = vmul.f32 %v1125, %v367
        %v1131 = vmul.f32 %v1125, %v368
        %v1132 = vmul.f32 %v1125, %v369
        %v1133 = vmul.f32 %v1125, %v370
        %v1134 = vmul.f32 %v1125, %v371
        %v1135 = vmul.f32 %v1125, %v372
        %v1136 = vmul.f32 %v1125, %v373
        %v1137 = vmul.f32 %v1125, %v374
        %1150 = vrot.lane.b32.xlu0 %v1126, 126
        %v1151 = vpop.permute.xlu0 %1150
        %1152 = vrot.lane.b32.xlu0 %v1127, 126
        %v1153 = vpop.permute.xlu0 %1152
        %1154 = vrot.lane.b32.xlu0 %v1128, 126
        %v1155 = vpop.permute.xlu0 %1154
        %1156 = vrot.lane.b32.xlu0 %v1129, 126
        %v1157 = vpop.permute.xlu0 %1156
        %1158 = vrot.lane.b32.xlu0 %v1130, 126
        %v1159 = vpop.permute.xlu0 %1158
        %1160 = vrot.lane.b32.xlu0 %v1131, 126
        %v1161 = vpop.permute.xlu0 %1160
        %1162 = vrot.lane.b32.xlu0 %v1132, 126
        %v1163 = vpop.permute.xlu0 %1162
        %1164 = vrot.lane.b32.xlu0 %v1133, 126
        %v1165 = vpop.permute.xlu0 %1164
        %1166 = vrot.lane.b32.xlu0 %v1134, 126
        %v1167 = vpop.permute.xlu0 %1166
        %1168 = vrot.lane.b32.xlu0 %v1135, 126
        %v1169 = vpop.permute.xlu0 %1168
        %1170 = vrot.lane.b32.xlu0 %v1136, 126
        %v1171 = vpop.permute.xlu0 %1170
        %1172 = vrot.lane.b32.xlu0 %v1137, 126
        %v1173 = vpop.permute.xlu0 %1172
        %v1174 = vsel %vm823, %v1151, %v1153
        %v1175 = vsel %vm823, %v1153, %v1155
        %v1176 = vsel %vm823, %v1155, %v1157
        %v1177 = vsel %vm823, %v1159, %v1161
        %v1178 = vsel %vm823, %v1161, %v1163
        %v1179 = vsel %vm823, %v1163, %v1165
        %v1180 = vsel %vm823, %v1167, %v1169
        %v1181 = vsel %vm823, %v1169, %v1171
        %v1182 = vsel %vm823, %v1171, %v1173
        %v1192 = vadd.f32 %v1116, %v1174
        %v1193 = vadd.f32 %v1117, %v1175
        %v1194 = vadd.f32 %v1118, %v1176
        %v1195 = vadd.f32 %v1119, %v1177
        %v1196 = vadd.f32 %v1120, %v1178
        %v1197 = vadd.f32 %v1121, %v1179
        %v1198 = vadd.f32 %v1122, %v1180
        %v1199 = vadd.f32 %v1123, %v1181
        %v1200 = vadd.f32 %v1124, %v1182
        %s1201 = sld [smem:[#allocation3 + $0x6]]
        %s1202 = sld [smem:[#allocation3 + $0x7]]
        %v1203 = vstv %s1201
        %v1204 = vmul.f32 %v1203, %v351
        %v1205 = vmul.f32 %v1203, %v352
        %v1206 = vmul.f32 %v1203, %v353
        %v1207 = vmul.f32 %v1203, %v354
        %v1208 = vmul.f32 %v1203, %v355
        %v1209 = vmul.f32 %v1203, %v356
        %v1210 = vmul.f32 %v1203, %v357
        %v1211 = vmul.f32 %v1203, %v358
        %1220 = vrot.lane.b32.xlu0 %v1204, 110
        %v1221 = vpop.permute.xlu0 %1220
        %1222 = vrot.lane.b32.xlu0 %v1205, 110
        %v1223 = vpop.permute.xlu0 %1222
        %1224 = vrot.lane.b32.xlu0 %v1206, 110
        %v1225 = vpop.permute.xlu0 %1224
        %1226 = vrot.lane.b32.xlu0 %v1207, 110
        %v1227 = vpop.permute.xlu0 %1226
        %1228 = vrot.lane.b32.xlu0 %v1208, 110
        %v1229 = vpop.permute.xlu0 %1228
        %1230 = vrot.lane.b32.xlu0 %v1209, 110
        %v1231 = vpop.permute.xlu0 %1230
        %1232 = vrot.lane.b32.xlu0 %v1210, 110
        %v1233 = vpop.permute.xlu0 %1232
        %1234 = vrot.lane.b32.xlu0 %v1211, 110
        %v1235 = vpop.permute.xlu0 %1234
        %vm1236 = vcmask 900096
        %v1237 = vsel %vm1236, %v1221, %v1223
        %v1238 = vsel %vm1236, %v1223, %v1225
        %v1239 = vsel %vm1236, %v1225, %v1227
        %v1240 = vsel %vm1236, %v1229, %v1231
        %v1241 = vsel %vm1236, %v1231, %v1233
        %v1242 = vsel %vm1236, %v1233, %v1235
        %v1249 = vadd.f32 %v887, %v1237
        %v1250 = vadd.f32 %v888, %v1238
        %v1251 = vadd.f32 %v889, %v1239
        %v1252 = vadd.f32 %v890, %v1240
        %v1253 = vadd.f32 %v891, %v1241
        %v1254 = vadd.f32 %v892, %v1242
        %v1255 = vstv %s1202
        %v1256 = vmul.f32 %v1255, %v363
        %v1257 = vmul.f32 %v1255, %v364
        %v1258 = vmul.f32 %v1255, %v365
        %v1259 = vmul.f32 %v1255, %v366
        %v1260 = vmul.f32 %v1255, %v367
        %v1261 = vmul.f32 %v1255, %v368
        %v1262 = vmul.f32 %v1255, %v369
        %v1263 = vmul.f32 %v1255, %v370
        %1272 = vrot.lane.b32.xlu0 %v1256, 110
        %v1273 = vpop.permute.xlu0 %1272
        %1274 = vrot.lane.b32.xlu0 %v1257, 110
        %v1275 = vpop.permute.xlu0 %1274
        %1276 = vrot.lane.b32.xlu0 %v1258, 110
        %v1277 = vpop.permute.xlu0 %1276
        %1278 = vrot.lane.b32.xlu0 %v1259, 110
        %v1279 = vpop.permute.xlu0 %1278
        %1280 = vrot.lane.b32.xlu0 %v1260, 110
        %v1281 = vpop.permute.xlu0 %1280
        %1282 = vrot.lane.b32.xlu0 %v1261, 110
        %v1283 = vpop.permute.xlu0 %1282
        %1284 = vrot.lane.b32.xlu0 %v1262, 110
        %v1285 = vpop.permute.xlu0 %1284
        %1286 = vrot.lane.b32.xlu0 %v1263, 110
        %v1287 = vpop.permute.xlu0 %1286
        %v1288 = vsel %vm1236, %v1273, %v1275
        %v1289 = vsel %vm1236, %v1275, %v1277
        %v1290 = vsel %vm1236, %v1277, %v1279
        %v1291 = vsel %vm1236, %v1281, %v1283
        %v1292 = vsel %vm1236, %v1283, %v1285
        %v1293 = vsel %vm1236, %v1285, %v1287
        %v1300 = vadd.f32 %v1249, %v1288
        %v1301 = vadd.f32 %v1250, %v1289
        %v1302 = vadd.f32 %v1251, %v1290
        %v1303 = vadd.f32 %v1252, %v1291
        %v1304 = vadd.f32 %v1253, %v1292
        %v1305 = vadd.f32 %v1254, %v1293
        %s1306 = sld [smem:[#allocation3 + $0x18]]
        %s1307 = sld [smem:[#allocation3 + $0x19]]
        %v1308 = vstv %s1306
        %v1309 = vmul.f32 %v1308, %v351
        %v1310 = vmul.f32 %v1308, %v352
        %v1311 = vmul.f32 %v1308, %v353
        %v1312 = vmul.f32 %v1308, %v354
        %v1313 = vmul.f32 %v1308, %v355
        %v1314 = vmul.f32 %v1308, %v356
        %v1315 = vmul.f32 %v1308, %v357
        %v1316 = vmul.f32 %v1308, %v358
        %v1317 = vmul.f32 %v1308, %v359
        %v1318 = vmul.f32 %v1308, %v360
        %v1319 = vmul.f32 %v1308, %v361
        %v1320 = vmul.f32 %v1308, %v362
        %1333 = vrot.lane.b32.xlu0 %v1309, 110
        %v1334 = vpop.permute.xlu0 %1333
        %1335 = vrot.lane.b32.xlu0 %v1310, 110
        %v1336 = vpop.permute.xlu0 %1335
        %1337 = vrot.lane.b32.xlu0 %v1311, 110
        %v1338 = vpop.permute.xlu0 %1337
        %1339 = vrot.lane.b32.xlu0 %v1312, 110
        %v1340 = vpop.permute.xlu0 %1339
        %1341 = vrot.lane.b32.xlu0 %v1313, 110
        %v1342 = vpop.permute.xlu0 %1341
        %1343 = vrot.lane.b32.xlu0 %v1314, 110
        %v1344 = vpop.permute.xlu0 %1343
        %1345 = vrot.lane.b32.xlu0 %v1315, 110
        %v1346 = vpop.permute.xlu0 %1345
        %1347 = vrot.lane.b32.xlu0 %v1316, 110
        %v1348 = vpop.permute.xlu0 %1347
        %1349 = vrot.lane.b32.xlu0 %v1317, 110
        %v1350 = vpop.permute.xlu0 %1349
        %1351 = vrot.lane.b32.xlu0 %v1318, 110
        %v1352 = vpop.permute.xlu0 %1351
        %1353 = vrot.lane.b32.xlu0 %v1319, 110
        %v1354 = vpop.permute.xlu0 %1353
        %1355 = vrot.lane.b32.xlu0 %v1320, 110
        %v1356 = vpop.permute.xlu0 %1355
        %v1357 = vsel %vm1236, %v1334, %v1336
        %v1358 = vsel %vm1236, %v1336, %v1338
        %v1359 = vsel %vm1236, %v1338, %v1340
        %v1360 = vsel %vm1236, %v1342, %v1344
        %v1361 = vsel %vm1236, %v1344, %v1346
        %v1362 = vsel %vm1236, %v1346, %v1348
        %v1363 = vsel %vm1236, %v1350, %v1352
        %v1364 = vsel %vm1236, %v1352, %v1354
        %v1365 = vsel %vm1236, %v1354, %v1356
        %v1375 = vadd.f32 %v1038, %v1357
        %v1376 = vadd.f32 %v1039, %v1358
        %v1377 = vadd.f32 %v1040, %v1359
        %v1378 = vadd.f32 %v1041, %v1360
        %v1379 = vadd.f32 %v1042, %v1361
        %v1380 = vadd.f32 %v1043, %v1362
        %v1381 = vadd.f32 %v1044, %v1363
        %v1382 = vadd.f32 %v1045, %v1364
        %v1383 = vadd.f32 %v1046, %v1365
        %v1384 = vstv %s1307
        %v1385 = vmul.f32 %v1384, %v363
        %v1386 = vmul.f32 %v1384, %v364
        %v1387 = vmul.f32 %v1384, %v365
        %v1388 = vmul.f32 %v1384, %v366
        %v1389 = vmul.f32 %v1384, %v367
        %v1390 = vmul.f32 %v1384, %v368
        %v1391 = vmul.f32 %v1384, %v369
        %v1392 = vmul.f32 %v1384, %v370
        %v1393 = vmul.f32 %v1384, %v371
        %v1394 = vmul.f32 %v1384, %v372
        %v1395 = vmul.f32 %v1384, %v373
        %v1396 = vmul.f32 %v1384, %v374
        %1409 = vrot.lane.b32.xlu0 %v1385, 110
        %v1410 = vpop.permute.xlu0 %1409
        %1411 = vrot.lane.b32.xlu0 %v1386, 110
        %v1412 = vpop.permute.xlu0 %1411
        %1413 = vrot.lane.b32.xlu0 %v1387, 110
        %v1414 = vpop.permute.xlu0 %1413
        %1415 = vrot.lane.b32.xlu0 %v1388, 110
        %v1416 = vpop.permute.xlu0 %1415
        %1417 = vrot.lane.b32.xlu0 %v1389, 110
        %v1418 = vpop.permute.xlu0 %1417
        %1419 = vrot.lane.b32.xlu0 %v1390, 110
        %v1420 = vpop.permute.xlu0 %1419
        %1421 = vrot.lane.b32.xlu0 %v1391, 110
        %v1422 = vpop.permute.xlu0 %1421
        %1423 = vrot.lane.b32.xlu0 %v1392, 110
        %v1424 = vpop.permute.xlu0 %1423
        %1425 = vrot.lane.b32.xlu0 %v1393, 110
        %v1426 = vpop.permute.xlu0 %1425
        %1427 = vrot.lane.b32.xlu0 %v1394, 110
        %v1428 = vpop.permute.xlu0 %1427
        %1429 = vrot.lane.b32.xlu0 %v1395, 110
        %v1430 = vpop.permute.xlu0 %1429
        %1431 = vrot.lane.b32.xlu0 %v1396, 110
        %v1432 = vpop.permute.xlu0 %1431
        %v1433 = vsel %vm1236, %v1410, %v1412
        %v1434 = vsel %vm1236, %v1412, %v1414
        %v1435 = vsel %vm1236, %v1414, %v1416
        %v1436 = vsel %vm1236, %v1418, %v1420
        %v1437 = vsel %vm1236, %v1420, %v1422
        %v1438 = vsel %vm1236, %v1422, %v1424
        %v1439 = vsel %vm1236, %v1426, %v1428
        %v1440 = vsel %vm1236, %v1428, %v1430
        %v1441 = vsel %vm1236, %v1430, %v1432
        %v1451 = vadd.f32 %v1375, %v1433
        %v1452 = vadd.f32 %v1376, %v1434
        %v1453 = vadd.f32 %v1377, %v1435
        %v1454 = vadd.f32 %v1378, %v1436
        %v1455 = vadd.f32 %v1379, %v1437
        %v1456 = vadd.f32 %v1380, %v1438
        %v1457 = vadd.f32 %v1381, %v1439
        %v1458 = vadd.f32 %v1382, %v1440
        %v1459 = vadd.f32 %v1383, %v1441
        %s1460 = sld [smem:[#allocation3 + $0x2a]]
        %s1461 = sld [smem:[#allocation3 + $0x2b]]
        %v1462 = vstv %s1460
        %v1463 = vmul.f32 %v1462, %v351
        %v1464 = vmul.f32 %v1462, %v352
        %v1465 = vmul.f32 %v1462, %v353
        %v1466 = vmul.f32 %v1462, %v354
        %v1467 = vmul.f32 %v1462, %v355
        %v1468 = vmul.f32 %v1462, %v356
        %v1469 = vmul.f32 %v1462, %v357
        %v1470 = vmul.f32 %v1462, %v358
        %v1471 = vmul.f32 %v1462, %v359
        %v1472 = vmul.f32 %v1462, %v360
        %v1473 = vmul.f32 %v1462, %v361
        %v1474 = vmul.f32 %v1462, %v362
        %1487 = vrot.lane.b32.xlu0 %v1463, 110
        %v1488 = vpop.permute.xlu0 %1487
        %1489 = vrot.lane.b32.xlu0 %v1464, 110
        %v1490 = vpop.permute.xlu0 %1489
        %1491 = vrot.lane.b32.xlu0 %v1465, 110
        %v1492 = vpop.permute.xlu0 %1491
        %1493 = vrot.lane.b32.xlu0 %v1466, 110
        %v1494 = vpop.permute.xlu0 %1493
        %1495 = vrot.lane.b32.xlu0 %v1467, 110
        %v1496 = vpop.permute.xlu0 %1495
        %1497 = vrot.lane.b32.xlu0 %v1468, 110
        %v1498 = vpop.permute.xlu0 %1497
        %1499 = vrot.lane.b32.xlu0 %v1469, 110
        %v1500 = vpop.permute.xlu0 %1499
        %1501 = vrot.lane.b32.xlu0 %v1470, 110
        %v1502 = vpop.permute.xlu0 %1501
        %1503 = vrot.lane.b32.xlu0 %v1471, 110
        %v1504 = vpop.permute.xlu0 %1503
        %1505 = vrot.lane.b32.xlu0 %v1472, 110
        %v1506 = vpop.permute.xlu0 %1505
        %1507 = vrot.lane.b32.xlu0 %v1473, 110
        %v1508 = vpop.permute.xlu0 %1507
        %1509 = vrot.lane.b32.xlu0 %v1474, 110
        %v1510 = vpop.permute.xlu0 %1509
        %v1511 = vsel %vm1236, %v1488, %v1490
        %v1512 = vsel %vm1236, %v1490, %v1492
        %v1513 = vsel %vm1236, %v1492, %v1494
        %v1514 = vsel %vm1236, %v1496, %v1498
        %v1515 = vsel %vm1236, %v1498, %v1500
        %v1516 = vsel %vm1236, %v1500, %v1502
        %v1517 = vsel %vm1236, %v1504, %v1506
        %v1518 = vsel %vm1236, %v1506, %v1508
        %v1519 = vsel %vm1236, %v1508, %v1510
        %v1529 = vadd.f32 %v1192, %v1511
        %v1530 = vadd.f32 %v1193, %v1512
        %v1531 = vadd.f32 %v1194, %v1513
        %v1532 = vadd.f32 %v1195, %v1514
        %v1533 = vadd.f32 %v1196, %v1515
        %v1534 = vadd.f32 %v1197, %v1516
        %v1535 = vadd.f32 %v1198, %v1517
        %v1536 = vadd.f32 %v1199, %v1518
        %v1537 = vadd.f32 %v1200, %v1519
        %v1538 = vstv %s1461
        %v1539 = vmul.f32 %v1538, %v363
        %v1540 = vmul.f32 %v1538, %v364
        %v1541 = vmul.f32 %v1538, %v365
        %v1542 = vmul.f32 %v1538, %v366
        %v1543 = vmul.f32 %v1538, %v367
        %v1544 = vmul.f32 %v1538, %v368
        %v1545 = vmul.f32 %v1538, %v369
        %v1546 = vmul.f32 %v1538, %v370
        %v1547 = vmul.f32 %v1538, %v371
        %v1548 = vmul.f32 %v1538, %v372
        %v1549 = vmul.f32 %v1538, %v373
        %v1550 = vmul.f32 %v1538, %v374
        %1563 = vrot.lane.b32.xlu0 %v1539, 110
        %v1564 = vpop.permute.xlu0 %1563
        %1565 = vrot.lane.b32.xlu0 %v1540, 110
        %v1566 = vpop.permute.xlu0 %1565
        %1567 = vrot.lane.b32.xlu0 %v1541, 110
        %v1568 = vpop.permute.xlu0 %1567
        %1569 = vrot.lane.b32.xlu0 %v1542, 110
        %v1570 = vpop.permute.xlu0 %1569
        %1571 = vrot.lane.b32.xlu0 %v1543, 110
        %v1572 = vpop.permute.xlu0 %1571
        %1573 = vrot.lane.b32.xlu0 %v1544, 110
        %v1574 = vpop.permute.xlu0 %1573
        %1575 = vrot.lane.b32.xlu0 %v1545, 110
        %v1576 = vpop.permute.xlu0 %1575
        %1577 = vrot.lane.b32.xlu0 %v1546, 110
        %v1578 = vpop.permute.xlu0 %1577
        %1579 = vrot.lane.b32.xlu0 %v1547, 110
        %v1580 = vpop.permute.xlu0 %1579
        %1581 = vrot.lane.b32.xlu0 %v1548, 110
        %v1582 = vpop.permute.xlu0 %1581
        %1583 = vrot.lane.b32.xlu0 %v1549, 110
        %v1584 = vpop.permute.xlu0 %1583
        %1585 = vrot.lane.b32.xlu0 %v1550, 110
        %v1586 = vpop.permute.xlu0 %1585
        %v1587 = vsel %vm1236, %v1564, %v1566
        %v1588 = vsel %vm1236, %v1566, %v1568
        %v1589 = vsel %vm1236, %v1568, %v1570
        %v1590 = vsel %vm1236, %v1572, %v1574
        %v1591 = vsel %vm1236, %v1574, %v1576
        %v1592 = vsel %vm1236, %v1576, %v1578
        %v1593 = vsel %vm1236, %v1580, %v1582
        %v1594 = vsel %vm1236, %v1582, %v1584
        %v1595 = vsel %vm1236, %v1584, %v1586
        %v1605 = vadd.f32 %v1529, %v1587
        %v1606 = vadd.f32 %v1530, %v1588
        %v1607 = vadd.f32 %v1531, %v1589
        %v1608 = vadd.f32 %v1532, %v1590
        %v1609 = vadd.f32 %v1533, %v1591
        %v1610 = vadd.f32 %v1534, %v1592
        %v1611 = vadd.f32 %v1535, %v1593
        %v1612 = vadd.f32 %v1536, %v1594
        %v1613 = vadd.f32 %v1537, %v1595
        %s1614 = sld [smem:[#allocation3 + $0x8]]
        %s1615 = sld [smem:[#allocation3 + $0x9]]
        %v1616 = vstv %s1614
        %v1617 = vmul.f32 %v1616, %v351
        %v1618 = vmul.f32 %v1616, %v352
        %v1619 = vmul.f32 %v1616, %v353
        %v1620 = vmul.f32 %v1616, %v354
        %v1621 = vmul.f32 %v1616, %v355
        %v1622 = vmul.f32 %v1616, %v356
        %v1623 = vmul.f32 %v1616, %v357
        %v1624 = vmul.f32 %v1616, %v358
        %1633 = vrot.lane.b32.xlu0 %v1617, 109
        %v1634 = vpop.permute.xlu0 %1633
        %1635 = vrot.lane.b32.xlu0 %v1618, 109
        %v1636 = vpop.permute.xlu0 %1635
        %1637 = vrot.lane.b32.xlu0 %v1619, 109
        %v1638 = vpop.permute.xlu0 %1637
        %1639 = vrot.lane.b32.xlu0 %v1620, 109
        %v1640 = vpop.permute.xlu0 %1639
        %1641 = vrot.lane.b32.xlu0 %v1621, 109
        %v1642 = vpop.permute.xlu0 %1641
        %1643 = vrot.lane.b32.xlu0 %v1622, 109
        %v1644 = vpop.permute.xlu0 %1643
        %1645 = vrot.lane.b32.xlu0 %v1623, 109
        %v1646 = vpop.permute.xlu0 %1645
        %1647 = vrot.lane.b32.xlu0 %v1624, 109
        %v1648 = vpop.permute.xlu0 %1647
        %vm1649 = vcmask 891904
        %v1650 = vsel %vm1649, %v1634, %v1636
        %v1651 = vsel %vm1649, %v1636, %v1638
        %v1652 = vsel %vm1649, %v1638, %v1640
        %v1653 = vsel %vm1649, %v1642, %v1644
        %v1654 = vsel %vm1649, %v1644, %v1646
        %v1655 = vsel %vm1649, %v1646, %v1648
        %v1662 = vadd.f32 %v1300, %v1650
        %v1663 = vadd.f32 %v1301, %v1651
        %v1664 = vadd.f32 %v1302, %v1652
        %v1665 = vadd.f32 %v1303, %v1653
        %v1666 = vadd.f32 %v1304, %v1654
        %v1667 = vadd.f32 %v1305, %v1655
        %v1668 = vstv %s1615
        %v1669 = vmul.f32 %v1668, %v363
        %v1670 = vmul.f32 %v1668, %v364
        %v1671 = vmul.f32 %v1668, %v365
        %v1672 = vmul.f32 %v1668, %v366
        %v1673 = vmul.f32 %v1668, %v367
        %v1674 = vmul.f32 %v1668, %v368
        %v1675 = vmul.f32 %v1668, %v369
        %v1676 = vmul.f32 %v1668, %v370
        %1685 = vrot.lane.b32.xlu0 %v1669, 109
        %v1686 = vpop.permute.xlu0 %1685
        %1687 = vrot.lane.b32.xlu0 %v1670, 109
        %v1688 = vpop.permute.xlu0 %1687
        %1689 = vrot.lane.b32.xlu0 %v1671, 109
        %v1690 = vpop.permute.xlu0 %1689
        %1691 = vrot.lane.b32.xlu0 %v1672, 109
        %v1692 = vpop.permute.xlu0 %1691
        %1693 = vrot.lane.b32.xlu0 %v1673, 109
        %v1694 = vpop.permute.xlu0 %1693
        %1695 = vrot.lane.b32.xlu0 %v1674, 109
        %v1696 = vpop.permute.xlu0 %1695
        %1697 = vrot.lane.b32.xlu0 %v1675, 109
        %v1698 = vpop.permute.xlu0 %1697
        %1699 = vrot.lane.b32.xlu0 %v1676, 109
        %v1700 = vpop.permute.xlu0 %1699
        %v1701 = vsel %vm1649, %v1686, %v1688
        %v1702 = vsel %vm1649, %v1688, %v1690
        %v1703 = vsel %vm1649, %v1690, %v1692
        %v1704 = vsel %vm1649, %v1694, %v1696
        %v1705 = vsel %vm1649, %v1696, %v1698
        %v1706 = vsel %vm1649, %v1698, %v1700
        %v1713 = vadd.f32 %v1662, %v1701
        %v1714 = vadd.f32 %v1663, %v1702
        %v1715 = vadd.f32 %v1664, %v1703
        %v1716 = vadd.f32 %v1665, %v1704
        %v1717 = vadd.f32 %v1666, %v1705
        %v1718 = vadd.f32 %v1667, %v1706
        %s1719 = sld [smem:[#allocation3 + $0x1a]]
        %s1720 = sld [smem:[#allocation3 + $0x1b]]
        %v1721 = vstv %s1719
        %v1722 = vmul.f32 %v1721, %v351
        %v1723 = vmul.f32 %v1721, %v352
        %v1724 = vmul.f32 %v1721, %v353
        %v1725 = vmul.f32 %v1721, %v354
        %v1726 = vmul.f32 %v1721, %v355
        %v1727 = vmul.f32 %v1721, %v356
        %v1728 = vmul.f32 %v1721, %v357
        %v1729 = vmul.f32 %v1721, %v358
        %v1730 = vmul.f32 %v1721, %v359
        %v1731 = vmul.f32 %v1721, %v360
        %v1732 = vmul.f32 %v1721, %v361
        %v1733 = vmul.f32 %v1721, %v362
        %1746 = vrot.lane.b32.xlu0 %v1722, 109
        %v1747 = vpop.permute.xlu0 %1746
        %1748 = vrot.lane.b32.xlu0 %v1723, 109
        %v1749 = vpop.permute.xlu0 %1748
        %1750 = vrot.lane.b32.xlu0 %v1724, 109
        %v1751 = vpop.permute.xlu0 %1750
        %1752 = vrot.lane.b32.xlu0 %v1725, 109
        %v1753 = vpop.permute.xlu0 %1752
        %1754 = vrot.lane.b32.xlu0 %v1726, 109
        %v1755 = vpop.permute.xlu0 %1754
        %1756 = vrot.lane.b32.xlu0 %v1727, 109
        %v1757 = vpop.permute.xlu0 %1756
        %1758 = vrot.lane.b32.xlu0 %v1728, 109
        %v1759 = vpop.permute.xlu0 %1758
        %1760 = vrot.lane.b32.xlu0 %v1729, 109
        %v1761 = vpop.permute.xlu0 %1760
        %1762 = vrot.lane.b32.xlu0 %v1730, 109
        %v1763 = vpop.permute.xlu0 %1762
        %1764 = vrot.lane.b32.xlu0 %v1731, 109
        %v1765 = vpop.permute.xlu0 %1764
        %1766 = vrot.lane.b32.xlu0 %v1732, 109
        %v1767 = vpop.permute.xlu0 %1766
        %1768 = vrot.lane.b32.xlu0 %v1733, 109
        %v1769 = vpop.permute.xlu0 %1768
        %v1770 = vsel %vm1649, %v1747, %v1749
        %v1771 = vsel %vm1649, %v1749, %v1751
        %v1772 = vsel %vm1649, %v1751, %v1753
        %v1773 = vsel %vm1649, %v1755, %v1757
        %v1774 = vsel %vm1649, %v1757, %v1759
        %v1775 = vsel %vm1649, %v1759, %v1761
        %v1776 = vsel %vm1649, %v1763, %v1765
        %v1777 = vsel %vm1649, %v1765, %v1767
        %v1778 = vsel %vm1649, %v1767, %v1769
        %v1788 = vadd.f32 %v1451, %v1770
        %v1789 = vadd.f32 %v1452, %v1771
        %v1790 = vadd.f32 %v1453, %v1772
        %v1791 = vadd.f32 %v1454, %v1773
        %v1792 = vadd.f32 %v1455, %v1774
        %v1793 = vadd.f32 %v1456, %v1775
        %v1794 = vadd.f32 %v1457, %v1776
        %v1795 = vadd.f32 %v1458, %v1777
        %v1796 = vadd.f32 %v1459, %v1778
        %v1797 = vstv %s1720
        %v1798 = vmul.f32 %v1797, %v363
        %v1799 = vmul.f32 %v1797, %v364
        %v1800 = vmul.f32 %v1797, %v365
        %v1801 = vmul.f32 %v1797, %v366
        %v1802 = vmul.f32 %v1797, %v367
        %v1803 = vmul.f32 %v1797, %v368
        %v1804 = vmul.f32 %v1797, %v369
        %v1805 = vmul.f32 %v1797, %v370
        %v1806 = vmul.f32 %v1797, %v371
        %v1807 = vmul.f32 %v1797, %v372
        %v1808 = vmul.f32 %v1797, %v373
        %v1809 = vmul.f32 %v1797, %v374
        %1822 = vrot.lane.b32.xlu0 %v1798, 109
        %v1823 = vpop.permute.xlu0 %1822
        %1824 = vrot.lane.b32.xlu0 %v1799, 109
        %v1825 = vpop.permute.xlu0 %1824
        %1826 = vrot.lane.b32.xlu0 %v1800, 109
        %v1827 = vpop.permute.xlu0 %1826
        %1828 = vrot.lane.b32.xlu0 %v1801, 109
        %v1829 = vpop.permute.xlu0 %1828
        %1830 = vrot.lane.b32.xlu0 %v1802, 109
        %v1831 = vpop.permute.xlu0 %1830
        %1832 = vrot.lane.b32.xlu0 %v1803, 109
        %v1833 = vpop.permute.xlu0 %1832
        %1834 = vrot.lane.b32.xlu0 %v1804, 109
        %v1835 = vpop.permute.xlu0 %1834
        %1836 = vrot.lane.b32.xlu0 %v1805, 109
        %v1837 = vpop.permute.xlu0 %1836
        %1838 = vrot.lane.b32.xlu0 %v1806, 109
        %v1839 = vpop.permute.xlu0 %1838
        %1840 = vrot.lane.b32.xlu0 %v1807, 109
        %v1841 = vpop.permute.xlu0 %1840
        %1842 = vrot.lane.b32.xlu0 %v1808, 109
        %v1843 = vpop.permute.xlu0 %1842
        %1844 = vrot.lane.b32.xlu0 %v1809, 109
        %v1845 = vpop.permute.xlu0 %1844
        %v1846 = vsel %vm1649, %v1823, %v1825
        %v1847 = vsel %vm1649, %v1825, %v1827
        %v1848 = vsel %vm1649, %v1827, %v1829
        %v1849 = vsel %vm1649, %v1831, %v1833
        %v1850 = vsel %vm1649, %v1833, %v1835
        %v1851 = vsel %vm1649, %v1835, %v1837
        %v1852 = vsel %vm1649, %v1839, %v1841
        %v1853 = vsel %vm1649, %v1841, %v1843
        %v1854 = vsel %vm1649, %v1843, %v1845
        %v1864 = vadd.f32 %v1788, %v1846
        %v1865 = vadd.f32 %v1789, %v1847
        %v1866 = vadd.f32 %v1790, %v1848
        %v1867 = vadd.f32 %v1791, %v1849
        %v1868 = vadd.f32 %v1792, %v1850
        %v1869 = vadd.f32 %v1793, %v1851
        %v1870 = vadd.f32 %v1794, %v1852
        %v1871 = vadd.f32 %v1795, %v1853
        %v1872 = vadd.f32 %v1796, %v1854
        %s1873 = sld [smem:[#allocation3 + $0x2c]]
        %s1874 = sld [smem:[#allocation3 + $0x2d]]
        %v1875 = vstv %s1873
        %v1876 = vmul.f32 %v1875, %v351
        %v1877 = vmul.f32 %v1875, %v352
        %v1878 = vmul.f32 %v1875, %v353
        %v1879 = vmul.f32 %v1875, %v354
        %v1880 = vmul.f32 %v1875, %v355
        %v1881 = vmul.f32 %v1875, %v356
        %v1882 = vmul.f32 %v1875, %v357
        %v1883 = vmul.f32 %v1875, %v358
        %v1884 = vmul.f32 %v1875, %v359
        %v1885 = vmul.f32 %v1875, %v360
        %v1886 = vmul.f32 %v1875, %v361
        %v1887 = vmul.f32 %v1875, %v362
        %1900 = vrot.lane.b32.xlu0 %v1876, 109
        %v1901 = vpop.permute.xlu0 %1900
        %1902 = vrot.lane.b32.xlu0 %v1877, 109
        %v1903 = vpop.permute.xlu0 %1902
        %1904 = vrot.lane.b32.xlu0 %v1878, 109
        %v1905 = vpop.permute.xlu0 %1904
        %1906 = vrot.lane.b32.xlu0 %v1879, 109
        %v1907 = vpop.permute.xlu0 %1906
        %1908 = vrot.lane.b32.xlu0 %v1880, 109
        %v1909 = vpop.permute.xlu0 %1908
        %1910 = vrot.lane.b32.xlu0 %v1881, 109
        %v1911 = vpop.permute.xlu0 %1910
        %1912 = vrot.lane.b32.xlu0 %v1882, 109
        %v1913 = vpop.permute.xlu0 %1912
        %1914 = vrot.lane.b32.xlu0 %v1883, 109
        %v1915 = vpop.permute.xlu0 %1914
        %1916 = vrot.lane.b32.xlu0 %v1884, 109
        %v1917 = vpop.permute.xlu0 %1916
        %1918 = vrot.lane.b32.xlu0 %v1885, 109
        %v1919 = vpop.permute.xlu0 %1918
        %1920 = vrot.lane.b32.xlu0 %v1886, 109
        %v1921 = vpop.permute.xlu0 %1920
        %1922 = vrot.lane.b32.xlu0 %v1887, 109
        %v1923 = vpop.permute.xlu0 %1922
        %v1924 = vsel %vm1649, %v1901, %v1903
        %v1925 = vsel %vm1649, %v1903, %v1905
        %v1926 = vsel %vm1649, %v1905, %v1907
        %v1927 = vsel %vm1649, %v1909, %v1911
        %v1928 = vsel %vm1649, %v1911, %v1913
        %v1929 = vsel %vm1649, %v1913, %v1915
        %v1930 = vsel %vm1649, %v1917, %v1919
        %v1931 = vsel %vm1649, %v1919, %v1921
        %v1932 = vsel %vm1649, %v1921, %v1923
        %v1942 = vadd.f32 %v1605, %v1924
        %v1943 = vadd.f32 %v1606, %v1925
        %v1944 = vadd.f32 %v1607, %v1926
        %v1945 = vadd.f32 %v1608, %v1927
        %v1946 = vadd.f32 %v1609, %v1928
        %v1947 = vadd.f32 %v1610, %v1929
        %v1948 = vadd.f32 %v1611, %v1930
        %v1949 = vadd.f32 %v1612, %v1931
        %v1950 = vadd.f32 %v1613, %v1932
        %v1951 = vstv %s1874
        %v1952 = vmul.f32 %v1951, %v363
        %v1953 = vmul.f32 %v1951, %v364
        %v1954 = vmul.f32 %v1951, %v365
        %v1955 = vmul.f32 %v1951, %v366
        %v1956 = vmul.f32 %v1951, %v367
        %v1957 = vmul.f32 %v1951, %v368
        %v1958 = vmul.f32 %v1951, %v369
        %v1959 = vmul.f32 %v1951, %v370
        %v1960 = vmul.f32 %v1951, %v371
        %v1961 = vmul.f32 %v1951, %v372
        %v1962 = vmul.f32 %v1951, %v373
        %v1963 = vmul.f32 %v1951, %v374
        %1976 = vrot.lane.b32.xlu0 %v1952, 109
        %v1977 = vpop.permute.xlu0 %1976
        %1978 = vrot.lane.b32.xlu0 %v1953, 109
        %v1979 = vpop.permute.xlu0 %1978
        %1980 = vrot.lane.b32.xlu0 %v1954, 109
        %v1981 = vpop.permute.xlu0 %1980
        %1982 = vrot.lane.b32.xlu0 %v1955, 109
        %v1983 = vpop.permute.xlu0 %1982
        %1984 = vrot.lane.b32.xlu0 %v1956, 109
        %v1985 = vpop.permute.xlu0 %1984
        %1986 = vrot.lane.b32.xlu0 %v1957, 109
        %v1987 = vpop.permute.xlu0 %1986
        %1988 = vrot.lane.b32.xlu0 %v1958, 109
        %v1989 = vpop.permute.xlu0 %1988
        %1990 = vrot.lane.b32.xlu0 %v1959, 109
        %v1991 = vpop.permute.xlu0 %1990
        %1992 = vrot.lane.b32.xlu0 %v1960, 109
        %v1993 = vpop.permute.xlu0 %1992
        %1994 = vrot.lane.b32.xlu0 %v1961, 109
        %v1995 = vpop.permute.xlu0 %1994
        %1996 = vrot.lane.b32.xlu0 %v1962, 109
        %v1997 = vpop.permute.xlu0 %1996
        %1998 = vrot.lane.b32.xlu0 %v1963, 109
        %v1999 = vpop.permute.xlu0 %1998
        %v2000 = vsel %vm1649, %v1977, %v1979
        %v2001 = vsel %vm1649, %v1979, %v1981
        %v2002 = vsel %vm1649, %v1981, %v1983
        %v2003 = vsel %vm1649, %v1985, %v1987
        %v2004 = vsel %vm1649, %v1987, %v1989
        %v2005 = vsel %vm1649, %v1989, %v1991
        %v2006 = vsel %vm1649, %v1993, %v1995
        %v2007 = vsel %vm1649, %v1995, %v1997
        %v2008 = vsel %vm1649, %v1997, %v1999
        %v2018 = vadd.f32 %v1942, %v2000
        %v2019 = vadd.f32 %v1943, %v2001
        %v2020 = vadd.f32 %v1944, %v2002
        %v2021 = vadd.f32 %v1945, %v2003
        %v2022 = vadd.f32 %v1946, %v2004
        %v2023 = vadd.f32 %v1947, %v2005
        %v2024 = vadd.f32 %v1948, %v2006
        %v2025 = vadd.f32 %v1949, %v2007
        %v2026 = vadd.f32 %v1950, %v2008
        %s2027 = sld [smem:[#allocation3 + $0xa]]
        %s2028 = sld [smem:[#allocation3 + $0xb]]
        %v2029 = vstv %s2027
        %v2030 = vmul.f32 %v2029, %v351
        %v2031 = vmul.f32 %v2029, %v352
        %v2032 = vmul.f32 %v2029, %v353
        %v2033 = vmul.f32 %v2029, %v354
        %v2034 = vmul.f32 %v2029, %v355
        %v2035 = vmul.f32 %v2029, %v356
        %v2036 = vmul.f32 %v2029, %v357
        %v2037 = vmul.f32 %v2029, %v358
        %2046 = vrot.lane.b32.xlu0 %v2030, 108
        %v2047 = vpop.permute.xlu0 %2046
        %2048 = vrot.lane.b32.xlu0 %v2031, 108
        %v2049 = vpop.permute.xlu0 %2048
        %2050 = vrot.lane.b32.xlu0 %v2032, 108
        %v2051 = vpop.permute.xlu0 %2050
        %2052 = vrot.lane.b32.xlu0 %v2033, 108
        %v2053 = vpop.permute.xlu0 %2052
        %2054 = vrot.lane.b32.xlu0 %v2034, 108
        %v2055 = vpop.permute.xlu0 %2054
        %2056 = vrot.lane.b32.xlu0 %v2035, 108
        %v2057 = vpop.permute.xlu0 %2056
        %2058 = vrot.lane.b32.xlu0 %v2036, 108
        %v2059 = vpop.permute.xlu0 %2058
        %2060 = vrot.lane.b32.xlu0 %v2037, 108
        %v2061 = vpop.permute.xlu0 %2060
        %vm2062 = vcmask 883712
        %v2063 = vsel %vm2062, %v2047, %v2049
        %v2064 = vsel %vm2062, %v2049, %v2051
        %v2065 = vsel %vm2062, %v2051, %v2053
        %v2066 = vsel %vm2062, %v2055, %v2057
        %v2067 = vsel %vm2062, %v2057, %v2059
        %v2068 = vsel %vm2062, %v2059, %v2061
        %v2075 = vadd.f32 %v1713, %v2063
        %v2076 = vadd.f32 %v1714, %v2064
        %v2077 = vadd.f32 %v1715, %v2065
        %v2078 = vadd.f32 %v1716, %v2066
        %v2079 = vadd.f32 %v1717, %v2067
        %v2080 = vadd.f32 %v1718, %v2068
        %v2081 = vstv %s2028
        %v2082 = vmul.f32 %v2081, %v363
        %v2083 = vmul.f32 %v2081, %v364
        %v2084 = vmul.f32 %v2081, %v365
        %v2085 = vmul.f32 %v2081, %v366
        %v2086 = vmul.f32 %v2081, %v367
        %v2087 = vmul.f32 %v2081, %v368
        %v2088 = vmul.f32 %v2081, %v369
        %v2089 = vmul.f32 %v2081, %v370
        %2098 = vrot.lane.b32.xlu0 %v2082, 108
        %v2099 = vpop.permute.xlu0 %2098
        %2100 = vrot.lane.b32.xlu0 %v2083, 108
        %v2101 = vpop.permute.xlu0 %2100
        %2102 = vrot.lane.b32.xlu0 %v2084, 108
        %v2103 = vpop.permute.xlu0 %2102
        %2104 = vrot.lane.b32.xlu0 %v2085, 108
        %v2105 = vpop.permute.xlu0 %2104
        %2106 = vrot.lane.b32.xlu0 %v2086, 108
        %v2107 = vpop.permute.xlu0 %2106
        %2108 = vrot.lane.b32.xlu0 %v2087, 108
        %v2109 = vpop.permute.xlu0 %2108
        %2110 = vrot.lane.b32.xlu0 %v2088, 108
        %v2111 = vpop.permute.xlu0 %2110
        %2112 = vrot.lane.b32.xlu0 %v2089, 108
        %v2113 = vpop.permute.xlu0 %2112
        %v2114 = vsel %vm2062, %v2099, %v2101
        %v2115 = vsel %vm2062, %v2101, %v2103
        %v2116 = vsel %vm2062, %v2103, %v2105
        %v2117 = vsel %vm2062, %v2107, %v2109
        %v2118 = vsel %vm2062, %v2109, %v2111
        %v2119 = vsel %vm2062, %v2111, %v2113
        %v2126 = vadd.f32 %v2075, %v2114
        %v2127 = vadd.f32 %v2076, %v2115
        %v2128 = vadd.f32 %v2077, %v2116
        %v2129 = vadd.f32 %v2078, %v2117
        %v2130 = vadd.f32 %v2079, %v2118
        %v2131 = vadd.f32 %v2080, %v2119
        %s2132 = sld [smem:[#allocation3 + $0x1c]]
        %s2133 = sld [smem:[#allocation3 + $0x1d]]
        %v2134 = vstv %s2132
        %v2135 = vmul.f32 %v2134, %v351
        %v2136 = vmul.f32 %v2134, %v352
        %v2137 = vmul.f32 %v2134, %v353
        %v2138 = vmul.f32 %v2134, %v354
        %v2139 = vmul.f32 %v2134, %v355
        %v2140 = vmul.f32 %v2134, %v356
        %v2141 = vmul.f32 %v2134, %v357
        %v2142 = vmul.f32 %v2134, %v358
        %v2143 = vmul.f32 %v2134, %v359
        %v2144 = vmul.f32 %v2134, %v360
        %v2145 = vmul.f32 %v2134, %v361
        %v2146 = vmul.f32 %v2134, %v362
        %2159 = vrot.lane.b32.xlu0 %v2135, 108
        %v2160 = vpop.permute.xlu0 %2159
        %2161 = vrot.lane.b32.xlu0 %v2136, 108
        %v2162 = vpop.permute.xlu0 %2161
        %2163 = vrot.lane.b32.xlu0 %v2137, 108
        %v2164 = vpop.permute.xlu0 %2163
        %2165 = vrot.lane.b32.xlu0 %v2138, 108
        %v2166 = vpop.permute.xlu0 %2165
        %2167 = vrot.lane.b32.xlu0 %v2139, 108
        %v2168 = vpop.permute.xlu0 %2167
        %2169 = vrot.lane.b32.xlu0 %v2140, 108
        %v2170 = vpop.permute.xlu0 %2169
        %2171 = vrot.lane.b32.xlu0 %v2141, 108
        %v2172 = vpop.permute.xlu0 %2171
        %2173 = vrot.lane.b32.xlu0 %v2142, 108
        %v2174 = vpop.permute.xlu0 %2173
        %2175 = vrot.lane.b32.xlu0 %v2143, 108
        %v2176 = vpop.permute.xlu0 %2175
        %2177 = vrot.lane.b32.xlu0 %v2144, 108
        %v2178 = vpop.permute.xlu0 %2177
        %2179 = vrot.lane.b32.xlu0 %v2145, 108
        %v2180 = vpop.permute.xlu0 %2179
        %2181 = vrot.lane.b32.xlu0 %v2146, 108
        %v2182 = vpop.permute.xlu0 %2181
        %v2183 = vsel %vm2062, %v2160, %v2162
        %v2184 = vsel %vm2062, %v2162, %v2164
        %v2185 = vsel %vm2062, %v2164, %v2166
        %v2186 = vsel %vm2062, %v2168, %v2170
        %v2187 = vsel %vm2062, %v2170, %v2172
        %v2188 = vsel %vm2062, %v2172, %v2174
        %v2189 = vsel %vm2062, %v2176, %v2178
        %v2190 = vsel %vm2062, %v2178, %v2180
        %v2191 = vsel %vm2062, %v2180, %v2182
        %v2201 = vadd.f32 %v1864, %v2183
        %v2202 = vadd.f32 %v1865, %v2184
        %v2203 = vadd.f32 %v1866, %v2185
        %v2204 = vadd.f32 %v1867, %v2186
        %v2205 = vadd.f32 %v1868, %v2187
        %v2206 = vadd.f32 %v1869, %v2188
        %v2207 = vadd.f32 %v1870, %v2189
        %v2208 = vadd.f32 %v1871, %v2190
        %v2209 = vadd.f32 %v1872, %v2191
        %v2210 = vstv %s2133
        %v2211 = vmul.f32 %v2210, %v363
        %v2212 = vmul.f32 %v2210, %v364
        %v2213 = vmul.f32 %v2210, %v365
        %v2214 = vmul.f32 %v2210, %v366
        %v2215 = vmul.f32 %v2210, %v367
        %v2216 = vmul.f32 %v2210, %v368
        %v2217 = vmul.f32 %v2210, %v369
        %v2218 = vmul.f32 %v2210, %v370
        %v2219 = vmul.f32 %v2210, %v371
        %v2220 = vmul.f32 %v2210, %v372
        %v2221 = vmul.f32 %v2210, %v373
        %v2222 = vmul.f32 %v2210, %v374
        %2235 = vrot.lane.b32.xlu0 %v2211, 108
        %v2236 = vpop.permute.xlu0 %2235
        %2237 = vrot.lane.b32.xlu0 %v2212, 108
        %v2238 = vpop.permute.xlu0 %2237
        %2239 = vrot.lane.b32.xlu0 %v2213, 108
        %v2240 = vpop.permute.xlu0 %2239
        %2241 = vrot.lane.b32.xlu0 %v2214, 108
        %v2242 = vpop.permute.xlu0 %2241
        %2243 = vrot.lane.b32.xlu0 %v2215, 108
        %v2244 = vpop.permute.xlu0 %2243
        %2245 = vrot.lane.b32.xlu0 %v2216, 108
        %v2246 = vpop.permute.xlu0 %2245
        %2247 = vrot.lane.b32.xlu0 %v2217, 108
        %v2248 = vpop.permute.xlu0 %2247
        %2249 = vrot.lane.b32.xlu0 %v2218, 108
        %v2250 = vpop.permute.xlu0 %2249
        %2251 = vrot.lane.b32.xlu0 %v2219, 108
        %v2252 = vpop.permute.xlu0 %2251
        %2253 = vrot.lane.b32.xlu0 %v2220, 108
        %v2254 = vpop.permute.xlu0 %2253
        %2255 = vrot.lane.b32.xlu0 %v2221, 108
        %v2256 = vpop.permute.xlu0 %2255
        %2257 = vrot.lane.b32.xlu0 %v2222, 108
        %v2258 = vpop.permute.xlu0 %2257
        %v2259 = vsel %vm2062, %v2236, %v2238
        %v2260 = vsel %vm2062, %v2238, %v2240
        %v2261 = vsel %vm2062, %v2240, %v2242
        %v2262 = vsel %vm2062, %v2244, %v2246
        %v2263 = vsel %vm2062, %v2246, %v2248
        %v2264 = vsel %vm2062, %v2248, %v2250
        %v2265 = vsel %vm2062, %v2252, %v2254
        %v2266 = vsel %vm2062, %v2254, %v2256
        %v2267 = vsel %vm2062, %v2256, %v2258
        %v2277 = vadd.f32 %v2201, %v2259
        %v2278 = vadd.f32 %v2202, %v2260
        %v2279 = vadd.f32 %v2203, %v2261
        %v2280 = vadd.f32 %v2204, %v2262
        %v2281 = vadd.f32 %v2205, %v2263
        %v2282 = vadd.f32 %v2206, %v2264
        %v2283 = vadd.f32 %v2207, %v2265
        %v2284 = vadd.f32 %v2208, %v2266
        %v2285 = vadd.f32 %v2209, %v2267
        %s2286 = sld [smem:[#allocation3 + $0x2e]]
        %s2287 = sld [smem:[#allocation3 + $0x2f]]
        %v2288 = vstv %s2286
        %v2289 = vmul.f32 %v2288, %v351
        %v2290 = vmul.f32 %v2288, %v352
        %v2291 = vmul.f32 %v2288, %v353
        %v2292 = vmul.f32 %v2288, %v354
        %v2293 = vmul.f32 %v2288, %v355
        %v2294 = vmul.f32 %v2288, %v356
        %v2295 = vmul.f32 %v2288, %v357
        %v2296 = vmul.f32 %v2288, %v358
        %v2297 = vmul.f32 %v2288, %v359
        %v2298 = vmul.f32 %v2288, %v360
        %v2299 = vmul.f32 %v2288, %v361
        %v2300 = vmul.f32 %v2288, %v362
        %2313 = vrot.lane.b32.xlu0 %v2289, 108
        %v2314 = vpop.permute.xlu0 %2313
        %2315 = vrot.lane.b32.xlu0 %v2290, 108
        %v2316 = vpop.permute.xlu0 %2315
        %2317 = vrot.lane.b32.xlu0 %v2291, 108
        %v2318 = vpop.permute.xlu0 %2317
        %2319 = vrot.lane.b32.xlu0 %v2292, 108
        %v2320 = vpop.permute.xlu0 %2319
        %2321 = vrot.lane.b32.xlu0 %v2293, 108
        %v2322 = vpop.permute.xlu0 %2321
        %2323 = vrot.lane.b32.xlu0 %v2294, 108
        %v2324 = vpop.permute.xlu0 %2323
        %2325 = vrot.lane.b32.xlu0 %v2295, 108
        %v2326 = vpop.permute.xlu0 %2325
        %2327 = vrot.lane.b32.xlu0 %v2296, 108
        %v2328 = vpop.permute.xlu0 %2327
        %2329 = vrot.lane.b32.xlu0 %v2297, 108
        %v2330 = vpop.permute.xlu0 %2329
        %2331 = vrot.lane.b32.xlu0 %v2298, 108
        %v2332 = vpop.permute.xlu0 %2331
        %2333 = vrot.lane.b32.xlu0 %v2299, 108
        %v2334 = vpop.permute.xlu0 %2333
        %2335 = vrot.lane.b32.xlu0 %v2300, 108
        %v2336 = vpop.permute.xlu0 %2335
        %v2337 = vsel %vm2062, %v2314, %v2316
        %v2338 = vsel %vm2062, %v2316, %v2318
        %v2339 = vsel %vm2062, %v2318, %v2320
        %v2340 = vsel %vm2062, %v2322, %v2324
        %v2341 = vsel %vm2062, %v2324, %v2326
        %v2342 = vsel %vm2062, %v2326, %v2328
        %v2343 = vsel %vm2062, %v2330, %v2332
        %v2344 = vsel %vm2062, %v2332, %v2334
        %v2345 = vsel %vm2062, %v2334, %v2336
        %v2355 = vadd.f32 %v2018, %v2337
        %v2356 = vadd.f32 %v2019, %v2338
        %v2357 = vadd.f32 %v2020, %v2339
        %v2358 = vadd.f32 %v2021, %v2340
        %v2359 = vadd.f32 %v2022, %v2341
        %v2360 = vadd.f32 %v2023, %v2342
        %v2361 = vadd.f32 %v2024, %v2343
        %v2362 = vadd.f32 %v2025, %v2344
        %v2363 = vadd.f32 %v2026, %v2345
        %v2364 = vstv %s2287
        %v2365 = vmul.f32 %v2364, %v363
        %v2366 = vmul.f32 %v2364, %v364
        %v2367 = vmul.f32 %v2364, %v365
        %v2368 = vmul.f32 %v2364, %v366
        %v2369 = vmul.f32 %v2364, %v367
        %v2370 = vmul.f32 %v2364, %v368
        %v2371 = vmul.f32 %v2364, %v369
        %v2372 = vmul.f32 %v2364, %v370
        %v2373 = vmul.f32 %v2364, %v371
        %v2374 = vmul.f32 %v2364, %v372
        %v2375 = vmul.f32 %v2364, %v373
        %v2376 = vmul.f32 %v2364, %v374
        %2389 = vrot.lane.b32.xlu0 %v2365, 108
        %v2390 = vpop.permute.xlu0 %2389
        %2391 = vrot.lane.b32.xlu0 %v2366, 108
        %v2392 = vpop.permute.xlu0 %2391
        %2393 = vrot.lane.b32.xlu0 %v2367, 108
        %v2394 = vpop.permute.xlu0 %2393
        %2395 = vrot.lane.b32.xlu0 %v2368, 108
        %v2396 = vpop.permute.xlu0 %2395
        %2397 = vrot.lane.b32.xlu0 %v2369, 108
        %v2398 = vpop.permute.xlu0 %2397
        %2399 = vrot.lane.b32.xlu0 %v2370, 108
        %v2400 = vpop.permute.xlu0 %2399
        %2401 = vrot.lane.b32.xlu0 %v2371, 108
        %v2402 = vpop.permute.xlu0 %2401
        %2403 = vrot.lane.b32.xlu0 %v2372, 108
        %v2404 = vpop.permute.xlu0 %2403
        %2405 = vrot.lane.b32.xlu0 %v2373, 108
        %v2406 = vpop.permute.xlu0 %2405
        %2407 = vrot.lane.b32.xlu0 %v2374, 108
        %v2408 = vpop.permute.xlu0 %2407
        %2409 = vrot.lane.b32.xlu0 %v2375, 108
        %v2410 = vpop.permute.xlu0 %2409
        %2411 = vrot.lane.b32.xlu0 %v2376, 108
        %v2412 = vpop.permute.xlu0 %2411
        %v2413 = vsel %vm2062, %v2390, %v2392
        %v2414 = vsel %vm2062, %v2392, %v2394
        %v2415 = vsel %vm2062, %v2394, %v2396
        %v2416 = vsel %vm2062, %v2398, %v2400
        %v2417 = vsel %vm2062, %v2400, %v2402
        %v2418 = vsel %vm2062, %v2402, %v2404
        %v2419 = vsel %vm2062, %v2406, %v2408
        %v2420 = vsel %vm2062, %v2408, %v2410
        %v2421 = vsel %vm2062, %v2410, %v2412
        %v2431 = vadd.f32 %v2355, %v2413
        %v2432 = vadd.f32 %v2356, %v2414
        %v2433 = vadd.f32 %v2357, %v2415
        %v2434 = vadd.f32 %v2358, %v2416
        %v2435 = vadd.f32 %v2359, %v2417
        %v2436 = vadd.f32 %v2360, %v2418
        %v2437 = vadd.f32 %v2361, %v2419
        %v2438 = vadd.f32 %v2362, %v2420
        %v2439 = vadd.f32 %v2363, %v2421
        %s2440 = sld [smem:[#allocation3 + $0xc]]
        %s2441 = sld [smem:[#allocation3 + $0xd]]
        %v2442 = vstv %s2440
        %v2443 = vmul.f32 %v2442, %v351
        %v2444 = vmul.f32 %v2442, %v352
        %v2445 = vmul.f32 %v2442, %v353
        %v2446 = vmul.f32 %v2442, %v354
        %v2447 = vmul.f32 %v2442, %v355
        %v2448 = vmul.f32 %v2442, %v356
        %v2449 = vmul.f32 %v2442, %v357
        %v2450 = vmul.f32 %v2442, %v358
        %2459 = vrot.lane.b32.xlu0 %v2443, 92
        %v2460 = vpop.permute.xlu0 %2459
        %2461 = vrot.lane.b32.xlu0 %v2444, 92
        %v2462 = vpop.permute.xlu0 %2461
        %2463 = vrot.lane.b32.xlu0 %v2445, 92
        %v2464 = vpop.permute.xlu0 %2463
        %2465 = vrot.lane.b32.xlu0 %v2446, 92
        %v2466 = vpop.permute.xlu0 %2465
        %2467 = vrot.lane.b32.xlu0 %v2447, 92
        %v2468 = vpop.permute.xlu0 %2467
        %2469 = vrot.lane.b32.xlu0 %v2448, 92
        %v2470 = vpop.permute.xlu0 %2469
        %2471 = vrot.lane.b32.xlu0 %v2449, 92
        %v2472 = vpop.permute.xlu0 %2471
        %2473 = vrot.lane.b32.xlu0 %v2450, 92
        %v2474 = vpop.permute.xlu0 %2473
        %vm2475 = vcmask 752640
        %v2476 = vsel %vm2475, %v2460, %v2462
        %v2477 = vsel %vm2475, %v2462, %v2464
        %v2478 = vsel %vm2475, %v2464, %v2466
        %v2479 = vsel %vm2475, %v2468, %v2470
        %v2480 = vsel %vm2475, %v2470, %v2472
        %v2481 = vsel %vm2475, %v2472, %v2474
        %v2488 = vadd.f32 %v2126, %v2476
        %v2489 = vadd.f32 %v2127, %v2477
        %v2490 = vadd.f32 %v2128, %v2478
        %v2491 = vadd.f32 %v2129, %v2479
        %v2492 = vadd.f32 %v2130, %v2480
        %v2493 = vadd.f32 %v2131, %v2481
        %v2494 = vstv %s2441
        %v2495 = vmul.f32 %v2494, %v363
        %v2496 = vmul.f32 %v2494, %v364
        %v2497 = vmul.f32 %v2494, %v365
        %v2498 = vmul.f32 %v2494, %v366
        %v2499 = vmul.f32 %v2494, %v367
        %v2500 = vmul.f32 %v2494, %v368
        %v2501 = vmul.f32 %v2494, %v369
        %v2502 = vmul.f32 %v2494, %v370
        %2511 = vrot.lane.b32.xlu0 %v2495, 92
        %v2512 = vpop.permute.xlu0 %2511
        %2513 = vrot.lane.b32.xlu0 %v2496, 92
        %v2514 = vpop.permute.xlu0 %2513
        %2515 = vrot.lane.b32.xlu0 %v2497, 92
        %v2516 = vpop.permute.xlu0 %2515
        %2517 = vrot.lane.b32.xlu0 %v2498, 92
        %v2518 = vpop.permute.xlu0 %2517
        %2519 = vrot.lane.b32.xlu0 %v2499, 92
        %v2520 = vpop.permute.xlu0 %2519
        %2521 = vrot.lane.b32.xlu0 %v2500, 92
        %v2522 = vpop.permute.xlu0 %2521
        %2523 = vrot.lane.b32.xlu0 %v2501, 92
        %v2524 = vpop.permute.xlu0 %2523
        %2525 = vrot.lane.b32.xlu0 %v2502, 92
        %v2526 = vpop.permute.xlu0 %2525
        %v2527 = vsel %vm2475, %v2512, %v2514
        %v2528 = vsel %vm2475, %v2514, %v2516
        %v2529 = vsel %vm2475, %v2516, %v2518
        %v2530 = vsel %vm2475, %v2520, %v2522
        %v2531 = vsel %vm2475, %v2522, %v2524
        %v2532 = vsel %vm2475, %v2524, %v2526
        %v2539 = vadd.f32 %v2488, %v2527
        %v2540 = vadd.f32 %v2489, %v2528
        %v2541 = vadd.f32 %v2490, %v2529
        %v2542 = vadd.f32 %v2491, %v2530
        %v2543 = vadd.f32 %v2492, %v2531
        %v2544 = vadd.f32 %v2493, %v2532
        %s2545 = sld [smem:[#allocation3 + $0x1e]]
        %s2546 = sld [smem:[#allocation3 + $0x1f]]
        %v2547 = vstv %s2545
        %v2548 = vmul.f32 %v2547, %v351
        %v2549 = vmul.f32 %v2547, %v352
        %v2550 = vmul.f32 %v2547, %v353
        %v2551 = vmul.f32 %v2547, %v354
        %v2552 = vmul.f32 %v2547, %v355
        %v2553 = vmul.f32 %v2547, %v356
        %v2554 = vmul.f32 %v2547, %v357
        %v2555 = vmul.f32 %v2547, %v358
        %v2556 = vmul.f32 %v2547, %v359
        %v2557 = vmul.f32 %v2547, %v360
        %v2558 = vmul.f32 %v2547, %v361
        %v2559 = vmul.f32 %v2547, %v362
        %2572 = vrot.lane.b32.xlu0 %v2548, 92
        %v2573 = vpop.permute.xlu0 %2572
        %2574 = vrot.lane.b32.xlu0 %v2549, 92
        %v2575 = vpop.permute.xlu0 %2574
        %2576 = vrot.lane.b32.xlu0 %v2550, 92
        %v2577 = vpop.permute.xlu0 %2576
        %2578 = vrot.lane.b32.xlu0 %v2551, 92
        %v2579 = vpop.permute.xlu0 %2578
        %2580 = vrot.lane.b32.xlu0 %v2552, 92
        %v2581 = vpop.permute.xlu0 %2580
        %2582 = vrot.lane.b32.xlu0 %v2553, 92
        %v2583 = vpop.permute.xlu0 %2582
        %2584 = vrot.lane.b32.xlu0 %v2554, 92
        %v2585 = vpop.permute.xlu0 %2584
        %2586 = vrot.lane.b32.xlu0 %v2555, 92
        %v2587 = vpop.permute.xlu0 %2586
        %2588 = vrot.lane.b32.xlu0 %v2556, 92
        %v2589 = vpop.permute.xlu0 %2588
        %2590 = vrot.lane.b32.xlu0 %v2557, 92
        %v2591 = vpop.permute.xlu0 %2590
        %2592 = vrot.lane.b32.xlu0 %v2558, 92
        %v2593 = vpop.permute.xlu0 %2592
        %2594 = vrot.lane.b32.xlu0 %v2559, 92
        %v2595 = vpop.permute.xlu0 %2594
        %v2596 = vsel %vm2475, %v2573, %v2575
        %v2597 = vsel %vm2475, %v2575, %v2577
        %v2598 = vsel %vm2475, %v2577, %v2579
        %v2599 = vsel %vm2475, %v2581, %v2583
        %v2600 = vsel %vm2475, %v2583, %v2585
        %v2601 = vsel %vm2475, %v2585, %v2587
        %v2602 = vsel %vm2475, %v2589, %v2591
        %v2603 = vsel %vm2475, %v2591, %v2593
        %v2604 = vsel %vm2475, %v2593, %v2595
        %v2614 = vadd.f32 %v2277, %v2596
        %v2615 = vadd.f32 %v2278, %v2597
        %v2616 = vadd.f32 %v2279, %v2598
        %v2617 = vadd.f32 %v2280, %v2599
        %v2618 = vadd.f32 %v2281, %v2600
        %v2619 = vadd.f32 %v2282, %v2601
        %v2620 = vadd.f32 %v2283, %v2602
        %v2621 = vadd.f32 %v2284, %v2603
        %v2622 = vadd.f32 %v2285, %v2604
        %v2623 = vstv %s2546
        %v2624 = vmul.f32 %v2623, %v363
        %v2625 = vmul.f32 %v2623, %v364
        %v2626 = vmul.f32 %v2623, %v365
        %v2627 = vmul.f32 %v2623, %v366
        %v2628 = vmul.f32 %v2623, %v367
        %v2629 = vmul.f32 %v2623, %v368
        %v2630 = vmul.f32 %v2623, %v369
        %v2631 = vmul.f32 %v2623, %v370
        %v2632 = vmul.f32 %v2623, %v371
        %v2633 = vmul.f32 %v2623, %v372
        %v2634 = vmul.f32 %v2623, %v373
        %v2635 = vmul.f32 %v2623, %v374
        %2648 = vrot.lane.b32.xlu0 %v2624, 92
        %v2649 = vpop.permute.xlu0 %2648
        %2650 = vrot.lane.b32.xlu0 %v2625, 92
        %v2651 = vpop.permute.xlu0 %2650
        %2652 = vrot.lane.b32.xlu0 %v2626, 92
        %v2653 = vpop.permute.xlu0 %2652
        %2654 = vrot.lane.b32.xlu0 %v2627, 92
        %v2655 = vpop.permute.xlu0 %2654
        %2656 = vrot.lane.b32.xlu0 %v2628, 92
        %v2657 = vpop.permute.xlu0 %2656
        %2658 = vrot.lane.b32.xlu0 %v2629, 92
        %v2659 = vpop.permute.xlu0 %2658
        %2660 = vrot.lane.b32.xlu0 %v2630, 92
        %v2661 = vpop.permute.xlu0 %2660
        %2662 = vrot.lane.b32.xlu0 %v2631, 92
        %v2663 = vpop.permute.xlu0 %2662
        %2664 = vrot.lane.b32.xlu0 %v2632, 92
        %v2665 = vpop.permute.xlu0 %2664
        %2666 = vrot.lane.b32.xlu0 %v2633, 92
        %v2667 = vpop.permute.xlu0 %2666
        %2668 = vrot.lane.b32.xlu0 %v2634, 92
        %v2669 = vpop.permute.xlu0 %2668
        %2670 = vrot.lane.b32.xlu0 %v2635, 92
        %v2671 = vpop.permute.xlu0 %2670
        %v2672 = vsel %vm2475, %v2649, %v2651
        %v2673 = vsel %vm2475, %v2651, %v2653
        %v2674 = vsel %vm2475, %v2653, %v2655
        %v2675 = vsel %vm2475, %v2657, %v2659
        %v2676 = vsel %vm2475, %v2659, %v2661
        %v2677 = vsel %vm2475, %v2661, %v2663
        %v2678 = vsel %vm2475, %v2665, %v2667
        %v2679 = vsel %vm2475, %v2667, %v2669
        %v2680 = vsel %vm2475, %v2669, %v2671
        %v2690 = vadd.f32 %v2614, %v2672
        %v2691 = vadd.f32 %v2615, %v2673
        %v2692 = vadd.f32 %v2616, %v2674
        %v2693 = vadd.f32 %v2617, %v2675
        %v2694 = vadd.f32 %v2618, %v2676
        %v2695 = vadd.f32 %v2619, %v2677
        %v2696 = vadd.f32 %v2620, %v2678
        %v2697 = vadd.f32 %v2621, %v2679
        %v2698 = vadd.f32 %v2622, %v2680
        %s2699 = sld [smem:[#allocation3 + $0x30]]
        %s2700 = sld [smem:[#allocation3 + $0x31]]
        %v2701 = vstv %s2699
        %v2702 = vmul.f32 %v2701, %v351
        %v2703 = vmul.f32 %v2701, %v352
        %v2704 = vmul.f32 %v2701, %v353
        %v2705 = vmul.f32 %v2701, %v354
        %v2706 = vmul.f32 %v2701, %v355
        %v2707 = vmul.f32 %v2701, %v356
        %v2708 = vmul.f32 %v2701, %v357
        %v2709 = vmul.f32 %v2701, %v358
        %v2710 = vmul.f32 %v2701, %v359
        %v2711 = vmul.f32 %v2701, %v360
        %v2712 = vmul.f32 %v2701, %v361
        %v2713 = vmul.f32 %v2701, %v362
        %2726 = vrot.lane.b32.xlu0 %v2702, 92
        %v2727 = vpop.permute.xlu0 %2726
        %2728 = vrot.lane.b32.xlu0 %v2703, 92
        %v2729 = vpop.permute.xlu0 %2728
        %2730 = vrot.lane.b32.xlu0 %v2704, 92
        %v2731 = vpop.permute.xlu0 %2730
        %2732 = vrot.lane.b32.xlu0 %v2705, 92
        %v2733 = vpop.permute.xlu0 %2732
        %2734 = vrot.lane.b32.xlu0 %v2706, 92
        %v2735 = vpop.permute.xlu0 %2734
        %2736 = vrot.lane.b32.xlu0 %v2707, 92
        %v2737 = vpop.permute.xlu0 %2736
        %2738 = vrot.lane.b32.xlu0 %v2708, 92
        %v2739 = vpop.permute.xlu0 %2738
        %2740 = vrot.lane.b32.xlu0 %v2709, 92
        %v2741 = vpop.permute.xlu0 %2740
        %2742 = vrot.lane.b32.xlu0 %v2710, 92
        %v2743 = vpop.permute.xlu0 %2742
        %2744 = vrot.lane.b32.xlu0 %v2711, 92
        %v2745 = vpop.permute.xlu0 %2744
        %2746 = vrot.lane.b32.xlu0 %v2712, 92
        %v2747 = vpop.permute.xlu0 %2746
        %2748 = vrot.lane.b32.xlu0 %v2713, 92
        %v2749 = vpop.permute.xlu0 %2748
        %v2750 = vsel %vm2475, %v2727, %v2729
        %v2751 = vsel %vm2475, %v2729, %v2731
        %v2752 = vsel %vm2475, %v2731, %v2733
        %v2753 = vsel %vm2475, %v2735, %v2737
        %v2754 = vsel %vm2475, %v2737, %v2739
        %v2755 = vsel %vm2475, %v2739, %v2741
        %v2756 = vsel %vm2475, %v2743, %v2745
        %v2757 = vsel %vm2475, %v2745, %v2747
        %v2758 = vsel %vm2475, %v2747, %v2749
        %v2768 = vadd.f32 %v2431, %v2750
        %v2769 = vadd.f32 %v2432, %v2751
        %v2770 = vadd.f32 %v2433, %v2752
        %v2771 = vadd.f32 %v2434, %v2753
        %v2772 = vadd.f32 %v2435, %v2754
        %v2773 = vadd.f32 %v2436, %v2755
        %v2774 = vadd.f32 %v2437, %v2756
        %v2775 = vadd.f32 %v2438, %v2757
        %v2776 = vadd.f32 %v2439, %v2758
        %v2777 = vstv %s2700
        %v2778 = vmul.f32 %v2777, %v363
        %v2779 = vmul.f32 %v2777, %v364
        %v2780 = vmul.f32 %v2777, %v365
        %v2781 = vmul.f32 %v2777, %v366
        %v2782 = vmul.f32 %v2777, %v367
        %v2783 = vmul.f32 %v2777, %v368
        %v2784 = vmul.f32 %v2777, %v369
        %v2785 = vmul.f32 %v2777, %v370
        %v2786 = vmul.f32 %v2777, %v371
        %v2787 = vmul.f32 %v2777, %v372
        %v2788 = vmul.f32 %v2777, %v373
        %v2789 = vmul.f32 %v2777, %v374
        %2802 = vrot.lane.b32.xlu0 %v2778, 92
        %v2803 = vpop.permute.xlu0 %2802
        %2804 = vrot.lane.b32.xlu0 %v2779, 92
        %v2805 = vpop.permute.xlu0 %2804
        %2806 = vrot.lane.b32.xlu0 %v2780, 92
        %v2807 = vpop.permute.xlu0 %2806
        %2808 = vrot.lane.b32.xlu0 %v2781, 92
        %v2809 = vpop.permute.xlu0 %2808
        %2810 = vrot.lane.b32.xlu0 %v2782, 92
        %v2811 = vpop.permute.xlu0 %2810
        %2812 = vrot.lane.b32.xlu0 %v2783, 92
        %v2813 = vpop.permute.xlu0 %2812
        %2814 = vrot.lane.b32.xlu0 %v2784, 92
        %v2815 = vpop.permute.xlu0 %2814
        %2816 = vrot.lane.b32.xlu0 %v2785, 92
        %v2817 = vpop.permute.xlu0 %2816
        %2818 = vrot.lane.b32.xlu0 %v2786, 92
        %v2819 = vpop.permute.xlu0 %2818
        %2820 = vrot.lane.b32.xlu0 %v2787, 92
        %v2821 = vpop.permute.xlu0 %2820
        %2822 = vrot.lane.b32.xlu0 %v2788, 92
        %v2823 = vpop.permute.xlu0 %2822
        %2824 = vrot.lane.b32.xlu0 %v2789, 92
        %v2825 = vpop.permute.xlu0 %2824
        %v2826 = vsel %vm2475, %v2803, %v2805
        %v2827 = vsel %vm2475, %v2805, %v2807
        %v2828 = vsel %vm2475, %v2807, %v2809
        %v2829 = vsel %vm2475, %v2811, %v2813
        %v2830 = vsel %vm2475, %v2813, %v2815
        %v2831 = vsel %vm2475, %v2815, %v2817
        %v2832 = vsel %vm2475, %v2819, %v2821
        %v2833 = vsel %vm2475, %v2821, %v2823
        %v2834 = vsel %vm2475, %v2823, %v2825
        %v2844 = vadd.f32 %v2768, %v2826
        %v2845 = vadd.f32 %v2769, %v2827
        %v2846 = vadd.f32 %v2770, %v2828
        %v2847 = vadd.f32 %v2771, %v2829
        %v2848 = vadd.f32 %v2772, %v2830
        %v2849 = vadd.f32 %v2773, %v2831
        %v2850 = vadd.f32 %v2774, %v2832
        %v2851 = vadd.f32 %v2775, %v2833
        %v2852 = vadd.f32 %v2776, %v2834
        %s2853 = sld [smem:[#allocation3 + $0xe]]
        %s2854 = sld [smem:[#allocation3 + $0xf]]
        %v2855 = vstv %s2853
        %v2856 = vmul.f32 %v2855, %v351
        %v2857 = vmul.f32 %v2855, %v352
        %v2858 = vmul.f32 %v2855, %v353
        %v2859 = vmul.f32 %v2855, %v354
        %v2860 = vmul.f32 %v2855, %v355
        %v2861 = vmul.f32 %v2855, %v356
        %v2862 = vmul.f32 %v2855, %v357
        %v2863 = vmul.f32 %v2855, %v358
        %2872 = vrot.lane.b32.xlu0 %v2856, 91
        %v2873 = vpop.permute.xlu0 %2872
        %2874 = vrot.lane.b32.xlu0 %v2857, 91
        %v2875 = vpop.permute.xlu0 %2874
        %2876 = vrot.lane.b32.xlu0 %v2858, 91
        %v2877 = vpop.permute.xlu0 %2876
        %2878 = vrot.lane.b32.xlu0 %v2859, 91
        %v2879 = vpop.permute.xlu0 %2878
        %2880 = vrot.lane.b32.xlu0 %v2860, 91
        %v2881 = vpop.permute.xlu0 %2880
        %2882 = vrot.lane.b32.xlu0 %v2861, 91
        %v2883 = vpop.permute.xlu0 %2882
        %2884 = vrot.lane.b32.xlu0 %v2862, 91
        %v2885 = vpop.permute.xlu0 %2884
        %2886 = vrot.lane.b32.xlu0 %v2863, 91
        %v2887 = vpop.permute.xlu0 %2886
        %vm2888 = vcmask 744448
        %v2889 = vsel %vm2888, %v2873, %v2875
        %v2890 = vsel %vm2888, %v2875, %v2877
        %v2891 = vsel %vm2888, %v2877, %v2879
        %v2892 = vsel %vm2888, %v2881, %v2883
        %v2893 = vsel %vm2888, %v2883, %v2885
        %v2894 = vsel %vm2888, %v2885, %v2887
        %v2901 = vadd.f32 %v2539, %v2889
        %v2902 = vadd.f32 %v2540, %v2890
        %v2903 = vadd.f32 %v2541, %v2891
        %v2904 = vadd.f32 %v2542, %v2892
        %v2905 = vadd.f32 %v2543, %v2893
        %v2906 = vadd.f32 %v2544, %v2894
        %v2907 = vstv %s2854
        %v2908 = vmul.f32 %v2907, %v363
        %v2909 = vmul.f32 %v2907, %v364
        %v2910 = vmul.f32 %v2907, %v365
        %v2911 = vmul.f32 %v2907, %v366
        %v2912 = vmul.f32 %v2907, %v367
        %v2913 = vmul.f32 %v2907, %v368
        %v2914 = vmul.f32 %v2907, %v369
        %v2915 = vmul.f32 %v2907, %v370
        %2924 = vrot.lane.b32.xlu0 %v2908, 91
        %v2925 = vpop.permute.xlu0 %2924
        %2926 = vrot.lane.b32.xlu0 %v2909, 91
        %v2927 = vpop.permute.xlu0 %2926
        %2928 = vrot.lane.b32.xlu0 %v2910, 91
        %v2929 = vpop.permute.xlu0 %2928
        %2930 = vrot.lane.b32.xlu0 %v2911, 91
        %v2931 = vpop.permute.xlu0 %2930
        %2932 = vrot.lane.b32.xlu0 %v2912, 91
        %v2933 = vpop.permute.xlu0 %2932
        %2934 = vrot.lane.b32.xlu0 %v2913, 91
        %v2935 = vpop.permute.xlu0 %2934
        %2936 = vrot.lane.b32.xlu0 %v2914, 91
        %v2937 = vpop.permute.xlu0 %2936
        %2938 = vrot.lane.b32.xlu0 %v2915, 91
        %v2939 = vpop.permute.xlu0 %2938
        %v2940 = vsel %vm2888, %v2925, %v2927
        %v2941 = vsel %vm2888, %v2927, %v2929
        %v2942 = vsel %vm2888, %v2929, %v2931
        %v2943 = vsel %vm2888, %v2933, %v2935
        %v2944 = vsel %vm2888, %v2935, %v2937
        %v2945 = vsel %vm2888, %v2937, %v2939
        %v2952 = vadd.f32 %v2901, %v2940
        %v2953 = vadd.f32 %v2902, %v2941
        %v2954 = vadd.f32 %v2903, %v2942
        %v2955 = vadd.f32 %v2904, %v2943
        %v2956 = vadd.f32 %v2905, %v2944
        %v2957 = vadd.f32 %v2906, %v2945
        %s2958 = sld [smem:[#allocation3 + $0x20]]
        %s2959 = sld [smem:[#allocation3 + $0x21]]
        %v2960 = vstv %s2958
        %v2961 = vmul.f32 %v2960, %v351
        %v2962 = vmul.f32 %v2960, %v352
        %v2963 = vmul.f32 %v2960, %v353
        %v2964 = vmul.f32 %v2960, %v354
        %v2965 = vmul.f32 %v2960, %v355
        %v2966 = vmul.f32 %v2960, %v356
        %v2967 = vmul.f32 %v2960, %v357
        %v2968 = vmul.f32 %v2960, %v358
        %v2969 = vmul.f32 %v2960, %v359
        %v2970 = vmul.f32 %v2960, %v360
        %v2971 = vmul.f32 %v2960, %v361
        %v2972 = vmul.f32 %v2960, %v362
        %2985 = vrot.lane.b32.xlu0 %v2961, 91
        %v2986 = vpop.permute.xlu0 %2985
        %2987 = vrot.lane.b32.xlu0 %v2962, 91
        %v2988 = vpop.permute.xlu0 %2987
        %2989 = vrot.lane.b32.xlu0 %v2963, 91
        %v2990 = vpop.permute.xlu0 %2989
        %2991 = vrot.lane.b32.xlu0 %v2964, 91
        %v2992 = vpop.permute.xlu0 %2991
        %2993 = vrot.lane.b32.xlu0 %v2965, 91
        %v2994 = vpop.permute.xlu0 %2993
        %2995 = vrot.lane.b32.xlu0 %v2966, 91
        %v2996 = vpop.permute.xlu0 %2995
        %2997 = vrot.lane.b32.xlu0 %v2967, 91
        %v2998 = vpop.permute.xlu0 %2997
        %2999 = vrot.lane.b32.xlu0 %v2968, 91
        %v3000 = vpop.permute.xlu0 %2999
        %3001 = vrot.lane.b32.xlu0 %v2969, 91
        %v3002 = vpop.permute.xlu0 %3001
        %3003 = vrot.lane.b32.xlu0 %v2970, 91
        %v3004 = vpop.permute.xlu0 %3003
        %3005 = vrot.lane.b32.xlu0 %v2971, 91
        %v3006 = vpop.permute.xlu0 %3005
        %3007 = vrot.lane.b32.xlu0 %v2972, 91
        %v3008 = vpop.permute.xlu0 %3007
        %v3009 = vsel %vm2888, %v2986, %v2988
        %v3010 = vsel %vm2888, %v2988, %v2990
        %v3011 = vsel %vm2888, %v2990, %v2992
        %v3012 = vsel %vm2888, %v2994, %v2996
        %v3013 = vsel %vm2888, %v2996, %v2998
        %v3014 = vsel %vm2888, %v2998, %v3000
        %v3015 = vsel %vm2888, %v3002, %v3004
        %v3016 = vsel %vm2888, %v3004, %v3006
        %v3017 = vsel %vm2888, %v3006, %v3008
        %v3027 = vadd.f32 %v2690, %v3009
        %v3028 = vadd.f32 %v2691, %v3010
        %v3029 = vadd.f32 %v2692, %v3011
        %v3030 = vadd.f32 %v2693, %v3012
        %v3031 = vadd.f32 %v2694, %v3013
        %v3032 = vadd.f32 %v2695, %v3014
        %v3033 = vadd.f32 %v2696, %v3015
        %v3034 = vadd.f32 %v2697, %v3016
        %v3035 = vadd.f32 %v2698, %v3017
        %v3036 = vstv %s2959
        %v3037 = vmul.f32 %v3036, %v363
        %v3038 = vmul.f32 %v3036, %v364
        %v3039 = vmul.f32 %v3036, %v365
        %v3040 = vmul.f32 %v3036, %v366
        %v3041 = vmul.f32 %v3036, %v367
        %v3042 = vmul.f32 %v3036, %v368
        %v3043 = vmul.f32 %v3036, %v369
        %v3044 = vmul.f32 %v3036, %v370
        %v3045 = vmul.f32 %v3036, %v371
        %v3046 = vmul.f32 %v3036, %v372
        %v3047 = vmul.f32 %v3036, %v373
        %v3048 = vmul.f32 %v3036, %v374
        %3061 = vrot.lane.b32.xlu0 %v3037, 91
        %v3062 = vpop.permute.xlu0 %3061
        %3063 = vrot.lane.b32.xlu0 %v3038, 91
        %v3064 = vpop.permute.xlu0 %3063
        %3065 = vrot.lane.b32.xlu0 %v3039, 91
        %v3066 = vpop.permute.xlu0 %3065
        %3067 = vrot.lane.b32.xlu0 %v3040, 91
        %v3068 = vpop.permute.xlu0 %3067
        %3069 = vrot.lane.b32.xlu0 %v3041, 91
        %v3070 = vpop.permute.xlu0 %3069
        %3071 = vrot.lane.b32.xlu0 %v3042, 91
        %v3072 = vpop.permute.xlu0 %3071
        %3073 = vrot.lane.b32.xlu0 %v3043, 91
        %v3074 = vpop.permute.xlu0 %3073
        %3075 = vrot.lane.b32.xlu0 %v3044, 91
        %v3076 = vpop.permute.xlu0 %3075
        %3077 = vrot.lane.b32.xlu0 %v3045, 91
        %v3078 = vpop.permute.xlu0 %3077
        %3079 = vrot.lane.b32.xlu0 %v3046, 91
        %v3080 = vpop.permute.xlu0 %3079
        %3081 = vrot.lane.b32.xlu0 %v3047, 91
        %v3082 = vpop.permute.xlu0 %3081
        %3083 = vrot.lane.b32.xlu0 %v3048, 91
        %v3084 = vpop.permute.xlu0 %3083
        %v3085 = vsel %vm2888, %v3062, %v3064
        %v3086 = vsel %vm2888, %v3064, %v3066
        %v3087 = vsel %vm2888, %v3066, %v3068
        %v3088 = vsel %vm2888, %v3070, %v3072
        %v3089 = vsel %vm2888, %v3072, %v3074
        %v3090 = vsel %vm2888, %v3074, %v3076
        %v3091 = vsel %vm2888, %v3078, %v3080
        %v3092 = vsel %vm2888, %v3080, %v3082
        %v3093 = vsel %vm2888, %v3082, %v3084
        %v3103 = vadd.f32 %v3027, %v3085
        %v3104 = vadd.f32 %v3028, %v3086
        %v3105 = vadd.f32 %v3029, %v3087
        %v3106 = vadd.f32 %v3030, %v3088
        %v3107 = vadd.f32 %v3031, %v3089
        %v3108 = vadd.f32 %v3032, %v3090
        %v3109 = vadd.f32 %v3033, %v3091
        %v3110 = vadd.f32 %v3034, %v3092
        %v3111 = vadd.f32 %v3035, %v3093
        %s3112 = sld [smem:[#allocation3 + $0x32]]
        %s3113 = sld [smem:[#allocation3 + $0x33]]
        %v3114 = vstv %s3112
        %v3115 = vmul.f32 %v3114, %v351
        %v3116 = vmul.f32 %v3114, %v352
        %v3117 = vmul.f32 %v3114, %v353
        %v3118 = vmul.f32 %v3114, %v354
        %v3119 = vmul.f32 %v3114, %v355
        %v3120 = vmul.f32 %v3114, %v356
        %v3121 = vmul.f32 %v3114, %v357
        %v3122 = vmul.f32 %v3114, %v358
        %v3123 = vmul.f32 %v3114, %v359
        %v3124 = vmul.f32 %v3114, %v360
        %v3125 = vmul.f32 %v3114, %v361
        %v3126 = vmul.f32 %v3114, %v362
        %3139 = vrot.lane.b32.xlu0 %v3115, 91
        %v3140 = vpop.permute.xlu0 %3139
        %3141 = vrot.lane.b32.xlu0 %v3116, 91
        %v3142 = vpop.permute.xlu0 %3141
        %3143 = vrot.lane.b32.xlu0 %v3117, 91
        %v3144 = vpop.permute.xlu0 %3143
        %3145 = vrot.lane.b32.xlu0 %v3118, 91
        %v3146 = vpop.permute.xlu0 %3145
        %3147 = vrot.lane.b32.xlu0 %v3119, 91
        %v3148 = vpop.permute.xlu0 %3147
        %3149 = vrot.lane.b32.xlu0 %v3120, 91
        %v3150 = vpop.permute.xlu0 %3149
        %3151 = vrot.lane.b32.xlu0 %v3121, 91
        %v3152 = vpop.permute.xlu0 %3151
        %3153 = vrot.lane.b32.xlu0 %v3122, 91
        %v3154 = vpop.permute.xlu0 %3153
        %3155 = vrot.lane.b32.xlu0 %v3123, 91
        %v3156 = vpop.permute.xlu0 %3155
        %3157 = vrot.lane.b32.xlu0 %v3124, 91
        %v3158 = vpop.permute.xlu0 %3157
        %3159 = vrot.lane.b32.xlu0 %v3125, 91
        %v3160 = vpop.permute.xlu0 %3159
        %3161 = vrot.lane.b32.xlu0 %v3126, 91
        %v3162 = vpop.permute.xlu0 %3161
        %v3163 = vsel %vm2888, %v3140, %v3142
        %v3164 = vsel %vm2888, %v3142, %v3144
        %v3165 = vsel %vm2888, %v3144, %v3146
        %v3166 = vsel %vm2888, %v3148, %v3150
        %v3167 = vsel %vm2888, %v3150, %v3152
        %v3168 = vsel %vm2888, %v3152, %v3154
        %v3169 = vsel %vm2888, %v3156, %v3158
        %v3170 = vsel %vm2888, %v3158, %v3160
        %v3171 = vsel %vm2888, %v3160, %v3162
        %v3181 = vadd.f32 %v2844, %v3163
        %v3182 = vadd.f32 %v2845, %v3164
        %v3183 = vadd.f32 %v2846, %v3165
        %v3184 = vadd.f32 %v2847, %v3166
        %v3185 = vadd.f32 %v2848, %v3167
        %v3186 = vadd.f32 %v2849, %v3168
        %v3187 = vadd.f32 %v2850, %v3169
        %v3188 = vadd.f32 %v2851, %v3170
        %v3189 = vadd.f32 %v2852, %v3171
        %v3190 = vstv %s3113
        %v3191 = vmul.f32 %v3190, %v363
        %v3192 = vmul.f32 %v3190, %v364
        %v3193 = vmul.f32 %v3190, %v365
        %v3194 = vmul.f32 %v3190, %v366
        %v3195 = vmul.f32 %v3190, %v367
        %v3196 = vmul.f32 %v3190, %v368
        %v3197 = vmul.f32 %v3190, %v369
        %v3198 = vmul.f32 %v3190, %v370
        %v3199 = vmul.f32 %v3190, %v371
        %v3200 = vmul.f32 %v3190, %v372
        %v3201 = vmul.f32 %v3190, %v373
        %v3202 = vmul.f32 %v3190, %v374
        %3215 = vrot.lane.b32.xlu0 %v3191, 91
        %v3216 = vpop.permute.xlu0 %3215
        %3217 = vrot.lane.b32.xlu0 %v3192, 91
        %v3218 = vpop.permute.xlu0 %3217
        %3219 = vrot.lane.b32.xlu0 %v3193, 91
        %v3220 = vpop.permute.xlu0 %3219
        %3221 = vrot.lane.b32.xlu0 %v3194, 91
        %v3222 = vpop.permute.xlu0 %3221
        %3223 = vrot.lane.b32.xlu0 %v3195, 91
        %v3224 = vpop.permute.xlu0 %3223
        %3225 = vrot.lane.b32.xlu0 %v3196, 91
        %v3226 = vpop.permute.xlu0 %3225
        %3227 = vrot.lane.b32.xlu0 %v3197, 91
        %v3228 = vpop.permute.xlu0 %3227
        %3229 = vrot.lane.b32.xlu0 %v3198, 91
        %v3230 = vpop.permute.xlu0 %3229
        %3231 = vrot.lane.b32.xlu0 %v3199, 91
        %v3232 = vpop.permute.xlu0 %3231
        %3233 = vrot.lane.b32.xlu0 %v3200, 91
        %v3234 = vpop.permute.xlu0 %3233
        %3235 = vrot.lane.b32.xlu0 %v3201, 91
        %v3236 = vpop.permute.xlu0 %3235
        %3237 = vrot.lane.b32.xlu0 %v3202, 91
        %v3238 = vpop.permute.xlu0 %3237
        %v3239 = vsel %vm2888, %v3216, %v3218
        %v3240 = vsel %vm2888, %v3218, %v3220
        %v3241 = vsel %vm2888, %v3220, %v3222
        %v3242 = vsel %vm2888, %v3224, %v3226
        %v3243 = vsel %vm2888, %v3226, %v3228
        %v3244 = vsel %vm2888, %v3228, %v3230
        %v3245 = vsel %vm2888, %v3232, %v3234
        %v3246 = vsel %vm2888, %v3234, %v3236
        %v3247 = vsel %vm2888, %v3236, %v3238
        %v3257 = vadd.f32 %v3181, %v3239
        %v3258 = vadd.f32 %v3182, %v3240
        %v3259 = vadd.f32 %v3183, %v3241
        %v3260 = vadd.f32 %v3184, %v3242
        %v3261 = vadd.f32 %v3185, %v3243
        %v3262 = vadd.f32 %v3186, %v3244
        %v3263 = vadd.f32 %v3187, %v3245
        %v3264 = vadd.f32 %v3188, %v3246
        %v3265 = vadd.f32 %v3189, %v3247
        %s3266 = sld [smem:[#allocation3 + $0x10]]
        %s3267 = sld [smem:[#allocation3 + $0x11]]
        %v3268 = vstv %s3266
        %v3269 = vmul.f32 %v3268, %v351
        %v3270 = vmul.f32 %v3268, %v352
        %v3271 = vmul.f32 %v3268, %v353
        %v3272 = vmul.f32 %v3268, %v354
        %v3273 = vmul.f32 %v3268, %v355
        %v3274 = vmul.f32 %v3268, %v356
        %v3275 = vmul.f32 %v3268, %v357
        %v3276 = vmul.f32 %v3268, %v358
        %3285 = vrot.lane.b32.xlu0 %v3269, 90
        %v3286 = vpop.permute.xlu0 %3285
        %3287 = vrot.lane.b32.xlu0 %v3270, 90
        %v3288 = vpop.permute.xlu0 %3287
        %3289 = vrot.lane.b32.xlu0 %v3271, 90
        %v3290 = vpop.permute.xlu0 %3289
        %3291 = vrot.lane.b32.xlu0 %v3272, 90
        %v3292 = vpop.permute.xlu0 %3291
        %3293 = vrot.lane.b32.xlu0 %v3273, 90
        %v3294 = vpop.permute.xlu0 %3293
        %3295 = vrot.lane.b32.xlu0 %v3274, 90
        %v3296 = vpop.permute.xlu0 %3295
        %3297 = vrot.lane.b32.xlu0 %v3275, 90
        %v3298 = vpop.permute.xlu0 %3297
        %3299 = vrot.lane.b32.xlu0 %v3276, 90
        %v3300 = vpop.permute.xlu0 %3299
        %vm3301 = vcmask 736256
        %v3302 = vsel %vm3301, %v3286, %v3288
        %v3303 = vsel %vm3301, %v3288, %v3290
        %v3304 = vsel %vm3301, %v3290, %v3292
        %v3305 = vsel %vm3301, %v3294, %v3296
        %v3306 = vsel %vm3301, %v3296, %v3298
        %v3307 = vsel %vm3301, %v3298, %v3300
        %v3314 = vadd.f32 %v2952, %v3302
        %v3315 = vadd.f32 %v2953, %v3303
        %v3316 = vadd.f32 %v2954, %v3304
        %v3317 = vadd.f32 %v2955, %v3305
        %v3318 = vadd.f32 %v2956, %v3306
        %v3319 = vadd.f32 %v2957, %v3307
        %v3320 = vstv %s3267
        %v3321 = vmul.f32 %v3320, %v363
        %v3322 = vmul.f32 %v3320, %v364
        %v3323 = vmul.f32 %v3320, %v365
        %v3324 = vmul.f32 %v3320, %v366
        %v3325 = vmul.f32 %v3320, %v367
        %v3326 = vmul.f32 %v3320, %v368
        %v3327 = vmul.f32 %v3320, %v369
        %v3328 = vmul.f32 %v3320, %v370
        %3337 = vrot.lane.b32.xlu0 %v3321, 90
        %v3338 = vpop.permute.xlu0 %3337
        %3339 = vrot.lane.b32.xlu0 %v3322, 90
        %v3340 = vpop.permute.xlu0 %3339
        %3341 = vrot.lane.b32.xlu0 %v3323, 90
        %v3342 = vpop.permute.xlu0 %3341
        %3343 = vrot.lane.b32.xlu0 %v3324, 90
        %v3344 = vpop.permute.xlu0 %3343
        %3345 = vrot.lane.b32.xlu0 %v3325, 90
        %v3346 = vpop.permute.xlu0 %3345
        %3347 = vrot.lane.b32.xlu0 %v3326, 90
        %v3348 = vpop.permute.xlu0 %3347
        %3349 = vrot.lane.b32.xlu0 %v3327, 90
        %v3350 = vpop.permute.xlu0 %3349
        %3351 = vrot.lane.b32.xlu0 %v3328, 90
        %v3352 = vpop.permute.xlu0 %3351
        %v3353 = vsel %vm3301, %v3338, %v3340
        %v3354 = vsel %vm3301, %v3340, %v3342
        %v3355 = vsel %vm3301, %v3342, %v3344
        %v3356 = vsel %vm3301, %v3346, %v3348
        %v3357 = vsel %vm3301, %v3348, %v3350
        %v3358 = vsel %vm3301, %v3350, %v3352
        %v3365 = vadd.f32 %v3314, %v3353
        %v3366 = vadd.f32 %v3315, %v3354
        %v3367 = vadd.f32 %v3316, %v3355
        %v3368 = vadd.f32 %v3317, %v3356
        %v3369 = vadd.f32 %v3318, %v3357
        %v3370 = vadd.f32 %v3319, %v3358
        %s3371 = sld [smem:[#allocation3 + $0x22]]
        %s3372 = sld [smem:[#allocation3 + $0x23]]
        %v3373 = vstv %s3371
        %v3374 = vmul.f32 %v3373, %v351
        %v3375 = vmul.f32 %v3373, %v352
        %v3376 = vmul.f32 %v3373, %v353
        %v3377 = vmul.f32 %v3373, %v354
        %v3378 = vmul.f32 %v3373, %v355
        %v3379 = vmul.f32 %v3373, %v356
        %v3380 = vmul.f32 %v3373, %v357
        %v3381 = vmul.f32 %v3373, %v358
        %v3382 = vmul.f32 %v3373, %v359
        %v3383 = vmul.f32 %v3373, %v360
        %v3384 = vmul.f32 %v3373, %v361
        %v3385 = vmul.f32 %v3373, %v362
        %3398 = vrot.lane.b32.xlu0 %v3374, 90
        %v3399 = vpop.permute.xlu0 %3398
        %3400 = vrot.lane.b32.xlu0 %v3375, 90
        %v3401 = vpop.permute.xlu0 %3400
        %3402 = vrot.lane.b32.xlu0 %v3376, 90
        %v3403 = vpop.permute.xlu0 %3402
        %3404 = vrot.lane.b32.xlu0 %v3377, 90
        %v3405 = vpop.permute.xlu0 %3404
        %3406 = vrot.lane.b32.xlu0 %v3378, 90
        %v3407 = vpop.permute.xlu0 %3406
        %3408 = vrot.lane.b32.xlu0 %v3379, 90
        %v3409 = vpop.permute.xlu0 %3408
        %3410 = vrot.lane.b32.xlu0 %v3380, 90
        %v3411 = vpop.permute.xlu0 %3410
        %3412 = vrot.lane.b32.xlu0 %v3381, 90
        %v3413 = vpop.permute.xlu0 %3412
        %3414 = vrot.lane.b32.xlu0 %v3382, 90
        %v3415 = vpop.permute.xlu0 %3414
        %3416 = vrot.lane.b32.xlu0 %v3383, 90
        %v3417 = vpop.permute.xlu0 %3416
        %3418 = vrot.lane.b32.xlu0 %v3384, 90
        %v3419 = vpop.permute.xlu0 %3418
        %3420 = vrot.lane.b32.xlu0 %v3385, 90
        %v3421 = vpop.permute.xlu0 %3420
        %v3422 = vsel %vm3301, %v3399, %v3401
        %v3423 = vsel %vm3301, %v3401, %v3403
        %v3424 = vsel %vm3301, %v3403, %v3405
        %v3425 = vsel %vm3301, %v3407, %v3409
        %v3426 = vsel %vm3301, %v3409, %v3411
        %v3427 = vsel %vm3301, %v3411, %v3413
        %v3428 = vsel %vm3301, %v3415, %v3417
        %v3429 = vsel %vm3301, %v3417, %v3419
        %v3430 = vsel %vm3301, %v3419, %v3421
        %v3440 = vadd.f32 %v3103, %v3422
        %v3441 = vadd.f32 %v3104, %v3423
        %v3442 = vadd.f32 %v3105, %v3424
        %v3443 = vadd.f32 %v3106, %v3425
        %v3444 = vadd.f32 %v3107, %v3426
        %v3445 = vadd.f32 %v3108, %v3427
        %v3446 = vadd.f32 %v3109, %v3428
        %v3447 = vadd.f32 %v3110, %v3429
        %v3448 = vadd.f32 %v3111, %v3430
        %v3449 = vstv %s3372
        %v3450 = vmul.f32 %v3449, %v363
        %v3451 = vmul.f32 %v3449, %v364
        %v3452 = vmul.f32 %v3449, %v365
        %v3453 = vmul.f32 %v3449, %v366
        %v3454 = vmul.f32 %v3449, %v367
        %v3455 = vmul.f32 %v3449, %v368
        %v3456 = vmul.f32 %v3449, %v369
        %v3457 = vmul.f32 %v3449, %v370
        %v3458 = vmul.f32 %v3449, %v371
        %v3459 = vmul.f32 %v3449, %v372
        %v3460 = vmul.f32 %v3449, %v373
        %v3461 = vmul.f32 %v3449, %v374
        %3474 = vrot.lane.b32.xlu0 %v3450, 90
        %v3475 = vpop.permute.xlu0 %3474
        %3476 = vrot.lane.b32.xlu0 %v3451, 90
        %v3477 = vpop.permute.xlu0 %3476
        %3478 = vrot.lane.b32.xlu0 %v3452, 90
        %v3479 = vpop.permute.xlu0 %3478
        %3480 = vrot.lane.b32.xlu0 %v3453, 90
        %v3481 = vpop.permute.xlu0 %3480
        %3482 = vrot.lane.b32.xlu0 %v3454, 90
        %v3483 = vpop.permute.xlu0 %3482
        %3484 = vrot.lane.b32.xlu0 %v3455, 90
        %v3485 = vpop.permute.xlu0 %3484
        %3486 = vrot.lane.b32.xlu0 %v3456, 90
        %v3487 = vpop.permute.xlu0 %3486
        %3488 = vrot.lane.b32.xlu0 %v3457, 90
        %v3489 = vpop.permute.xlu0 %3488
        %3490 = vrot.lane.b32.xlu0 %v3458, 90
        %v3491 = vpop.permute.xlu0 %3490
        %3492 = vrot.lane.b32.xlu0 %v3459, 90
        %v3493 = vpop.permute.xlu0 %3492
        %3494 = vrot.lane.b32.xlu0 %v3460, 90
        %v3495 = vpop.permute.xlu0 %3494
        %3496 = vrot.lane.b32.xlu0 %v3461, 90
        %v3497 = vpop.permute.xlu0 %3496
        %v3498 = vsel %vm3301, %v3475, %v3477
        %v3499 = vsel %vm3301, %v3477, %v3479
        %v3500 = vsel %vm3301, %v3479, %v3481
        %v3501 = vsel %vm3301, %v3483, %v3485
        %v3502 = vsel %vm3301, %v3485, %v3487
        %v3503 = vsel %vm3301, %v3487, %v3489
        %v3504 = vsel %vm3301, %v3491, %v3493
        %v3505 = vsel %vm3301, %v3493, %v3495
        %v3506 = vsel %vm3301, %v3495, %v3497
        %v3516 = vadd.f32 %v3440, %v3498
        %v3517 = vadd.f32 %v3441, %v3499
        %v3518 = vadd.f32 %v3442, %v3500
        %v3519 = vadd.f32 %v3443, %v3501
        %v3520 = vadd.f32 %v3444, %v3502
        %v3521 = vadd.f32 %v3445, %v3503
        %v3522 = vadd.f32 %v3446, %v3504
        %v3523 = vadd.f32 %v3447, %v3505
        %v3524 = vadd.f32 %v3448, %v3506
        %s3525 = sld [smem:[#allocation3 + $0x34]]
        %s3526 = sld [smem:[#allocation3 + $0x35]]
        %v3527 = vstv %s3525
        %v3528 = vmul.f32 %v3527, %v351
        %v3529 = vmul.f32 %v3527, %v352
        %v3530 = vmul.f32 %v3527, %v353
        %v3531 = vmul.f32 %v3527, %v354
        %v3532 = vmul.f32 %v3527, %v355
        %v3533 = vmul.f32 %v3527, %v356
        %v3534 = vmul.f32 %v3527, %v357
        %v3535 = vmul.f32 %v3527, %v358
        %v3536 = vmul.f32 %v3527, %v359
        %v3537 = vmul.f32 %v3527, %v360
        %v3538 = vmul.f32 %v3527, %v361
        %v3539 = vmul.f32 %v3527, %v362
        %3552 = vrot.lane.b32.xlu0 %v3528, 90
        %v3553 = vpop.permute.xlu0 %3552
        %3554 = vrot.lane.b32.xlu0 %v3529, 90
        %v3555 = vpop.permute.xlu0 %3554
        %3556 = vrot.lane.b32.xlu0 %v3530, 90
        %v3557 = vpop.permute.xlu0 %3556
        %3558 = vrot.lane.b32.xlu0 %v3531, 90
        %v3559 = vpop.permute.xlu0 %3558
        %3560 = vrot.lane.b32.xlu0 %v3532, 90
        %v3561 = vpop.permute.xlu0 %3560
        %3562 = vrot.lane.b32.xlu0 %v3533, 90
        %v3563 = vpop.permute.xlu0 %3562
        %3564 = vrot.lane.b32.xlu0 %v3534, 90
        %v3565 = vpop.permute.xlu0 %3564
        %3566 = vrot.lane.b32.xlu0 %v3535, 90
        %v3567 = vpop.permute.xlu0 %3566
        %3568 = vrot.lane.b32.xlu0 %v3536, 90
        %v3569 = vpop.permute.xlu0 %3568
        %3570 = vrot.lane.b32.xlu0 %v3537, 90
        %v3571 = vpop.permute.xlu0 %3570
        %3572 = vrot.lane.b32.xlu0 %v3538, 90
        %v3573 = vpop.permute.xlu0 %3572
        %3574 = vrot.lane.b32.xlu0 %v3539, 90
        %v3575 = vpop.permute.xlu0 %3574
        %v3576 = vsel %vm3301, %v3553, %v3555
        %v3577 = vsel %vm3301, %v3555, %v3557
        %v3578 = vsel %vm3301, %v3557, %v3559
        %v3579 = vsel %vm3301, %v3561, %v3563
        %v3580 = vsel %vm3301, %v3563, %v3565
        %v3581 = vsel %vm3301, %v3565, %v3567
        %v3582 = vsel %vm3301, %v3569, %v3571
        %v3583 = vsel %vm3301, %v3571, %v3573
        %v3584 = vsel %vm3301, %v3573, %v3575
        %v3594 = vadd.f32 %v3257, %v3576
        %v3595 = vadd.f32 %v3258, %v3577
        %v3596 = vadd.f32 %v3259, %v3578
        %v3597 = vadd.f32 %v3260, %v3579
        %v3598 = vadd.f32 %v3261, %v3580
        %v3599 = vadd.f32 %v3262, %v3581
        %v3600 = vadd.f32 %v3263, %v3582
        %v3601 = vadd.f32 %v3264, %v3583
        %v3602 = vadd.f32 %v3265, %v3584
        %v3603 = vstv %s3526
        %v3604 = vmul.f32 %v3603, %v363
        %v3605 = vmul.f32 %v3603, %v364
        %v3606 = vmul.f32 %v3603, %v365
        %v3607 = vmul.f32 %v3603, %v366
        %v3608 = vmul.f32 %v3603, %v367
        %v3609 = vmul.f32 %v3603, %v368
        %v3610 = vmul.f32 %v3603, %v369
        %v3611 = vmul.f32 %v3603, %v370
        %v3612 = vmul.f32 %v3603, %v371
        %v3613 = vmul.f32 %v3603, %v372
        %v3614 = vmul.f32 %v3603, %v373
        %v3615 = vmul.f32 %v3603, %v374
        %3628 = vrot.lane.b32.xlu0 %v3604, 90
        %v3629 = vpop.permute.xlu0 %3628
        %3630 = vrot.lane.b32.xlu0 %v3605, 90
        %v3631 = vpop.permute.xlu0 %3630
        %3632 = vrot.lane.b32.xlu0 %v3606, 90
        %v3633 = vpop.permute.xlu0 %3632
        %3634 = vrot.lane.b32.xlu0 %v3607, 90
        %v3635 = vpop.permute.xlu0 %3634
        %3636 = vrot.lane.b32.xlu0 %v3608, 90
        %v3637 = vpop.permute.xlu0 %3636
        %3638 = vrot.lane.b32.xlu0 %v3609, 90
        %v3639 = vpop.permute.xlu0 %3638
        %3640 = vrot.lane.b32.xlu0 %v3610, 90
        %v3641 = vpop.permute.xlu0 %3640
        %3642 = vrot.lane.b32.xlu0 %v3611, 90
        %v3643 = vpop.permute.xlu0 %3642
        %3644 = vrot.lane.b32.xlu0 %v3612, 90
        %v3645 = vpop.permute.xlu0 %3644
        %3646 = vrot.lane.b32.xlu0 %v3613, 90
        %v3647 = vpop.permute.xlu0 %3646
        %3648 = vrot.lane.b32.xlu0 %v3614, 90
        %v3649 = vpop.permute.xlu0 %3648
        %3650 = vrot.lane.b32.xlu0 %v3615, 90
        %v3651 = vpop.permute.xlu0 %3650
        %v3652 = vsel %vm3301, %v3629, %v3631
        %v3653 = vsel %vm3301, %v3631, %v3633
        %v3654 = vsel %vm3301, %v3633, %v3635
        %v3655 = vsel %vm3301, %v3637, %v3639
        %v3656 = vsel %vm3301, %v3639, %v3641
        %v3657 = vsel %vm3301, %v3641, %v3643
        %v3658 = vsel %vm3301, %v3645, %v3647
        %v3659 = vsel %vm3301, %v3647, %v3649
        %v3660 = vsel %vm3301, %v3649, %v3651
        %v3670 = vadd.f32 %v3594, %v3652
        %v3671 = vadd.f32 %v3595, %v3653
        %v3672 = vadd.f32 %v3596, %v3654
        %v3673 = vadd.f32 %v3597, %v3655
        %v3674 = vadd.f32 %v3598, %v3656
        %v3675 = vadd.f32 %v3599, %v3657
        %v3676 = vadd.f32 %v3600, %v3658
        %v3677 = vadd.f32 %v3601, %v3659
        %v3678 = vadd.f32 %v3602, %v3660
        %vm3688 = vcmask 1046528
        %v3689 = vrot.slane %v3516, 1
        %v3690 = vrot.slane %v3519, 1
        %v3691 = vsel %vm3688, %v3689, %v3690
        %v3692 = vrot.slane %v3517, 1
        %v3693 = vrot.slane %v3520, 1
        %v3694 = vsel %vm3688, %v3692, %v3693
        %v3695 = vrot.slane %v3518, 1
        %v3696 = vrot.slane %v3521, 1
        %v3697 = vsel %vm3688, %v3695, %v3696
        %v3698 = vrot.slane %v3522, 1
        %v3699 = vsel %vm3688, %v3690, %v3698
        %v3700 = vrot.slane %v3523, 1
        %v3701 = vsel %vm3688, %v3693, %v3700
        %v3702 = vrot.slane %v3524, 1
        %v3703 = vsel %vm3688, %v3696, %v3702
        %v3710 = vadd.f32 %v3365, %v3691
        %v3711 = vadd.f32 %v3366, %v3694
        %v3712 = vadd.f32 %v3367, %v3697
        %v3713 = vadd.f32 %v3368, %v3699
        %v3714 = vadd.f32 %v3369, %v3701
        %v3715 = vadd.f32 %v3370, %v3703
        %vm3725 = vcmask 1045504
        %v3726 = vrot.slane %v3670, 2
        %v3727 = vrot.slane %v3673, 2
        %v3728 = vsel %vm3725, %v3726, %v3727
        %v3729 = vrot.slane %v3671, 2
        %v3730 = vrot.slane %v3674, 2
        %v3731 = vsel %vm3725, %v3729, %v3730
        %v3732 = vrot.slane %v3672, 2
        %v3733 = vrot.slane %v3675, 2
        %v3734 = vsel %vm3725, %v3732, %v3733
        %v3735 = vrot.slane %v3676, 2
        %v3736 = vsel %vm3725, %v3727, %v3735
        %v3737 = vrot.slane %v3677, 2
        %v3738 = vsel %vm3725, %v3730, %v3737
        %v3739 = vrot.slane %v3678, 2
        %v3740 = vsel %vm3725, %v3733, %v3739
        %v3747 = vadd.f32 %v3710, %v3728
        %v3748 = vadd.f32 %v3711, %v3731
        %v3749 = vadd.f32 %v3712, %v3734
        %v3750 = vadd.f32 %v3713, %v3736
        %v3751 = vadd.f32 %v3714, %v3738
        %v3752 = vadd.f32 %v3715, %v3740
        %3753 = vst [vmem:[%s223] sm:$0xff] %v3747
        %3754 = vst [vmem:[%s223 + $0x8] sm:$0xff] %v3748
        %3755 = vst [vmem:[%s223 + $0x10] sm:$0xff] %v3749
        %3756 = vst [vmem:[%s223 + $0x18] sm:$0xff] %v3750
        %3757 = vst [vmem:[%s223 + $0x20] sm:$0xff] %v3751
        %3758 = vst [vmem:[%s223 + $0x28] sm:$0xff] %v3752
        %p3759 = scmp.lt.s32.totalorder %s14, 1
        %s3760 = scalar_select %p3759, %s14, 1
        %s3761 = smul.addr %s3760, 6
        %s3762 = smul.addr %s3761, 8
        %s3763 = scalar_lea.vmem %s2, %s3762
        // Predicated region
        $region56: #{sparse_spatial_attention.4} parent=46 // pred_check
          %p3764 = pneg %p79
        $region57: #{sparse_spatial_attention.4} parent=46 // pred_check_branch
          %3766 = sbr.rel (%p3764) target = $region59
        $region58: #{sparse_spatial_attention.4} parent=46 // pred_region
          _
        $region59: #{sparse_spatial_attention.4} parent=46 // pred_fallthru
          _
      $region47: #{sparse_spatial_attention.4} parent=5 // pred_fallthru
        _
      %p3767 = scmp.le.s32.totalorder 2, %s9
      // Predicated region
      $region60: #{sparse_spatial_attention.4} parent=5 // pred_check
        %p3768 = pneg %p3767
      $region61: #{sparse_spatial_attention.4} parent=5 // pred_check_branch
        %3770 = sbr.rel (%p3768) target = $region63
      $region62: #{sparse_spatial_attention.4} parent=5 // pred_region
        %s3771 = ssub.s32 %s9, 2
        // Predicated region
        $region64: #{sparse_spatial_attention.4} parent=62 // pred_check
          %p3772 = pneg %p85
        $region65: #{sparse_spatial_attention.4} parent=62 // pred_check_branch
          %3774 = sbr.rel (%p3772) target = $region67
        $region66: #{sparse_spatial_attention.4} parent=62 // pred_region
          %p3775 = scmp.lt.s32.totalorder %s15, 1
          %s3776 = scalar_select %p3775, %s15, 1
          %s3777 = smul.addr %s3776, 6
          %s3778 = smul.addr %s3777, 8
          %s3779 = scalar_lea.vmem %s2, %s3778
        $region67: #{sparse_spatial_attention.4} parent=62 // pred_fallthru
          _
      $region63: #{sparse_spatial_attention.4} parent=5 // pred_fallthru
        _
    $region6: #{sparse_spatial_attention.4} parent=1 // loop_footer
      %s13 = sadd.s32 1, %s9
    $region7: #{sparse_spatial_attention.4} parent=1 // loop_footer_branch
      %8 = sbr.rel target = $region3
    $region8: #{sparse_spatial_attention.4} parent=1 // loop_exit
      _
    %3780 = vsyncpa [#allocation4], 1
    %s3781 = scalar_lea.sflag [#allocation4], 1
    %3782 = vsyncpa %s3781, 1

// kernel: sparse_spatial_attention.5
$region0: #{sparse_spatial_attention.5}
  #allocation0 [shape = 'u32[]', space=smem, size = 0x4, offset = 0x4, fixed_abs, tag = 'smem constant byte address 0x4 - core index']
  #allocation1 [shape = 'u32[144,128]{1,0:T(1,128)}', space=vmem, size = 0x12000, scoped, tag = 'internal scratch']
  %s0 = inlined_call_operand.vmem [shape: f32[16,128], index: 0, kind: input, shape index: {}]
  %s1 = inlined_call_operand.vmem [shape: f32[16,128], index: 1, kind: input, shape index: {}]
  %s2 = inlined_call_operand.vmem [shape: f32[16,128], index: 2, kind: output, shape index: {}]
  %s3 = sld [smem:[#allocation0]]
  $region18: #{sparse_spatial_attention.5} parent=0
    _
  %s5 = ssub.s32 1, %s3
  %s6 = scalar_select 0, %s5, %s3
  // Predicated region
  $region2: #{sparse_spatial_attention.5} parent=0 // pred_check
    _
  $region3: #{sparse_spatial_attention.5} parent=0 // pred_check_branch
    %8 = sbr.rel (0) target = $region5
  $region4: #{sparse_spatial_attention.5} parent=0 // pred_region
    _
  $region5: #{sparse_spatial_attention.5} parent=0 // pred_fallthru
    _
  // Predicated region
  $region6: #{sparse_spatial_attention.5} parent=0 // pred_check
    _
  $region7: #{sparse_spatial_attention.5} parent=0 // pred_check_branch
    %10 = sbr.rel (0) target = $region9
  $region8: #{sparse_spatial_attention.5} parent=0 // pred_region
    _
  $region9: #{sparse_spatial_attention.5} parent=0 // pred_fallthru
    _
  %v11 = vld [vmem:[%s1] sm:$0xff]
  %v12 = vld [vmem:[%s1 + $0x8] sm:$0xff]
  %v13 = vxor.u32 %v11, 2147483648
  %v14 = vxor.u32 %v12, 2147483648
  %v15 = vmul.f32 %v13, 1.442695
  %v16 = vpow.pop %v15
  %v17 = vmul.f32 %v14, 1.442695
  %v18 = vpow.pop %v17
  %v19 = vadd.f32 %v16, 1.0
  %v20 = vadd.f32 %v18, 1.0
  %v21 = vrcp.pop %v19
  %v22 = vmul.f32 1.0, %v21
  %v23 = vrcp.pop %v20
  %v24 = vmul.f32 1.0, %v23
  %v25 = vld [vmem:[%s0] sm:$0xff]
  %v26 = vld [vmem:[%s0 + $0x8] sm:$0xff]
  %v27 = vmul.f32 %v22, %v25
  %v28 = vmul.f32 %v24, %v26
  %29 = vst [vmem:[%s2] sm:$0xff] %v27
  %30 = vst [vmem:[%s2 + $0x8] sm:$0xff] %v28
  // Predicated region
  $region10: #{sparse_spatial_attention.5} parent=0 // pred_check
    _
  $region11: #{sparse_spatial_attention.5} parent=0 // pred_check_branch
    %32 = sbr.rel (0) target = $region13
  $region12: #{sparse_spatial_attention.5} parent=0 // pred_region
    _
  $region13: #{sparse_spatial_attention.5} parent=0 // pred_fallthru
    _
  // Predicated region
  $region14: #{sparse_spatial_attention.5} parent=0 // pred_check
    _
  $region15: #{sparse_spatial_attention.5} parent=0 // pred_check_branch
    %34 = sbr.rel (0) target = $region17
  $region16: #{sparse_spatial_attention.5} parent=0 // pred_region
    _
  $region17: #{sparse_spatial_attention.5} parent=0 // pred_fallthru
    _

</llo_original>
